<compile_context>
chip_gen: v7x
topology: tpu7x:2x2x1
jax: 0.10.0
libtpu: 0.0.40
codegen_flags: <defaults>
</compile_context>

<pallas_src>
import jax
import jax.numpy as jnp
from jax.experimental import pallas as pl
from jax.experimental.pallas import tpu as pltpu


NUM_CLASSES = 8
FEAT_C = 1280
HIDDEN = 512
OUT_PAD = 128   # pad the tiny num_classes axis to one full lane register


def fac_head_kernel(x_ref, w1_ref, b1_ref, w2_ref, b2_ref, out_ref):
    # x_ref: (TN, C, HW) bf16 feature block (NCHW with spatial flattened -- no transpose).
    # AdaptiveAvgPool2d(1) + Flatten -> (TN, C), fp32 accumulation.
    pooled = jnp.mean(x_ref[...].astype(jnp.float32), axis=-1)

    # Linear(1280, 512) + ReLU: native bf16 MXU pass, fp32 accumulation.
    h = jnp.dot(pooled.astype(jnp.bfloat16), w1_ref[...],
                preferred_element_type=jnp.float32) + b1_ref[...]
    h = jnp.maximum(h, 0.0)

    # TODO(synk): Dropout(0.5) is identity at inference time; not implemented.

    # Linear(512, num_classes_padded) + Sigmoid (padded lanes carry zero weights/bias).
    logits = jnp.dot(h, w2_ref[...], preferred_element_type=jnp.float32) + b2_ref[...]
    out_ref[...] = jax.nn.sigmoid(logits)


def fac_head(x_nchw, w1, b1, w2, b2, *, tn=16):
    """x_nchw: (N, 1280, H, W) backbone feature map. Returns (N, NUM_CLASSES) float32."""
    N, C, H, W = x_nchw.shape
    assert C == FEAT_C
    HW = H * W

    # Free reshape (no HBM transpose): NCHW -> (N, C, HW). The bf16 cast is a no-op when the
    # backbone already emits bf16 feature maps.
    x = x_nchw.reshape(N, C, HW).astype(jnp.bfloat16)

    w1_bf = w1.astype(jnp.bfloat16)                                   # (C, HIDDEN) resident
    b1_2d = b1.reshape(1, HIDDEN).astype(jnp.float32)
    w2_p = jnp.zeros((HIDDEN, OUT_PAD), jnp.float32).at[:, :NUM_CLASSES].set(
        w2.astype(jnp.float32))
    b2_p = jnp.zeros((1, OUT_PAD), jnp.float32).at[:, :NUM_CLASSES].set(
        b2.reshape(1, NUM_CLASSES).astype(jnp.float32))

    # Batch tile: 2 (double buffer) * TN * C * HW * 2B must stay well under VMEM on all
    # generations (v7x: 64 MiB per TC). TN=16 @ HW=49 bf16 ~= 2 MiB/buffer; on v5e/v6e
    # (128 MiB VMEM) TN can be swept up to 32-64.
    TN = max(1, min(N, tn))
    grid = (pl.cdiv(N, TN),)

    cost = pl.CostEstimate(
        flops=int(2 * N * C * HIDDEN + 2 * N * HIDDEN * OUT_PAD + N * C * HW),
        transcendentals=int(N * OUT_PAD),
        bytes_accessed=int(N * C * HW * 2 + C * HIDDEN * 2
                           + HIDDEN * OUT_PAD * 4 + N * OUT_PAD * 4),
    )

    out = pl.pallas_call(
        fac_head_kernel,
        out_shape=jax.ShapeDtypeStruct((N, OUT_PAD), jnp.float32),
        grid=grid,
        in_specs=[
            pl.BlockSpec((TN, C, HW), lambda i: (i, 0, 0)),   # feature tiles march over N
            pl.BlockSpec((C, HIDDEN), lambda i: (0, 0)),      # weights stay resident
            pl.BlockSpec((1, HIDDEN), lambda i: (0, 0)),
            pl.BlockSpec((HIDDEN, OUT_PAD), lambda i: (0, 0)),
            pl.BlockSpec((1, OUT_PAD), lambda i: (0, 0)),
        ],
        out_specs=pl.BlockSpec((TN, OUT_PAD), lambda i: (i, 0)),
        compiler_params=pltpu.CompilerParams(
            dimension_semantics=("parallel",),
        ),
        cost_estimate=cost,
    )(x, w1_bf, b1_2d, w2_p, b2_p)

    return out[:, :NUM_CLASSES]


def init_params(key):
    """Deterministic init matching nn.Linear default (uniform +/- 1/sqrt(fan_in))."""
    k1, k2, k3, k4 = jax.random.split(key, 4)
    lim1 = 1.0 / jnp.sqrt(jnp.float32(FEAT_C))
    lim2 = 1.0 / jnp.sqrt(jnp.float32(HIDDEN))
    w1 = jax.random.uniform(k1, (FEAT_C, HIDDEN), jnp.float32, -lim1, lim1)
    b1 = jax.random.uniform(k2, (HIDDEN,), jnp.float32, -lim1, lim1)
    w2 = jax.random.uniform(k3, (HIDDEN, NUM_CLASSES), jnp.float32, -lim2, lim2)
    b2 = jax.random.uniform(k4, (NUM_CLASSES,), jnp.float32, -lim2, lim2)
    return w1, b1, w2, b2


def reference_head(x_nchw, w1, b1, w2, b2):
    pooled = jnp.mean(x_nchw, axis=(2, 3))              # (N, C)
    h = jnp.maximum(pooled @ w1 + b1, 0.0)
    return jax.nn.sigmoid(h @ w2 + b2)


if __name__ == "__main__":
    key = jax.random.PRNGKey(0)
    kx, kp = jax.random.split(key)

    # Small synthetic backbone feature map: batch=2, channels=1280, spatial 4x4 (NCHW),
    # emitted in bf16 as a mixed-precision backbone would.
    x = jax.random.normal(kx, (2, FEAT_C, 4, 4), jnp.float32).astype(jnp.bfloat16)
    w1, b1, w2, b2 = init_params(kp)

    out = jax.block_until_ready(fac_head(x, w1, b1, w2, b2))

    ref = reference_head(x.astype(jnp.float32), w1, b1, w2, b2)
    assert out.shape == (2, NUM_CLASSES)
    assert jnp.allclose(out, ref, atol=1e-2, rtol=1e-2), "mismatch vs reference"

    print("KERNEL_OK")
</pallas_src>

<mosaic_0001>
module attributes {stable_mosaic.version = 11 : i64} {
  func.func @fac_head_kernel(%arg0: i32, %arg1: memref<2x1280x16xbf16, #tpu.memory_space<vmem>>, %arg2: memref<1280x512xbf16, #tpu.memory_space<vmem>>, %arg3: memref<1x512xf32, #tpu.memory_space<vmem>>, %arg4: memref<512x128xf32, #tpu.memory_space<vmem>>, %arg5: memref<1x128xf32, #tpu.memory_space<vmem>>, %arg6: memref<2x128xf32, #tpu.memory_space<vmem>>) attributes {dimension_semantics = [#tpu.dimension_semantics<parallel>], iteration_bounds = array<i64: 1>, scalar_prefetch = 0 : i64, scratch_operands = 0 : i64, tpu.core_type = #tpu.core_type<tc>, window_params = [{transform_indices = @transform_0, window_bounds = array<i64: 2, 1280, 16>}, {pipeline_mode = #tpu.pipeline_mode<synchronous>, transform_indices = @transform_1, window_bounds = array<i64: 1280, 512>}, {pipeline_mode = #tpu.pipeline_mode<synchronous>, transform_indices = @transform_2, window_bounds = array<i64: 1, 512>}, {pipeline_mode = #tpu.pipeline_mode<synchronous>, transform_indices = @transform_3, window_bounds = array<i64: 512, 128>}, {pipeline_mode = #tpu.pipeline_mode<synchronous>, transform_indices = @transform_4, window_bounds = array<i64: 1, 128>}, {transform_indices = @transform_5, window_bounds = array<i64: 2, 128>}]} {
    %c0 = arith.constant 0 : index
    %c0_0 = arith.constant 0 : index
    %c0_1 = arith.constant 0 : index
    %0 = vector.load %arg1[%c0, %c0_0, %c0_1] : memref<2x1280x16xbf16, #tpu.memory_space<vmem>>, vector<2x1280x16xbf16>
    %1 = arith.extf %0 : vector<2x1280x16xbf16> to vector<2x1280x16xf32>
    %cst = arith.constant dense<0.000000e+00> : vector<2x1280xf32>
    %2 = vector.multi_reduction <add>, %1, %cst [2] : vector<2x1280x16xf32> to vector<2x1280xf32>
    %cst_2 = arith.constant 1.600000e+01 : f32
    %3 = vector.broadcast %cst_2 : f32 to vector<2x1280xf32>
    %4 = arith.divf %2, %3 : vector<2x1280xf32>
    %5 = arith.truncf %4 : vector<2x1280xf32> to vector<2x1280xbf16>
    %c0_3 = arith.constant 0 : index
    %c0_4 = arith.constant 0 : index
    %6 = vector.load %arg2[%c0_3, %c0_4] : memref<1280x512xbf16, #tpu.memory_space<vmem>>, vector<1280x512xbf16>
    %cst_5 = arith.constant dense<0.000000e+00> : vector<2x512xf32>
    %7 = tpu.matmul %5, %6, %cst_5 {dimension_numbers = #tpu.dot_dimension_numbers<[1], [0], [0], [1], [0, 0, 1, 1], [], []>} : vector<2x1280xbf16>, vector<1280x512xbf16>, vector<2x512xf32> -> vector<2x512xf32>
    %c0_6 = arith.constant 0 : index
    %c0_7 = arith.constant 0 : index
    %8 = vector.load %arg3[%c0_6, %c0_7] : memref<1x512xf32, #tpu.memory_space<vmem>>, vector<1x512xf32>
    %9 = vector.broadcast %8 : vector<1x512xf32> to vector<2x512xf32>
    %10 = arith.addf %7, %9 : vector<2x512xf32>
    %cst_8 = arith.constant 0.000000e+00 : f32
    %11 = vector.broadcast %cst_8 : f32 to vector<2x512xf32>
    %12 = arith.maximumf %10, %11 : vector<2x512xf32>
    %c0_9 = arith.constant 0 : index
    %c0_10 = arith.constant 0 : index
    %13 = vector.load %arg4[%c0_9, %c0_10] : memref<512x128xf32, #tpu.memory_space<vmem>>, vector<512x128xf32>
    %cst_11 = arith.constant dense<0.000000e+00> : vector<2x128xf32>
    %14 = tpu.matmul %12, %13, %cst_11 {dimension_numbers = #tpu.dot_dimension_numbers<[1], [0], [0], [1], [0, 0, 1, 1], [], []>} : vector<2x512xf32>, vector<512x128xf32>, vector<2x128xf32> -> vector<2x128xf32>
    %c0_12 = arith.constant 0 : index
    %c0_13 = arith.constant 0 : index
    %15 = vector.load %arg5[%c0_12, %c0_13] : memref<1x128xf32, #tpu.memory_space<vmem>>, vector<1x128xf32>
    %16 = vector.broadcast %15 : vector<1x128xf32> to vector<2x128xf32>
    %17 = arith.addf %14, %16 : vector<2x128xf32>
    %18 = arith.negf %17 : vector<2x128xf32>
    %19 = math.exp %18 : vector<2x128xf32>
    %cst_14 = arith.constant 1.000000e+00 : f32
    %20 = vector.broadcast %cst_14 : f32 to vector<2x128xf32>
    %21 = arith.addf %20, %19 : vector<2x128xf32>
    %22 = arith.divf %20, %21 : vector<2x128xf32>
    %c0_15 = arith.constant 0 : index
    %c0_16 = arith.constant 0 : index
    %23 = vector.load %arg6[%c0_15, %c0_16] : memref<2x128xf32, #tpu.memory_space<vmem>>, vector<2x128xf32>
    tpu.vector_store %arg6[%c0_15, %c0_16], %22 {strides = array<i32>} : memref<2x128xf32, #tpu.memory_space<vmem>>, vector<2x128xf32>,
    return
  }
  func.func @transform_0(%arg0: i32) -> (i32, i32, i32) {
    %c0_i32 = arith.constant 0 : i32
    %c0_i32_0 = arith.constant 0 : i32
    %c0_i32_1 = arith.constant 0 : i32
    return %arg0, %c0_i32, %c0_i32_0 : i32, i32, i32
  }
  func.func @transform_1(%arg0: i32) -> (i32, i32) {
    %c0_i32 = arith.constant 0 : i32
    %c0_i32_0 = arith.constant 0 : i32
    %c0_i32_1 = arith.constant 0 : i32
    return %c0_i32, %c0_i32_0 : i32, i32
  }
  func.func @transform_2(%arg0: i32) -> (i32, i32) {
    %c0_i32 = arith.constant 0 : i32
    %c0_i32_0 = arith.constant 0 : i32
    %c0_i32_1 = arith.constant 0 : i32
    return %c0_i32, %c0_i32_0 : i32, i32
  }
  func.func @transform_3(%arg0: i32) -> (i32, i32) {
    %c0_i32 = arith.constant 0 : i32
    %c0_i32_0 = arith.constant 0 : i32
    %c0_i32_1 = arith.constant 0 : i32
    return %c0_i32, %c0_i32_0 : i32, i32
  }
  func.func @transform_4(%arg0: i32) -> (i32, i32) {
    %c0_i32 = arith.constant 0 : i32
    %c0_i32_0 = arith.constant 0 : i32
    %c0_i32_1 = arith.constant 0 : i32
    return %c0_i32, %c0_i32_0 : i32, i32
  }
  func.func @transform_5(%arg0: i32) -> (i32, i32) {
    %c0_i32 = arith.constant 0 : i32
    %c0_i32_0 = arith.constant 0 : i32
    return %arg0, %c0_i32 : i32, i32
  }
}

</mosaic_0001>

<llo_original>
// kernel: tpu_custom_call.1
$region0: #{tpu_custom_call.1}
  #allocation0 [shape = 'u32[]', space=smem, size = 0x4, offset = 0x4, fixed_abs, tag = 'smem constant byte address 0x4 - core index']
  #allocation1 [shape = 'u32[144,128]{1,0:T(1,128)}', space=vmem, size = 0x12000, scoped, tag = 'internal scratch']
  %s0 = inlined_call_operand.vmem [shape: bf16[2,1280,16], index: 0, kind: input, shape index: {}]
  %s1 = inlined_call_operand.hbm [shape: bf16[1280,512], index: 1, kind: input, shape index: {}]
  %s2 = inlined_call_operand.hbm [shape: f32[1,512], index: 2, kind: input, shape index: {}]
  %s3 = inlined_call_operand.hbm [shape: f32[512,128], index: 3, kind: input, shape index: {}]
  %s4 = inlined_call_operand.hbm [shape: f32[1,128], index: 4, kind: input, shape index: {}]
  %s5 = inlined_call_operand.hbm [shape: f32[2,128], index: 5, kind: output, shape index: {}]
  %s6 = sld [smem:[#allocation0]]
  $region46: #{tpu_custom_call.1} parent=0
    _
  %s8 = ssub.s32 1, %s6
  %s9 = scalar_select 0, %s8, %s6
  $region1: #{tpu_custom_call.1} parent=0
    #allocation2 [shape = 'u8[1310720]{0}', space=vmem, size = 0x140000, scoped, tag = 'input window, operand 1, single buffered']
    #allocation3 [shape = 's32[1]{0}', space=sflag, size = 0x4, scoped, tag = 'scoped memory for tpu_custom_call.1']
    #allocation4 [shape = 's32[1]{0}', space=sflag, size = 0x4, scoped, tag = 'scoped memory for tpu_custom_call.1']
    #allocation5 [shape = 'u8[2048]{0}', space=vmem, size = 0x800, scoped, tag = 'input window, operand 2, single buffered']
    #allocation6 [shape = 's32[1]{0}', space=sflag, size = 0x4, scoped, tag = 'scoped memory for tpu_custom_call.1']
    #allocation7 [shape = 'u8[262144]{0}', space=vmem, size = 0x40000, scoped, tag = 'input window, operand 3, single buffered']
    #allocation8 [shape = 'u8[512]{0}', space=vmem, size = 0x400, scoped, tag = 'input window, operand 4, single buffered']
    #allocation9 [shape = 's32[1]{0}', space=sflag, size = 0x4, scoped, tag = 'scoped memory for tpu_custom_call.1']
    #allocation10 [shape = 'u8[1024]{0}', space=vmem, size = 0x400, scoped, tag = 'output window, operand 0, single buffered']
    %10 = vsyncpa [#allocation3], 0
    %11 = vsyncpa [#allocation6], 0
    %12 = vsyncpa [#allocation9], 0
    %13 = vsyncpa [#allocation4], 0
    // Predicated region
    $region2: #{tpu_custom_call.1} parent=1 // pred_check
      _
    $region3: #{tpu_custom_call.1} parent=1 // pred_check_branch
      %15 = sbr.rel (0) target = $region5
    $region4: #{tpu_custom_call.1} parent=1 // pred_region
      _
    $region5: #{tpu_custom_call.1} parent=1 // pred_fallthru
      _
    // Predicated region
    $region6: #{tpu_custom_call.1} parent=1 // pred_check
      _
    $region7: #{tpu_custom_call.1} parent=1 // pred_check_branch
      %17 = sbr.rel (0) target = $region9
    $region8: #{tpu_custom_call.1} parent=1 // pred_region
      %s19 = ssub.s32 40960, 40960
      %20 = vsyncadd [#allocation3], %s19
      %s21 = sshll.u32 [#allocation2], 4
      %s22 = int_to_ptr.vmem [resolvable:$true] %s21
      %27 = dma.hbm_to_vmem [thread:$0]  %s1, 40960, %s22, [#allocation3], 256, 256, 16
    $region9: #{tpu_custom_call.1} parent=1 // pred_fallthru
      _
    // Predicated region
    $region10: #{tpu_custom_call.1} parent=1 // pred_check
      _
    $region11: #{tpu_custom_call.1} parent=1 // pred_check_branch
      %29 = sbr.rel (0) target = $region13
    $region12: #{tpu_custom_call.1} parent=1 // pred_region
      %s31 = ssub.s32 64, 64
      %32 = vsyncadd [#allocation6], %s31
      %s34 = sshll.u32 [#allocation5], 4
      %s35 = int_to_ptr.vmem [resolvable:$true] %s34
      %37 = dma.hbm_to_vmem [thread:$0]  %s2, 64, %s35, [#allocation6]
    $region13: #{tpu_custom_call.1} parent=1 // pred_fallthru
      _
    // Predicated region
    $region14: #{tpu_custom_call.1} parent=1 // pred_check
      _
    $region15: #{tpu_custom_call.1} parent=1 // pred_check_branch
      %39 = sbr.rel (0) target = $region17
    $region16: #{tpu_custom_call.1} parent=1 // pred_region
      %s41 = ssub.s32 8192, 8192
      %42 = vsyncadd [#allocation6], %s41
      %s43 = sshll.u32 [#allocation7], 4
      %s44 = int_to_ptr.vmem [resolvable:$true] %s43
      %49 = dma.hbm_to_vmem [thread:$0]  %s3, 8192, %s44, [#allocation6], 128, 128, 8
    $region17: #{tpu_custom_call.1} parent=1 // pred_fallthru
      _
    // Predicated region
    $region18: #{tpu_custom_call.1} parent=1 // pred_check
      _
    $region19: #{tpu_custom_call.1} parent=1 // pred_check_branch
      %51 = sbr.rel (0) target = $region21
    $region20: #{tpu_custom_call.1} parent=1 // pred_region
      %s53 = ssub.s32 16, 16
      %54 = vsyncadd [#allocation9], %s53
      %s56 = sshll.u32 [#allocation8], 4
      %s57 = int_to_ptr.vmem [resolvable:$true] %s56
      %59 = dma.hbm_to_vmem [thread:$0]  %s4, 16, %s57, [#allocation9]
    $region21: #{tpu_custom_call.1} parent=1 // pred_fallthru
      _
    // Predicated region
    $region22: #{tpu_custom_call.1} parent=1 // pred_check
      _
    $region23: #{tpu_custom_call.1} parent=1 // pred_check_branch
      %61 = sbr.rel (0) target = $region25
    $region24: #{tpu_custom_call.1} parent=1 // pred_region
      %62 = dma.done [#allocation3], 40960
    $region25: #{tpu_custom_call.1} parent=1 // pred_fallthru
      _
    // Predicated region
    $region26: #{tpu_custom_call.1} parent=1 // pred_check
      _
    $region27: #{tpu_custom_call.1} parent=1 // pred_check_branch
      %64 = sbr.rel (0) target = $region29
    $region28: #{tpu_custom_call.1} parent=1 // pred_region
      %65 = dma.done [#allocation6], 64
    $region29: #{tpu_custom_call.1} parent=1 // pred_fallthru
      _
    // Predicated region
    $region30: #{tpu_custom_call.1} parent=1 // pred_check
      _
    $region31: #{tpu_custom_call.1} parent=1 // pred_check_branch
      %67 = sbr.rel (0) target = $region33
    $region32: #{tpu_custom_call.1} parent=1 // pred_region
      %68 = dma.done [#allocation6], 8192
    $region33: #{tpu_custom_call.1} parent=1 // pred_fallthru
      _
    // Predicated region
    $region34: #{tpu_custom_call.1} parent=1 // pred_check
      _
    $region35: #{tpu_custom_call.1} parent=1 // pred_check_branch
      %70 = sbr.rel (0) target = $region37
    $region36: #{tpu_custom_call.1} parent=1 // pred_region
      %71 = dma.done [#allocation9], 16
    $region37: #{tpu_custom_call.1} parent=1 // pred_fallthru
      _
    %v72 = vld [vmem:[%s0] sm:$0xf]
    %v73 = vld [vmem:[%s0 + $0x4] sm:$0xf]
    %v74 = vld [vmem:[%s0 + $0x8] sm:$0xf]
    %v75 = vld [vmem:[%s0 + $0xc] sm:$0xf]
    %v76 = vld [vmem:[%s0 + $0x10] sm:$0xf]
    %v77 = vld [vmem:[%s0 + $0x14] sm:$0xf]
    %v78 = vld [vmem:[%s0 + $0x18] sm:$0xf]
    %v79 = vld [vmem:[%s0 + $0x1c] sm:$0xf]
    %v80 = vld [vmem:[%s0 + $0x20] sm:$0xf]
    %v81 = vld [vmem:[%s0 + $0x24] sm:$0xf]
    %v82 = vld [vmem:[%s0 + $0x28] sm:$0xf]
    %v83 = vld [vmem:[%s0 + $0x2c] sm:$0xf]
    %v84 = vld [vmem:[%s0 + $0x30] sm:$0xf]
    %v85 = vld [vmem:[%s0 + $0x34] sm:$0xf]
    %v86 = vld [vmem:[%s0 + $0x38] sm:$0xf]
    %v87 = vld [vmem:[%s0 + $0x3c] sm:$0xf]
    %v88 = vld [vmem:[%s0 + $0x40] sm:$0xf]
    %v89 = vld [vmem:[%s0 + $0x44] sm:$0xf]
    %v90 = vld [vmem:[%s0 + $0x48] sm:$0xf]
    %v91 = vld [vmem:[%s0 + $0x4c] sm:$0xf]
    %v92 = vld [vmem:[%s0 + $0x50] sm:$0xf]
    %v93 = vld [vmem:[%s0 + $0x54] sm:$0xf]
    %v94 = vld [vmem:[%s0 + $0x58] sm:$0xf]
    %v95 = vld [vmem:[%s0 + $0x5c] sm:$0xf]
    %v96 = vld [vmem:[%s0 + $0x60] sm:$0xf]
    %v97 = vld [vmem:[%s0 + $0x64] sm:$0xf]
    %v98 = vld [vmem:[%s0 + $0x68] sm:$0xf]
    %v99 = vld [vmem:[%s0 + $0x6c] sm:$0xf]
    %v100 = vld [vmem:[%s0 + $0x70] sm:$0xf]
    %v101 = vld [vmem:[%s0 + $0x74] sm:$0xf]
    %v102 = vld [vmem:[%s0 + $0x78] sm:$0xf]
    %v103 = vld [vmem:[%s0 + $0x7c] sm:$0xf]
    %v104 = vld [vmem:[%s0 + $0x80] sm:$0xf]
    %v105 = vld [vmem:[%s0 + $0x84] sm:$0xf]
    %v106 = vld [vmem:[%s0 + $0x88] sm:$0xf]
    %v107 = vld [vmem:[%s0 + $0x8c] sm:$0xf]
    %v108 = vld [vmem:[%s0 + $0x90] sm:$0xf]
    %v109 = vld [vmem:[%s0 + $0x94] sm:$0xf]
    %v110 = vld [vmem:[%s0 + $0x98] sm:$0xf]
    %v111 = vld [vmem:[%s0 + $0x9c] sm:$0xf]
    %v112 = vld [vmem:[%s0 + $0xa0] sm:$0xf]
    %v113 = vld [vmem:[%s0 + $0xa4] sm:$0xf]
    %v114 = vld [vmem:[%s0 + $0xa8] sm:$0xf]
    %v115 = vld [vmem:[%s0 + $0xac] sm:$0xf]
    %v116 = vld [vmem:[%s0 + $0xb0] sm:$0xf]
    %v117 = vld [vmem:[%s0 + $0xb4] sm:$0xf]
    %v118 = vld [vmem:[%s0 + $0xb8] sm:$0xf]
    %v119 = vld [vmem:[%s0 + $0xbc] sm:$0xf]
    %v120 = vld [vmem:[%s0 + $0xc0] sm:$0xf]
    %v121 = vld [vmem:[%s0 + $0xc4] sm:$0xf]
    %v122 = vld [vmem:[%s0 + $0xc8] sm:$0xf]
    %v123 = vld [vmem:[%s0 + $0xcc] sm:$0xf]
    %v124 = vld [vmem:[%s0 + $0xd0] sm:$0xf]
    %v125 = vld [vmem:[%s0 + $0xd4] sm:$0xf]
    %v126 = vld [vmem:[%s0 + $0xd8] sm:$0xf]
    %v127 = vld [vmem:[%s0 + $0xdc] sm:$0xf]
    %v128 = vld [vmem:[%s0 + $0xe0] sm:$0xf]
    %v129 = vld [vmem:[%s0 + $0xe4] sm:$0xf]
    %v130 = vld [vmem:[%s0 + $0xe8] sm:$0xf]
    %v131 = vld [vmem:[%s0 + $0xec] sm:$0xf]
    %v132 = vld [vmem:[%s0 + $0xf0] sm:$0xf]
    %v133 = vld [vmem:[%s0 + $0xf4] sm:$0xf]
    %v134 = vld [vmem:[%s0 + $0xf8] sm:$0xf]
    %v135 = vld [vmem:[%s0 + $0xfc] sm:$0xf]
    %v136 = vld [vmem:[%s0 + $0x100] sm:$0xf]
    %v137 = vld [vmem:[%s0 + $0x104] sm:$0xf]
    %v138 = vld [vmem:[%s0 + $0x108] sm:$0xf]
    %v139 = vld [vmem:[%s0 + $0x10c] sm:$0xf]
    %v140 = vld [vmem:[%s0 + $0x110] sm:$0xf]
    %v141 = vld [vmem:[%s0 + $0x114] sm:$0xf]
    %v142 = vld [vmem:[%s0 + $0x118] sm:$0xf]
    %v143 = vld [vmem:[%s0 + $0x11c] sm:$0xf]
    %v144 = vld [vmem:[%s0 + $0x120] sm:$0xf]
    %v145 = vld [vmem:[%s0 + $0x124] sm:$0xf]
    %v146 = vld [vmem:[%s0 + $0x128] sm:$0xf]
    %v147 = vld [vmem:[%s0 + $0x12c] sm:$0xf]
    %v148 = vld [vmem:[%s0 + $0x130] sm:$0xf]
    %v149 = vld [vmem:[%s0 + $0x134] sm:$0xf]
    %v150 = vld [vmem:[%s0 + $0x138] sm:$0xf]
    %v151 = vld [vmem:[%s0 + $0x13c] sm:$0xf]
    %v152 = vld [vmem:[%s0 + $0x140] sm:$0xf]
    %v153 = vld [vmem:[%s0 + $0x144] sm:$0xf]
    %v154 = vld [vmem:[%s0 + $0x148] sm:$0xf]
    %v155 = vld [vmem:[%s0 + $0x14c] sm:$0xf]
    %v156 = vld [vmem:[%s0 + $0x150] sm:$0xf]
    %v157 = vld [vmem:[%s0 + $0x154] sm:$0xf]
    %v158 = vld [vmem:[%s0 + $0x158] sm:$0xf]
    %v159 = vld [vmem:[%s0 + $0x15c] sm:$0xf]
    %v160 = vld [vmem:[%s0 + $0x160] sm:$0xf]
    %v161 = vld [vmem:[%s0 + $0x164] sm:$0xf]
    %v162 = vld [vmem:[%s0 + $0x168] sm:$0xf]
    %v163 = vld [vmem:[%s0 + $0x16c] sm:$0xf]
    %v164 = vld [vmem:[%s0 + $0x170] sm:$0xf]
    %v165 = vld [vmem:[%s0 + $0x174] sm:$0xf]
    %v166 = vld [vmem:[%s0 + $0x178] sm:$0xf]
    %v167 = vld [vmem:[%s0 + $0x17c] sm:$0xf]
    %v168 = vld [vmem:[%s0 + $0x180] sm:$0xf]
    %v169 = vld [vmem:[%s0 + $0x184] sm:$0xf]
    %v170 = vld [vmem:[%s0 + $0x188] sm:$0xf]
    %v171 = vld [vmem:[%s0 + $0x18c] sm:$0xf]
    %v172 = vld [vmem:[%s0 + $0x190] sm:$0xf]
    %v173 = vld [vmem:[%s0 + $0x194] sm:$0xf]
    %v174 = vld [vmem:[%s0 + $0x198] sm:$0xf]
    %v175 = vld [vmem:[%s0 + $0x19c] sm:$0xf]
    %v176 = vld [vmem:[%s0 + $0x1a0] sm:$0xf]
    %v177 = vld [vmem:[%s0 + $0x1a4] sm:$0xf]
    %v178 = vld [vmem:[%s0 + $0x1a8] sm:$0xf]
    %v179 = vld [vmem:[%s0 + $0x1ac] sm:$0xf]
    %v180 = vld [vmem:[%s0 + $0x1b0] sm:$0xf]
    %v181 = vld [vmem:[%s0 + $0x1b4] sm:$0xf]
    %v182 = vld [vmem:[%s0 + $0x1b8] sm:$0xf]
    %v183 = vld [vmem:[%s0 + $0x1bc] sm:$0xf]
    %v184 = vld [vmem:[%s0 + $0x1c0] sm:$0xf]
    %v185 = vld [vmem:[%s0 + $0x1c4] sm:$0xf]
    %v186 = vld [vmem:[%s0 + $0x1c8] sm:$0xf]
    %v187 = vld [vmem:[%s0 + $0x1cc] sm:$0xf]
    %v188 = vld [vmem:[%s0 + $0x1d0] sm:$0xf]
    %v189 = vld [vmem:[%s0 + $0x1d4] sm:$0xf]
    %v190 = vld [vmem:[%s0 + $0x1d8] sm:$0xf]
    %v191 = vld [vmem:[%s0 + $0x1dc] sm:$0xf]
    %v192 = vld [vmem:[%s0 + $0x1e0] sm:$0xf]
    %v193 = vld [vmem:[%s0 + $0x1e4] sm:$0xf]
    %v194 = vld [vmem:[%s0 + $0x1e8] sm:$0xf]
    %v195 = vld [vmem:[%s0 + $0x1ec] sm:$0xf]
    %v196 = vld [vmem:[%s0 + $0x1f0] sm:$0xf]
    %v197 = vld [vmem:[%s0 + $0x1f4] sm:$0xf]
    %v198 = vld [vmem:[%s0 + $0x1f8] sm:$0xf]
    %v199 = vld [vmem:[%s0 + $0x1fc] sm:$0xf]
    %v200 = vld [vmem:[%s0 + $0x200] sm:$0xf]
    %v201 = vld [vmem:[%s0 + $0x204] sm:$0xf]
    %v202 = vld [vmem:[%s0 + $0x208] sm:$0xf]
    %v203 = vld [vmem:[%s0 + $0x20c] sm:$0xf]
    %v204 = vld [vmem:[%s0 + $0x210] sm:$0xf]
    %v205 = vld [vmem:[%s0 + $0x214] sm:$0xf]
    %v206 = vld [vmem:[%s0 + $0x218] sm:$0xf]
    %v207 = vld [vmem:[%s0 + $0x21c] sm:$0xf]
    %v208 = vld [vmem:[%s0 + $0x220] sm:$0xf]
    %v209 = vld [vmem:[%s0 + $0x224] sm:$0xf]
    %v210 = vld [vmem:[%s0 + $0x228] sm:$0xf]
    %v211 = vld [vmem:[%s0 + $0x22c] sm:$0xf]
    %v212 = vld [vmem:[%s0 + $0x230] sm:$0xf]
    %v213 = vld [vmem:[%s0 + $0x234] sm:$0xf]
    %v214 = vld [vmem:[%s0 + $0x238] sm:$0xf]
    %v215 = vld [vmem:[%s0 + $0x23c] sm:$0xf]
    %v216 = vld [vmem:[%s0 + $0x240] sm:$0xf]
    %v217 = vld [vmem:[%s0 + $0x244] sm:$0xf]
    %v218 = vld [vmem:[%s0 + $0x248] sm:$0xf]
    %v219 = vld [vmem:[%s0 + $0x24c] sm:$0xf]
    %v220 = vld [vmem:[%s0 + $0x250] sm:$0xf]
    %v221 = vld [vmem:[%s0 + $0x254] sm:$0xf]
    %v222 = vld [vmem:[%s0 + $0x258] sm:$0xf]
    %v223 = vld [vmem:[%s0 + $0x25c] sm:$0xf]
    %v224 = vld [vmem:[%s0 + $0x260] sm:$0xf]
    %v225 = vld [vmem:[%s0 + $0x264] sm:$0xf]
    %v226 = vld [vmem:[%s0 + $0x268] sm:$0xf]
    %v227 = vld [vmem:[%s0 + $0x26c] sm:$0xf]
    %v228 = vld [vmem:[%s0 + $0x270] sm:$0xf]
    %v229 = vld [vmem:[%s0 + $0x274] sm:$0xf]
    %v230 = vld [vmem:[%s0 + $0x278] sm:$0xf]
    %v231 = vld [vmem:[%s0 + $0x27c] sm:$0xf]
    %v232 = vld [vmem:[%s0 + $0x280] sm:$0xf]
    %v233 = vld [vmem:[%s0 + $0x284] sm:$0xf]
    %v234 = vld [vmem:[%s0 + $0x288] sm:$0xf]
    %v235 = vld [vmem:[%s0 + $0x28c] sm:$0xf]
    %v236 = vld [vmem:[%s0 + $0x290] sm:$0xf]
    %v237 = vld [vmem:[%s0 + $0x294] sm:$0xf]
    %v238 = vld [vmem:[%s0 + $0x298] sm:$0xf]
    %v239 = vld [vmem:[%s0 + $0x29c] sm:$0xf]
    %v240 = vld [vmem:[%s0 + $0x2a0] sm:$0xf]
    %v241 = vld [vmem:[%s0 + $0x2a4] sm:$0xf]
    %v242 = vld [vmem:[%s0 + $0x2a8] sm:$0xf]
    %v243 = vld [vmem:[%s0 + $0x2ac] sm:$0xf]
    %v244 = vld [vmem:[%s0 + $0x2b0] sm:$0xf]
    %v245 = vld [vmem:[%s0 + $0x2b4] sm:$0xf]
    %v246 = vld [vmem:[%s0 + $0x2b8] sm:$0xf]
    %v247 = vld [vmem:[%s0 + $0x2bc] sm:$0xf]
    %v248 = vld [vmem:[%s0 + $0x2c0] sm:$0xf]
    %v249 = vld [vmem:[%s0 + $0x2c4] sm:$0xf]
    %v250 = vld [vmem:[%s0 + $0x2c8] sm:$0xf]
    %v251 = vld [vmem:[%s0 + $0x2cc] sm:$0xf]
    %v252 = vld [vmem:[%s0 + $0x2d0] sm:$0xf]
    %v253 = vld [vmem:[%s0 + $0x2d4] sm:$0xf]
    %v254 = vld [vmem:[%s0 + $0x2d8] sm:$0xf]
    %v255 = vld [vmem:[%s0 + $0x2dc] sm:$0xf]
    %v256 = vld [vmem:[%s0 + $0x2e0] sm:$0xf]
    %v257 = vld [vmem:[%s0 + $0x2e4] sm:$0xf]
    %v258 = vld [vmem:[%s0 + $0x2e8] sm:$0xf]
    %v259 = vld [vmem:[%s0 + $0x2ec] sm:$0xf]
    %v260 = vld [vmem:[%s0 + $0x2f0] sm:$0xf]
    %v261 = vld [vmem:[%s0 + $0x2f4] sm:$0xf]
    %v262 = vld [vmem:[%s0 + $0x2f8] sm:$0xf]
    %v263 = vld [vmem:[%s0 + $0x2fc] sm:$0xf]
    %v264 = vld [vmem:[%s0 + $0x300] sm:$0xf]
    %v265 = vld [vmem:[%s0 + $0x304] sm:$0xf]
    %v266 = vld [vmem:[%s0 + $0x308] sm:$0xf]
    %v267 = vld [vmem:[%s0 + $0x30c] sm:$0xf]
    %v268 = vld [vmem:[%s0 + $0x310] sm:$0xf]
    %v269 = vld [vmem:[%s0 + $0x314] sm:$0xf]
    %v270 = vld [vmem:[%s0 + $0x318] sm:$0xf]
    %v271 = vld [vmem:[%s0 + $0x31c] sm:$0xf]
    %v272 = vld [vmem:[%s0 + $0x320] sm:$0xf]
    %v273 = vld [vmem:[%s0 + $0x324] sm:$0xf]
    %v274 = vld [vmem:[%s0 + $0x328] sm:$0xf]
    %v275 = vld [vmem:[%s0 + $0x32c] sm:$0xf]
    %v276 = vld [vmem:[%s0 + $0x330] sm:$0xf]
    %v277 = vld [vmem:[%s0 + $0x334] sm:$0xf]
    %v278 = vld [vmem:[%s0 + $0x338] sm:$0xf]
    %v279 = vld [vmem:[%s0 + $0x33c] sm:$0xf]
    %v280 = vld [vmem:[%s0 + $0x340] sm:$0xf]
    %v281 = vld [vmem:[%s0 + $0x344] sm:$0xf]
    %v282 = vld [vmem:[%s0 + $0x348] sm:$0xf]
    %v283 = vld [vmem:[%s0 + $0x34c] sm:$0xf]
    %v284 = vld [vmem:[%s0 + $0x350] sm:$0xf]
    %v285 = vld [vmem:[%s0 + $0x354] sm:$0xf]
    %v286 = vld [vmem:[%s0 + $0x358] sm:$0xf]
    %v287 = vld [vmem:[%s0 + $0x35c] sm:$0xf]
    %v288 = vld [vmem:[%s0 + $0x360] sm:$0xf]
    %v289 = vld [vmem:[%s0 + $0x364] sm:$0xf]
    %v290 = vld [vmem:[%s0 + $0x368] sm:$0xf]
    %v291 = vld [vmem:[%s0 + $0x36c] sm:$0xf]
    %v292 = vld [vmem:[%s0 + $0x370] sm:$0xf]
    %v293 = vld [vmem:[%s0 + $0x374] sm:$0xf]
    %v294 = vld [vmem:[%s0 + $0x378] sm:$0xf]
    %v295 = vld [vmem:[%s0 + $0x37c] sm:$0xf]
    %v296 = vld [vmem:[%s0 + $0x380] sm:$0xf]
    %v297 = vld [vmem:[%s0 + $0x384] sm:$0xf]
    %v298 = vld [vmem:[%s0 + $0x388] sm:$0xf]
    %v299 = vld [vmem:[%s0 + $0x38c] sm:$0xf]
    %v300 = vld [vmem:[%s0 + $0x390] sm:$0xf]
    %v301 = vld [vmem:[%s0 + $0x394] sm:$0xf]
    %v302 = vld [vmem:[%s0 + $0x398] sm:$0xf]
    %v303 = vld [vmem:[%s0 + $0x39c] sm:$0xf]
    %v304 = vld [vmem:[%s0 + $0x3a0] sm:$0xf]
    %v305 = vld [vmem:[%s0 + $0x3a4] sm:$0xf]
    %v306 = vld [vmem:[%s0 + $0x3a8] sm:$0xf]
    %v307 = vld [vmem:[%s0 + $0x3ac] sm:$0xf]
    %v308 = vld [vmem:[%s0 + $0x3b0] sm:$0xf]
    %v309 = vld [vmem:[%s0 + $0x3b4] sm:$0xf]
    %v310 = vld [vmem:[%s0 + $0x3b8] sm:$0xf]
    %v311 = vld [vmem:[%s0 + $0x3bc] sm:$0xf]
    %v312 = vld [vmem:[%s0 + $0x3c0] sm:$0xf]
    %v313 = vld [vmem:[%s0 + $0x3c4] sm:$0xf]
    %v314 = vld [vmem:[%s0 + $0x3c8] sm:$0xf]
    %v315 = vld [vmem:[%s0 + $0x3cc] sm:$0xf]
    %v316 = vld [vmem:[%s0 + $0x3d0] sm:$0xf]
    %v317 = vld [vmem:[%s0 + $0x3d4] sm:$0xf]
    %v318 = vld [vmem:[%s0 + $0x3d8] sm:$0xf]
    %v319 = vld [vmem:[%s0 + $0x3dc] sm:$0xf]
    %v320 = vld [vmem:[%s0 + $0x3e0] sm:$0xf]
    %v321 = vld [vmem:[%s0 + $0x3e4] sm:$0xf]
    %v322 = vld [vmem:[%s0 + $0x3e8] sm:$0xf]
    %v323 = vld [vmem:[%s0 + $0x3ec] sm:$0xf]
    %v324 = vld [vmem:[%s0 + $0x3f0] sm:$0xf]
    %v325 = vld [vmem:[%s0 + $0x3f4] sm:$0xf]
    %v326 = vld [vmem:[%s0 + $0x3f8] sm:$0xf]
    %v327 = vld [vmem:[%s0 + $0x3fc] sm:$0xf]
    %v328 = vld [vmem:[%s0 + $0x400] sm:$0xf]
    %v329 = vld [vmem:[%s0 + $0x404] sm:$0xf]
    %v330 = vld [vmem:[%s0 + $0x408] sm:$0xf]
    %v331 = vld [vmem:[%s0 + $0x40c] sm:$0xf]
    %v332 = vld [vmem:[%s0 + $0x410] sm:$0xf]
    %v333 = vld [vmem:[%s0 + $0x414] sm:$0xf]
    %v334 = vld [vmem:[%s0 + $0x418] sm:$0xf]
    %v335 = vld [vmem:[%s0 + $0x41c] sm:$0xf]
    %v336 = vld [vmem:[%s0 + $0x420] sm:$0xf]
    %v337 = vld [vmem:[%s0 + $0x424] sm:$0xf]
    %v338 = vld [vmem:[%s0 + $0x428] sm:$0xf]
    %v339 = vld [vmem:[%s0 + $0x42c] sm:$0xf]
    %v340 = vld [vmem:[%s0 + $0x430] sm:$0xf]
    %v341 = vld [vmem:[%s0 + $0x434] sm:$0xf]
    %v342 = vld [vmem:[%s0 + $0x438] sm:$0xf]
    %v343 = vld [vmem:[%s0 + $0x43c] sm:$0xf]
    %v344 = vld [vmem:[%s0 + $0x440] sm:$0xf]
    %v345 = vld [vmem:[%s0 + $0x444] sm:$0xf]
    %v346 = vld [vmem:[%s0 + $0x448] sm:$0xf]
    %v347 = vld [vmem:[%s0 + $0x44c] sm:$0xf]
    %v348 = vld [vmem:[%s0 + $0x450] sm:$0xf]
    %v349 = vld [vmem:[%s0 + $0x454] sm:$0xf]
    %v350 = vld [vmem:[%s0 + $0x458] sm:$0xf]
    %v351 = vld [vmem:[%s0 + $0x45c] sm:$0xf]
    %v352 = vld [vmem:[%s0 + $0x460] sm:$0xf]
    %v353 = vld [vmem:[%s0 + $0x464] sm:$0xf]
    %v354 = vld [vmem:[%s0 + $0x468] sm:$0xf]
    %v355 = vld [vmem:[%s0 + $0x46c] sm:$0xf]
    %v356 = vld [vmem:[%s0 + $0x470] sm:$0xf]
    %v357 = vld [vmem:[%s0 + $0x474] sm:$0xf]
    %v358 = vld [vmem:[%s0 + $0x478] sm:$0xf]
    %v359 = vld [vmem:[%s0 + $0x47c] sm:$0xf]
    %v360 = vld [vmem:[%s0 + $0x480] sm:$0xf]
    %v361 = vld [vmem:[%s0 + $0x484] sm:$0xf]
    %v362 = vld [vmem:[%s0 + $0x488] sm:$0xf]
    %v363 = vld [vmem:[%s0 + $0x48c] sm:$0xf]
    %v364 = vld [vmem:[%s0 + $0x490] sm:$0xf]
    %v365 = vld [vmem:[%s0 + $0x494] sm:$0xf]
    %v366 = vld [vmem:[%s0 + $0x498] sm:$0xf]
    %v367 = vld [vmem:[%s0 + $0x49c] sm:$0xf]
    %v368 = vld [vmem:[%s0 + $0x4a0] sm:$0xf]
    %v369 = vld [vmem:[%s0 + $0x4a4] sm:$0xf]
    %v370 = vld [vmem:[%s0 + $0x4a8] sm:$0xf]
    %v371 = vld [vmem:[%s0 + $0x4ac] sm:$0xf]
    %v372 = vld [vmem:[%s0 + $0x4b0] sm:$0xf]
    %v373 = vld [vmem:[%s0 + $0x4b4] sm:$0xf]
    %v374 = vld [vmem:[%s0 + $0x4b8] sm:$0xf]
    %v375 = vld [vmem:[%s0 + $0x4bc] sm:$0xf]
    %v376 = vld [vmem:[%s0 + $0x4c0] sm:$0xf]
    %v377 = vld [vmem:[%s0 + $0x4c4] sm:$0xf]
    %v378 = vld [vmem:[%s0 + $0x4c8] sm:$0xf]
    %v379 = vld [vmem:[%s0 + $0x4cc] sm:$0xf]
    %v380 = vld [vmem:[%s0 + $0x4d0] sm:$0xf]
    %v381 = vld [vmem:[%s0 + $0x4d4] sm:$0xf]
    %v382 = vld [vmem:[%s0 + $0x4d8] sm:$0xf]
    %v383 = vld [vmem:[%s0 + $0x4dc] sm:$0xf]
    %v384 = vld [vmem:[%s0 + $0x4e0] sm:$0xf]
    %v385 = vld [vmem:[%s0 + $0x4e4] sm:$0xf]
    %v386 = vld [vmem:[%s0 + $0x4e8] sm:$0xf]
    %v387 = vld [vmem:[%s0 + $0x4ec] sm:$0xf]
    %v388 = vld [vmem:[%s0 + $0x4f0] sm:$0xf]
    %v389 = vld [vmem:[%s0 + $0x4f4] sm:$0xf]
    %v390 = vld [vmem:[%s0 + $0x4f8] sm:$0xf]
    %v391 = vld [vmem:[%s0 + $0x4fc] sm:$0xf]
    %v392 = vunpack.c.l.bf16 %v72
    %v393 = vunpack.c.l.bf16 %v73
    %v394 = vunpack.c.l.bf16 %v74
    %v395 = vunpack.c.l.bf16 %v75
    %v396 = vunpack.c.l.bf16 %v76
    %v397 = vunpack.c.l.bf16 %v77
    %v398 = vunpack.c.l.bf16 %v78
    %v399 = vunpack.c.l.bf16 %v79
    %v400 = vunpack.c.l.bf16 %v80
    %v401 = vunpack.c.l.bf16 %v81
    %v402 = vunpack.c.l.bf16 %v82
    %v403 = vunpack.c.l.bf16 %v83
    %v404 = vunpack.c.l.bf16 %v84
    %v405 = vunpack.c.l.bf16 %v85
    %v406 = vunpack.c.l.bf16 %v86
    %v407 = vunpack.c.l.bf16 %v87
    %v408 = vunpack.c.l.bf16 %v88
    %v409 = vunpack.c.l.bf16 %v89
    %v410 = vunpack.c.l.bf16 %v90
    %v411 = vunpack.c.l.bf16 %v91
    %v412 = vunpack.c.l.bf16 %v92
    %v413 = vunpack.c.l.bf16 %v93
    %v414 = vunpack.c.l.bf16 %v94
    %v415 = vunpack.c.l.bf16 %v95
    %v416 = vunpack.c.l.bf16 %v96
    %v417 = vunpack.c.l.bf16 %v97
    %v418 = vunpack.c.l.bf16 %v98
    %v419 = vunpack.c.l.bf16 %v99
    %v420 = vunpack.c.l.bf16 %v100
    %v421 = vunpack.c.l.bf16 %v101
    %v422 = vunpack.c.l.bf16 %v102
    %v423 = vunpack.c.l.bf16 %v103
    %v424 = vunpack.c.l.bf16 %v104
    %v425 = vunpack.c.l.bf16 %v105
    %v426 = vunpack.c.l.bf16 %v106
    %v427 = vunpack.c.l.bf16 %v107
    %v428 = vunpack.c.l.bf16 %v108
    %v429 = vunpack.c.l.bf16 %v109
    %v430 = vunpack.c.l.bf16 %v110
    %v431 = vunpack.c.l.bf16 %v111
    %v432 = vunpack.c.l.bf16 %v112
    %v433 = vunpack.c.l.bf16 %v113
    %v434 = vunpack.c.l.bf16 %v114
    %v435 = vunpack.c.l.bf16 %v115
    %v436 = vunpack.c.l.bf16 %v116
    %v437 = vunpack.c.l.bf16 %v117
    %v438 = vunpack.c.l.bf16 %v118
    %v439 = vunpack.c.l.bf16 %v119
    %v440 = vunpack.c.l.bf16 %v120
    %v441 = vunpack.c.l.bf16 %v121
    %v442 = vunpack.c.l.bf16 %v122
    %v443 = vunpack.c.l.bf16 %v123
    %v444 = vunpack.c.l.bf16 %v124
    %v445 = vunpack.c.l.bf16 %v125
    %v446 = vunpack.c.l.bf16 %v126
    %v447 = vunpack.c.l.bf16 %v127
    %v448 = vunpack.c.l.bf16 %v128
    %v449 = vunpack.c.l.bf16 %v129
    %v450 = vunpack.c.l.bf16 %v130
    %v451 = vunpack.c.l.bf16 %v131
    %v452 = vunpack.c.l.bf16 %v132
    %v453 = vunpack.c.l.bf16 %v133
    %v454 = vunpack.c.l.bf16 %v134
    %v455 = vunpack.c.l.bf16 %v135
    %v456 = vunpack.c.l.bf16 %v136
    %v457 = vunpack.c.l.bf16 %v137
    %v458 = vunpack.c.l.bf16 %v138
    %v459 = vunpack.c.l.bf16 %v139
    %v460 = vunpack.c.l.bf16 %v140
    %v461 = vunpack.c.l.bf16 %v141
    %v462 = vunpack.c.l.bf16 %v142
    %v463 = vunpack.c.l.bf16 %v143
    %v464 = vunpack.c.l.bf16 %v144
    %v465 = vunpack.c.l.bf16 %v145
    %v466 = vunpack.c.l.bf16 %v146
    %v467 = vunpack.c.l.bf16 %v147
    %v468 = vunpack.c.l.bf16 %v148
    %v469 = vunpack.c.l.bf16 %v149
    %v470 = vunpack.c.l.bf16 %v150
    %v471 = vunpack.c.l.bf16 %v151
    %v472 = vunpack.c.l.bf16 %v152
    %v473 = vunpack.c.l.bf16 %v153
    %v474 = vunpack.c.l.bf16 %v154
    %v475 = vunpack.c.l.bf16 %v155
    %v476 = vunpack.c.l.bf16 %v156
    %v477 = vunpack.c.l.bf16 %v157
    %v478 = vunpack.c.l.bf16 %v158
    %v479 = vunpack.c.l.bf16 %v159
    %v480 = vunpack.c.l.bf16 %v160
    %v481 = vunpack.c.l.bf16 %v161
    %v482 = vunpack.c.l.bf16 %v162
    %v483 = vunpack.c.l.bf16 %v163
    %v484 = vunpack.c.l.bf16 %v164
    %v485 = vunpack.c.l.bf16 %v165
    %v486 = vunpack.c.l.bf16 %v166
    %v487 = vunpack.c.l.bf16 %v167
    %v488 = vunpack.c.l.bf16 %v168
    %v489 = vunpack.c.l.bf16 %v169
    %v490 = vunpack.c.l.bf16 %v170
    %v491 = vunpack.c.l.bf16 %v171
    %v492 = vunpack.c.l.bf16 %v172
    %v493 = vunpack.c.l.bf16 %v173
    %v494 = vunpack.c.l.bf16 %v174
    %v495 = vunpack.c.l.bf16 %v175
    %v496 = vunpack.c.l.bf16 %v176
    %v497 = vunpack.c.l.bf16 %v177
    %v498 = vunpack.c.l.bf16 %v178
    %v499 = vunpack.c.l.bf16 %v179
    %v500 = vunpack.c.l.bf16 %v180
    %v501 = vunpack.c.l.bf16 %v181
    %v502 = vunpack.c.l.bf16 %v182
    %v503 = vunpack.c.l.bf16 %v183
    %v504 = vunpack.c.l.bf16 %v184
    %v505 = vunpack.c.l.bf16 %v185
    %v506 = vunpack.c.l.bf16 %v186
    %v507 = vunpack.c.l.bf16 %v187
    %v508 = vunpack.c.l.bf16 %v188
    %v509 = vunpack.c.l.bf16 %v189
    %v510 = vunpack.c.l.bf16 %v190
    %v511 = vunpack.c.l.bf16 %v191
    %v512 = vunpack.c.l.bf16 %v192
    %v513 = vunpack.c.l.bf16 %v193
    %v514 = vunpack.c.l.bf16 %v194
    %v515 = vunpack.c.l.bf16 %v195
    %v516 = vunpack.c.l.bf16 %v196
    %v517 = vunpack.c.l.bf16 %v197
    %v518 = vunpack.c.l.bf16 %v198
    %v519 = vunpack.c.l.bf16 %v199
    %v520 = vunpack.c.l.bf16 %v200
    %v521 = vunpack.c.l.bf16 %v201
    %v522 = vunpack.c.l.bf16 %v202
    %v523 = vunpack.c.l.bf16 %v203
    %v524 = vunpack.c.l.bf16 %v204
    %v525 = vunpack.c.l.bf16 %v205
    %v526 = vunpack.c.l.bf16 %v206
    %v527 = vunpack.c.l.bf16 %v207
    %v528 = vunpack.c.l.bf16 %v208
    %v529 = vunpack.c.l.bf16 %v209
    %v530 = vunpack.c.l.bf16 %v210
    %v531 = vunpack.c.l.bf16 %v211
    %v532 = vunpack.c.l.bf16 %v212
    %v533 = vunpack.c.l.bf16 %v213
    %v534 = vunpack.c.l.bf16 %v214
    %v535 = vunpack.c.l.bf16 %v215
    %v536 = vunpack.c.l.bf16 %v216
    %v537 = vunpack.c.l.bf16 %v217
    %v538 = vunpack.c.l.bf16 %v218
    %v539 = vunpack.c.l.bf16 %v219
    %v540 = vunpack.c.l.bf16 %v220
    %v541 = vunpack.c.l.bf16 %v221
    %v542 = vunpack.c.l.bf16 %v222
    %v543 = vunpack.c.l.bf16 %v223
    %v544 = vunpack.c.l.bf16 %v224
    %v545 = vunpack.c.l.bf16 %v225
    %v546 = vunpack.c.l.bf16 %v226
    %v547 = vunpack.c.l.bf16 %v227
    %v548 = vunpack.c.l.bf16 %v228
    %v549 = vunpack.c.l.bf16 %v229
    %v550 = vunpack.c.l.bf16 %v230
    %v551 = vunpack.c.l.bf16 %v231
    %v552 = vunpack.c.l.bf16 %v232
    %v553 = vunpack.c.l.bf16 %v233
    %v554 = vunpack.c.l.bf16 %v234
    %v555 = vunpack.c.l.bf16 %v235
    %v556 = vunpack.c.l.bf16 %v236
    %v557 = vunpack.c.l.bf16 %v237
    %v558 = vunpack.c.l.bf16 %v238
    %v559 = vunpack.c.l.bf16 %v239
    %v560 = vunpack.c.l.bf16 %v240
    %v561 = vunpack.c.l.bf16 %v241
    %v562 = vunpack.c.l.bf16 %v242
    %v563 = vunpack.c.l.bf16 %v243
    %v564 = vunpack.c.l.bf16 %v244
    %v565 = vunpack.c.l.bf16 %v245
    %v566 = vunpack.c.l.bf16 %v246
    %v567 = vunpack.c.l.bf16 %v247
    %v568 = vunpack.c.l.bf16 %v248
    %v569 = vunpack.c.l.bf16 %v249
    %v570 = vunpack.c.l.bf16 %v250
    %v571 = vunpack.c.l.bf16 %v251
    %v572 = vunpack.c.l.bf16 %v252
    %v573 = vunpack.c.l.bf16 %v253
    %v574 = vunpack.c.l.bf16 %v254
    %v575 = vunpack.c.l.bf16 %v255
    %v576 = vunpack.c.l.bf16 %v256
    %v577 = vunpack.c.l.bf16 %v257
    %v578 = vunpack.c.l.bf16 %v258
    %v579 = vunpack.c.l.bf16 %v259
    %v580 = vunpack.c.l.bf16 %v260
    %v581 = vunpack.c.l.bf16 %v261
    %v582 = vunpack.c.l.bf16 %v262
    %v583 = vunpack.c.l.bf16 %v263
    %v584 = vunpack.c.l.bf16 %v264
    %v585 = vunpack.c.l.bf16 %v265
    %v586 = vunpack.c.l.bf16 %v266
    %v587 = vunpack.c.l.bf16 %v267
    %v588 = vunpack.c.l.bf16 %v268
    %v589 = vunpack.c.l.bf16 %v269
    %v590 = vunpack.c.l.bf16 %v270
    %v591 = vunpack.c.l.bf16 %v271
    %v592 = vunpack.c.l.bf16 %v272
    %v593 = vunpack.c.l.bf16 %v273
    %v594 = vunpack.c.l.bf16 %v274
    %v595 = vunpack.c.l.bf16 %v275
    %v596 = vunpack.c.l.bf16 %v276
    %v597 = vunpack.c.l.bf16 %v277
    %v598 = vunpack.c.l.bf16 %v278
    %v599 = vunpack.c.l.bf16 %v279
    %v600 = vunpack.c.l.bf16 %v280
    %v601 = vunpack.c.l.bf16 %v281
    %v602 = vunpack.c.l.bf16 %v282
    %v603 = vunpack.c.l.bf16 %v283
    %v604 = vunpack.c.l.bf16 %v284
    %v605 = vunpack.c.l.bf16 %v285
    %v606 = vunpack.c.l.bf16 %v286
    %v607 = vunpack.c.l.bf16 %v287
    %v608 = vunpack.c.l.bf16 %v288
    %v609 = vunpack.c.l.bf16 %v289
    %v610 = vunpack.c.l.bf16 %v290
    %v611 = vunpack.c.l.bf16 %v291
    %v612 = vunpack.c.l.bf16 %v292
    %v613 = vunpack.c.l.bf16 %v293
    %v614 = vunpack.c.l.bf16 %v294
    %v615 = vunpack.c.l.bf16 %v295
    %v616 = vunpack.c.l.bf16 %v296
    %v617 = vunpack.c.l.bf16 %v297
    %v618 = vunpack.c.l.bf16 %v298
    %v619 = vunpack.c.l.bf16 %v299
    %v620 = vunpack.c.l.bf16 %v300
    %v621 = vunpack.c.l.bf16 %v301
    %v622 = vunpack.c.l.bf16 %v302
    %v623 = vunpack.c.l.bf16 %v303
    %v624 = vunpack.c.l.bf16 %v304
    %v625 = vunpack.c.l.bf16 %v305
    %v626 = vunpack.c.l.bf16 %v306
    %v627 = vunpack.c.l.bf16 %v307
    %v628 = vunpack.c.l.bf16 %v308
    %v629 = vunpack.c.l.bf16 %v309
    %v630 = vunpack.c.l.bf16 %v310
    %v631 = vunpack.c.l.bf16 %v311
    %v632 = vunpack.c.l.bf16 %v312
    %v633 = vunpack.c.l.bf16 %v313
    %v634 = vunpack.c.l.bf16 %v314
    %v635 = vunpack.c.l.bf16 %v315
    %v636 = vunpack.c.l.bf16 %v316
    %v637 = vunpack.c.l.bf16 %v317
    %v638 = vunpack.c.l.bf16 %v318
    %v639 = vunpack.c.l.bf16 %v319
    %v640 = vunpack.c.l.bf16 %v320
    %v641 = vunpack.c.l.bf16 %v321
    %v642 = vunpack.c.l.bf16 %v322
    %v643 = vunpack.c.l.bf16 %v323
    %v644 = vunpack.c.l.bf16 %v324
    %v645 = vunpack.c.l.bf16 %v325
    %v646 = vunpack.c.l.bf16 %v326
    %v647 = vunpack.c.l.bf16 %v327
    %v648 = vunpack.c.l.bf16 %v328
    %v649 = vunpack.c.l.bf16 %v329
    %v650 = vunpack.c.l.bf16 %v330
    %v651 = vunpack.c.l.bf16 %v331
    %v652 = vunpack.c.l.bf16 %v332
    %v653 = vunpack.c.l.bf16 %v333
    %v654 = vunpack.c.l.bf16 %v334
    %v655 = vunpack.c.l.bf16 %v335
    %v656 = vunpack.c.l.bf16 %v336
    %v657 = vunpack.c.l.bf16 %v337
    %v658 = vunpack.c.l.bf16 %v338
    %v659 = vunpack.c.l.bf16 %v339
    %v660 = vunpack.c.l.bf16 %v340
    %v661 = vunpack.c.l.bf16 %v341
    %v662 = vunpack.c.l.bf16 %v342
    %v663 = vunpack.c.l.bf16 %v343
    %v664 = vunpack.c.l.bf16 %v344
    %v665 = vunpack.c.l.bf16 %v345
    %v666 = vunpack.c.l.bf16 %v346
    %v667 = vunpack.c.l.bf16 %v347
    %v668 = vunpack.c.l.bf16 %v348
    %v669 = vunpack.c.l.bf16 %v349
    %v670 = vunpack.c.l.bf16 %v350
    %v671 = vunpack.c.l.bf16 %v351
    %v672 = vunpack.c.l.bf16 %v352
    %v673 = vunpack.c.l.bf16 %v353
    %v674 = vunpack.c.l.bf16 %v354
    %v675 = vunpack.c.l.bf16 %v355
    %v676 = vunpack.c.l.bf16 %v356
    %v677 = vunpack.c.l.bf16 %v357
    %v678 = vunpack.c.l.bf16 %v358
    %v679 = vunpack.c.l.bf16 %v359
    %v680 = vunpack.c.l.bf16 %v360
    %v681 = vunpack.c.l.bf16 %v361
    %v682 = vunpack.c.l.bf16 %v362
    %v683 = vunpack.c.l.bf16 %v363
    %v684 = vunpack.c.l.bf16 %v364
    %v685 = vunpack.c.l.bf16 %v365
    %v686 = vunpack.c.l.bf16 %v366
    %v687 = vunpack.c.l.bf16 %v367
    %v688 = vunpack.c.l.bf16 %v368
    %v689 = vunpack.c.l.bf16 %v369
    %v690 = vunpack.c.l.bf16 %v370
    %v691 = vunpack.c.l.bf16 %v371
    %v692 = vunpack.c.l.bf16 %v372
    %v693 = vunpack.c.l.bf16 %v373
    %v694 = vunpack.c.l.bf16 %v374
    %v695 = vunpack.c.l.bf16 %v375
    %v696 = vunpack.c.l.bf16 %v376
    %v697 = vunpack.c.l.bf16 %v377
    %v698 = vunpack.c.l.bf16 %v378
    %v699 = vunpack.c.l.bf16 %v379
    %v700 = vunpack.c.l.bf16 %v380
    %v701 = vunpack.c.l.bf16 %v381
    %v702 = vunpack.c.l.bf16 %v382
    %v703 = vunpack.c.l.bf16 %v383
    %v704 = vunpack.c.l.bf16 %v384
    %v705 = vunpack.c.l.bf16 %v385
    %v706 = vunpack.c.l.bf16 %v386
    %v707 = vunpack.c.l.bf16 %v387
    %v708 = vunpack.c.l.bf16 %v388
    %v709 = vunpack.c.l.bf16 %v389
    %v710 = vunpack.c.l.bf16 %v390
    %v711 = vunpack.c.l.bf16 %v391
    %vm712 = vcmask 130048
    %v713 = vsel %vm712, %v392, 0.0
    %714 = vadd.xlane.f32.xlu0 %v713
    %v715 = vpop.xlane.xlu0 %714
    %v716 = vsel %vm712, %v393, 0.0
    %717 = vadd.xlane.f32.xlu0 %v716
    %v718 = vpop.xlane.xlu0 %717
    %v719 = vsel %vm712, %v394, 0.0
    %720 = vadd.xlane.f32.xlu0 %v719
    %v721 = vpop.xlane.xlu0 %720
    %v722 = vsel %vm712, %v395, 0.0
    %723 = vadd.xlane.f32.xlu0 %v722
    %v724 = vpop.xlane.xlu0 %723
    %v725 = vsel %vm712, %v396, 0.0
    %726 = vadd.xlane.f32.xlu0 %v725
    %v727 = vpop.xlane.xlu0 %726
    %v728 = vsel %vm712, %v397, 0.0
    %729 = vadd.xlane.f32.xlu0 %v728
    %v730 = vpop.xlane.xlu0 %729
    %v731 = vsel %vm712, %v398, 0.0
    %732 = vadd.xlane.f32.xlu0 %v731
    %v733 = vpop.xlane.xlu0 %732
    %v734 = vsel %vm712, %v399, 0.0
    %735 = vadd.xlane.f32.xlu0 %v734
    %v736 = vpop.xlane.xlu0 %735
    %v737 = vsel %vm712, %v400, 0.0
    %738 = vadd.xlane.f32.xlu0 %v737
    %v739 = vpop.xlane.xlu0 %738
    %v740 = vsel %vm712, %v401, 0.0
    %741 = vadd.xlane.f32.xlu0 %v740
    %v742 = vpop.xlane.xlu0 %741
    %v743 = vsel %vm712, %v402, 0.0
    %744 = vadd.xlane.f32.xlu0 %v743
    %v745 = vpop.xlane.xlu0 %744
    %v746 = vsel %vm712, %v403, 0.0
    %747 = vadd.xlane.f32.xlu0 %v746
    %v748 = vpop.xlane.xlu0 %747
    %v749 = vsel %vm712, %v404, 0.0
    %750 = vadd.xlane.f32.xlu0 %v749
    %v751 = vpop.xlane.xlu0 %750
    %v752 = vsel %vm712, %v405, 0.0
    %753 = vadd.xlane.f32.xlu0 %v752
    %v754 = vpop.xlane.xlu0 %753
    %v755 = vsel %vm712, %v406, 0.0
    %756 = vadd.xlane.f32.xlu0 %v755
    %v757 = vpop.xlane.xlu0 %756
    %v758 = vsel %vm712, %v407, 0.0
    %759 = vadd.xlane.f32.xlu0 %v758
    %v760 = vpop.xlane.xlu0 %759
    %v761 = vsel %vm712, %v408, 0.0
    %762 = vadd.xlane.f32.xlu0 %v761
    %v763 = vpop.xlane.xlu0 %762
    %v764 = vsel %vm712, %v409, 0.0
    %765 = vadd.xlane.f32.xlu0 %v764
    %v766 = vpop.xlane.xlu0 %765
    %v767 = vsel %vm712, %v410, 0.0
    %768 = vadd.xlane.f32.xlu0 %v767
    %v769 = vpop.xlane.xlu0 %768
    %v770 = vsel %vm712, %v411, 0.0
    %771 = vadd.xlane.f32.xlu0 %v770
    %v772 = vpop.xlane.xlu0 %771
    %v773 = vsel %vm712, %v412, 0.0
    %774 = vadd.xlane.f32.xlu0 %v773
    %v775 = vpop.xlane.xlu0 %774
    %v776 = vsel %vm712, %v413, 0.0
    %777 = vadd.xlane.f32.xlu0 %v776
    %v778 = vpop.xlane.xlu0 %777
    %v779 = vsel %vm712, %v414, 0.0
    %780 = vadd.xlane.f32.xlu0 %v779
    %v781 = vpop.xlane.xlu0 %780
    %v782 = vsel %vm712, %v415, 0.0
    %783 = vadd.xlane.f32.xlu0 %v782
    %v784 = vpop.xlane.xlu0 %783
    %v785 = vsel %vm712, %v416, 0.0
    %786 = vadd.xlane.f32.xlu0 %v785
    %v787 = vpop.xlane.xlu0 %786
    %v788 = vsel %vm712, %v417, 0.0
    %789 = vadd.xlane.f32.xlu0 %v788
    %v790 = vpop.xlane.xlu0 %789
    %v791 = vsel %vm712, %v418, 0.0
    %792 = vadd.xlane.f32.xlu0 %v791
    %v793 = vpop.xlane.xlu0 %792
    %v794 = vsel %vm712, %v419, 0.0
    %795 = vadd.xlane.f32.xlu0 %v794
    %v796 = vpop.xlane.xlu0 %795
    %v797 = vsel %vm712, %v420, 0.0
    %798 = vadd.xlane.f32.xlu0 %v797
    %v799 = vpop.xlane.xlu0 %798
    %v800 = vsel %vm712, %v421, 0.0
    %801 = vadd.xlane.f32.xlu0 %v800
    %v802 = vpop.xlane.xlu0 %801
    %v803 = vsel %vm712, %v422, 0.0
    %804 = vadd.xlane.f32.xlu0 %v803
    %v805 = vpop.xlane.xlu0 %804
    %v806 = vsel %vm712, %v423, 0.0
    %807 = vadd.xlane.f32.xlu0 %v806
    %v808 = vpop.xlane.xlu0 %807
    %v809 = vsel %vm712, %v424, 0.0
    %810 = vadd.xlane.f32.xlu0 %v809
    %v811 = vpop.xlane.xlu0 %810
    %v812 = vsel %vm712, %v425, 0.0
    %813 = vadd.xlane.f32.xlu0 %v812
    %v814 = vpop.xlane.xlu0 %813
    %v815 = vsel %vm712, %v426, 0.0
    %816 = vadd.xlane.f32.xlu0 %v815
    %v817 = vpop.xlane.xlu0 %816
    %v818 = vsel %vm712, %v427, 0.0
    %819 = vadd.xlane.f32.xlu0 %v818
    %v820 = vpop.xlane.xlu0 %819
    %v821 = vsel %vm712, %v428, 0.0
    %822 = vadd.xlane.f32.xlu0 %v821
    %v823 = vpop.xlane.xlu0 %822
    %v824 = vsel %vm712, %v429, 0.0
    %825 = vadd.xlane.f32.xlu0 %v824
    %v826 = vpop.xlane.xlu0 %825
    %v827 = vsel %vm712, %v430, 0.0
    %828 = vadd.xlane.f32.xlu0 %v827
    %v829 = vpop.xlane.xlu0 %828
    %v830 = vsel %vm712, %v431, 0.0
    %831 = vadd.xlane.f32.xlu0 %v830
    %v832 = vpop.xlane.xlu0 %831
    %v833 = vsel %vm712, %v432, 0.0
    %834 = vadd.xlane.f32.xlu0 %v833
    %v835 = vpop.xlane.xlu0 %834
    %v836 = vsel %vm712, %v433, 0.0
    %837 = vadd.xlane.f32.xlu0 %v836
    %v838 = vpop.xlane.xlu0 %837
    %v839 = vsel %vm712, %v434, 0.0
    %840 = vadd.xlane.f32.xlu0 %v839
    %v841 = vpop.xlane.xlu0 %840
    %v842 = vsel %vm712, %v435, 0.0
    %843 = vadd.xlane.f32.xlu0 %v842
    %v844 = vpop.xlane.xlu0 %843
    %v845 = vsel %vm712, %v436, 0.0
    %846 = vadd.xlane.f32.xlu0 %v845
    %v847 = vpop.xlane.xlu0 %846
    %v848 = vsel %vm712, %v437, 0.0
    %849 = vadd.xlane.f32.xlu0 %v848
    %v850 = vpop.xlane.xlu0 %849
    %v851 = vsel %vm712, %v438, 0.0
    %852 = vadd.xlane.f32.xlu0 %v851
    %v853 = vpop.xlane.xlu0 %852
    %v854 = vsel %vm712, %v439, 0.0
    %855 = vadd.xlane.f32.xlu0 %v854
    %v856 = vpop.xlane.xlu0 %855
    %v857 = vsel %vm712, %v440, 0.0
    %858 = vadd.xlane.f32.xlu0 %v857
    %v859 = vpop.xlane.xlu0 %858
    %v860 = vsel %vm712, %v441, 0.0
    %861 = vadd.xlane.f32.xlu0 %v860
    %v862 = vpop.xlane.xlu0 %861
    %v863 = vsel %vm712, %v442, 0.0
    %864 = vadd.xlane.f32.xlu0 %v863
    %v865 = vpop.xlane.xlu0 %864
    %v866 = vsel %vm712, %v443, 0.0
    %867 = vadd.xlane.f32.xlu0 %v866
    %v868 = vpop.xlane.xlu0 %867
    %v869 = vsel %vm712, %v444, 0.0
    %870 = vadd.xlane.f32.xlu0 %v869
    %v871 = vpop.xlane.xlu0 %870
    %v872 = vsel %vm712, %v445, 0.0
    %873 = vadd.xlane.f32.xlu0 %v872
    %v874 = vpop.xlane.xlu0 %873
    %v875 = vsel %vm712, %v446, 0.0
    %876 = vadd.xlane.f32.xlu0 %v875
    %v877 = vpop.xlane.xlu0 %876
    %v878 = vsel %vm712, %v447, 0.0
    %879 = vadd.xlane.f32.xlu0 %v878
    %v880 = vpop.xlane.xlu0 %879
    %v881 = vsel %vm712, %v448, 0.0
    %882 = vadd.xlane.f32.xlu0 %v881
    %v883 = vpop.xlane.xlu0 %882
    %v884 = vsel %vm712, %v449, 0.0
    %885 = vadd.xlane.f32.xlu0 %v884
    %v886 = vpop.xlane.xlu0 %885
    %v887 = vsel %vm712, %v450, 0.0
    %888 = vadd.xlane.f32.xlu0 %v887
    %v889 = vpop.xlane.xlu0 %888
    %v890 = vsel %vm712, %v451, 0.0
    %891 = vadd.xlane.f32.xlu0 %v890
    %v892 = vpop.xlane.xlu0 %891
    %v893 = vsel %vm712, %v452, 0.0
    %894 = vadd.xlane.f32.xlu0 %v893
    %v895 = vpop.xlane.xlu0 %894
    %v896 = vsel %vm712, %v453, 0.0
    %897 = vadd.xlane.f32.xlu0 %v896
    %v898 = vpop.xlane.xlu0 %897
    %v899 = vsel %vm712, %v454, 0.0
    %900 = vadd.xlane.f32.xlu0 %v899
    %v901 = vpop.xlane.xlu0 %900
    %v902 = vsel %vm712, %v455, 0.0
    %903 = vadd.xlane.f32.xlu0 %v902
    %v904 = vpop.xlane.xlu0 %903
    %v905 = vsel %vm712, %v456, 0.0
    %906 = vadd.xlane.f32.xlu0 %v905
    %v907 = vpop.xlane.xlu0 %906
    %v908 = vsel %vm712, %v457, 0.0
    %909 = vadd.xlane.f32.xlu0 %v908
    %v910 = vpop.xlane.xlu0 %909
    %v911 = vsel %vm712, %v458, 0.0
    %912 = vadd.xlane.f32.xlu0 %v911
    %v913 = vpop.xlane.xlu0 %912
    %v914 = vsel %vm712, %v459, 0.0
    %915 = vadd.xlane.f32.xlu0 %v914
    %v916 = vpop.xlane.xlu0 %915
    %v917 = vsel %vm712, %v460, 0.0
    %918 = vadd.xlane.f32.xlu0 %v917
    %v919 = vpop.xlane.xlu0 %918
    %v920 = vsel %vm712, %v461, 0.0
    %921 = vadd.xlane.f32.xlu0 %v920
    %v922 = vpop.xlane.xlu0 %921
    %v923 = vsel %vm712, %v462, 0.0
    %924 = vadd.xlane.f32.xlu0 %v923
    %v925 = vpop.xlane.xlu0 %924
    %v926 = vsel %vm712, %v463, 0.0
    %927 = vadd.xlane.f32.xlu0 %v926
    %v928 = vpop.xlane.xlu0 %927
    %v929 = vsel %vm712, %v464, 0.0
    %930 = vadd.xlane.f32.xlu0 %v929
    %v931 = vpop.xlane.xlu0 %930
    %v932 = vsel %vm712, %v465, 0.0
    %933 = vadd.xlane.f32.xlu0 %v932
    %v934 = vpop.xlane.xlu0 %933
    %v935 = vsel %vm712, %v466, 0.0
    %936 = vadd.xlane.f32.xlu0 %v935
    %v937 = vpop.xlane.xlu0 %936
    %v938 = vsel %vm712, %v467, 0.0
    %939 = vadd.xlane.f32.xlu0 %v938
    %v940 = vpop.xlane.xlu0 %939
    %v941 = vsel %vm712, %v468, 0.0
    %942 = vadd.xlane.f32.xlu0 %v941
    %v943 = vpop.xlane.xlu0 %942
    %v944 = vsel %vm712, %v469, 0.0
    %945 = vadd.xlane.f32.xlu0 %v944
    %v946 = vpop.xlane.xlu0 %945
    %v947 = vsel %vm712, %v470, 0.0
    %948 = vadd.xlane.f32.xlu0 %v947
    %v949 = vpop.xlane.xlu0 %948
    %v950 = vsel %vm712, %v471, 0.0
    %951 = vadd.xlane.f32.xlu0 %v950
    %v952 = vpop.xlane.xlu0 %951
    %v953 = vsel %vm712, %v472, 0.0
    %954 = vadd.xlane.f32.xlu0 %v953
    %v955 = vpop.xlane.xlu0 %954
    %v956 = vsel %vm712, %v473, 0.0
    %957 = vadd.xlane.f32.xlu0 %v956
    %v958 = vpop.xlane.xlu0 %957
    %v959 = vsel %vm712, %v474, 0.0
    %960 = vadd.xlane.f32.xlu0 %v959
    %v961 = vpop.xlane.xlu0 %960
    %v962 = vsel %vm712, %v475, 0.0
    %963 = vadd.xlane.f32.xlu0 %v962
    %v964 = vpop.xlane.xlu0 %963
    %v965 = vsel %vm712, %v476, 0.0
    %966 = vadd.xlane.f32.xlu0 %v965
    %v967 = vpop.xlane.xlu0 %966
    %v968 = vsel %vm712, %v477, 0.0
    %969 = vadd.xlane.f32.xlu0 %v968
    %v970 = vpop.xlane.xlu0 %969
    %v971 = vsel %vm712, %v478, 0.0
    %972 = vadd.xlane.f32.xlu0 %v971
    %v973 = vpop.xlane.xlu0 %972
    %v974 = vsel %vm712, %v479, 0.0
    %975 = vadd.xlane.f32.xlu0 %v974
    %v976 = vpop.xlane.xlu0 %975
    %v977 = vsel %vm712, %v480, 0.0
    %978 = vadd.xlane.f32.xlu0 %v977
    %v979 = vpop.xlane.xlu0 %978
    %v980 = vsel %vm712, %v481, 0.0
    %981 = vadd.xlane.f32.xlu0 %v980
    %v982 = vpop.xlane.xlu0 %981
    %v983 = vsel %vm712, %v482, 0.0
    %984 = vadd.xlane.f32.xlu0 %v983
    %v985 = vpop.xlane.xlu0 %984
    %v986 = vsel %vm712, %v483, 0.0
    %987 = vadd.xlane.f32.xlu0 %v986
    %v988 = vpop.xlane.xlu0 %987
    %v989 = vsel %vm712, %v484, 0.0
    %990 = vadd.xlane.f32.xlu0 %v989
    %v991 = vpop.xlane.xlu0 %990
    %v992 = vsel %vm712, %v485, 0.0
    %993 = vadd.xlane.f32.xlu0 %v992
    %v994 = vpop.xlane.xlu0 %993
    %v995 = vsel %vm712, %v486, 0.0
    %996 = vadd.xlane.f32.xlu0 %v995
    %v997 = vpop.xlane.xlu0 %996
    %v998 = vsel %vm712, %v487, 0.0
    %999 = vadd.xlane.f32.xlu0 %v998
    %v1000 = vpop.xlane.xlu0 %999
    %v1001 = vsel %vm712, %v488, 0.0
    %1002 = vadd.xlane.f32.xlu0 %v1001
    %v1003 = vpop.xlane.xlu0 %1002
    %v1004 = vsel %vm712, %v489, 0.0
    %1005 = vadd.xlane.f32.xlu0 %v1004
    %v1006 = vpop.xlane.xlu0 %1005
    %v1007 = vsel %vm712, %v490, 0.0
    %1008 = vadd.xlane.f32.xlu0 %v1007
    %v1009 = vpop.xlane.xlu0 %1008
    %v1010 = vsel %vm712, %v491, 0.0
    %1011 = vadd.xlane.f32.xlu0 %v1010
    %v1012 = vpop.xlane.xlu0 %1011
    %v1013 = vsel %vm712, %v492, 0.0
    %1014 = vadd.xlane.f32.xlu0 %v1013
    %v1015 = vpop.xlane.xlu0 %1014
    %v1016 = vsel %vm712, %v493, 0.0
    %1017 = vadd.xlane.f32.xlu0 %v1016
    %v1018 = vpop.xlane.xlu0 %1017
    %v1019 = vsel %vm712, %v494, 0.0
    %1020 = vadd.xlane.f32.xlu0 %v1019
    %v1021 = vpop.xlane.xlu0 %1020
    %v1022 = vsel %vm712, %v495, 0.0
    %1023 = vadd.xlane.f32.xlu0 %v1022
    %v1024 = vpop.xlane.xlu0 %1023
    %v1025 = vsel %vm712, %v496, 0.0
    %1026 = vadd.xlane.f32.xlu0 %v1025
    %v1027 = vpop.xlane.xlu0 %1026
    %v1028 = vsel %vm712, %v497, 0.0
    %1029 = vadd.xlane.f32.xlu0 %v1028
    %v1030 = vpop.xlane.xlu0 %1029
    %v1031 = vsel %vm712, %v498, 0.0
    %1032 = vadd.xlane.f32.xlu0 %v1031
    %v1033 = vpop.xlane.xlu0 %1032
    %v1034 = vsel %vm712, %v499, 0.0
    %1035 = vadd.xlane.f32.xlu0 %v1034
    %v1036 = vpop.xlane.xlu0 %1035
    %v1037 = vsel %vm712, %v500, 0.0
    %1038 = vadd.xlane.f32.xlu0 %v1037
    %v1039 = vpop.xlane.xlu0 %1038
    %v1040 = vsel %vm712, %v501, 0.0
    %1041 = vadd.xlane.f32.xlu0 %v1040
    %v1042 = vpop.xlane.xlu0 %1041
    %v1043 = vsel %vm712, %v502, 0.0
    %1044 = vadd.xlane.f32.xlu0 %v1043
    %v1045 = vpop.xlane.xlu0 %1044
    %v1046 = vsel %vm712, %v503, 0.0
    %1047 = vadd.xlane.f32.xlu0 %v1046
    %v1048 = vpop.xlane.xlu0 %1047
    %v1049 = vsel %vm712, %v504, 0.0
    %1050 = vadd.xlane.f32.xlu0 %v1049
    %v1051 = vpop.xlane.xlu0 %1050
    %v1052 = vsel %vm712, %v505, 0.0
    %1053 = vadd.xlane.f32.xlu0 %v1052
    %v1054 = vpop.xlane.xlu0 %1053
    %v1055 = vsel %vm712, %v506, 0.0
    %1056 = vadd.xlane.f32.xlu0 %v1055
    %v1057 = vpop.xlane.xlu0 %1056
    %v1058 = vsel %vm712, %v507, 0.0
    %1059 = vadd.xlane.f32.xlu0 %v1058
    %v1060 = vpop.xlane.xlu0 %1059
    %v1061 = vsel %vm712, %v508, 0.0
    %1062 = vadd.xlane.f32.xlu0 %v1061
    %v1063 = vpop.xlane.xlu0 %1062
    %v1064 = vsel %vm712, %v509, 0.0
    %1065 = vadd.xlane.f32.xlu0 %v1064
    %v1066 = vpop.xlane.xlu0 %1065
    %v1067 = vsel %vm712, %v510, 0.0
    %1068 = vadd.xlane.f32.xlu0 %v1067
    %v1069 = vpop.xlane.xlu0 %1068
    %v1070 = vsel %vm712, %v511, 0.0
    %1071 = vadd.xlane.f32.xlu0 %v1070
    %v1072 = vpop.xlane.xlu0 %1071
    %v1073 = vsel %vm712, %v512, 0.0
    %1074 = vadd.xlane.f32.xlu0 %v1073
    %v1075 = vpop.xlane.xlu0 %1074
    %v1076 = vsel %vm712, %v513, 0.0
    %1077 = vadd.xlane.f32.xlu0 %v1076
    %v1078 = vpop.xlane.xlu0 %1077
    %v1079 = vsel %vm712, %v514, 0.0
    %1080 = vadd.xlane.f32.xlu0 %v1079
    %v1081 = vpop.xlane.xlu0 %1080
    %v1082 = vsel %vm712, %v515, 0.0
    %1083 = vadd.xlane.f32.xlu0 %v1082
    %v1084 = vpop.xlane.xlu0 %1083
    %v1085 = vsel %vm712, %v516, 0.0
    %1086 = vadd.xlane.f32.xlu0 %v1085
    %v1087 = vpop.xlane.xlu0 %1086
    %v1088 = vsel %vm712, %v517, 0.0
    %1089 = vadd.xlane.f32.xlu0 %v1088
    %v1090 = vpop.xlane.xlu0 %1089
    %v1091 = vsel %vm712, %v518, 0.0
    %1092 = vadd.xlane.f32.xlu0 %v1091
    %v1093 = vpop.xlane.xlu0 %1092
    %v1094 = vsel %vm712, %v519, 0.0
    %1095 = vadd.xlane.f32.xlu0 %v1094
    %v1096 = vpop.xlane.xlu0 %1095
    %v1097 = vsel %vm712, %v520, 0.0
    %1098 = vadd.xlane.f32.xlu0 %v1097
    %v1099 = vpop.xlane.xlu0 %1098
    %v1100 = vsel %vm712, %v521, 0.0
    %1101 = vadd.xlane.f32.xlu0 %v1100
    %v1102 = vpop.xlane.xlu0 %1101
    %v1103 = vsel %vm712, %v522, 0.0
    %1104 = vadd.xlane.f32.xlu0 %v1103
    %v1105 = vpop.xlane.xlu0 %1104
    %v1106 = vsel %vm712, %v523, 0.0
    %1107 = vadd.xlane.f32.xlu0 %v1106
    %v1108 = vpop.xlane.xlu0 %1107
    %v1109 = vsel %vm712, %v524, 0.0
    %1110 = vadd.xlane.f32.xlu0 %v1109
    %v1111 = vpop.xlane.xlu0 %1110
    %v1112 = vsel %vm712, %v525, 0.0
    %1113 = vadd.xlane.f32.xlu0 %v1112
    %v1114 = vpop.xlane.xlu0 %1113
    %v1115 = vsel %vm712, %v526, 0.0
    %1116 = vadd.xlane.f32.xlu0 %v1115
    %v1117 = vpop.xlane.xlu0 %1116
    %v1118 = vsel %vm712, %v527, 0.0
    %1119 = vadd.xlane.f32.xlu0 %v1118
    %v1120 = vpop.xlane.xlu0 %1119
    %v1121 = vsel %vm712, %v528, 0.0
    %1122 = vadd.xlane.f32.xlu0 %v1121
    %v1123 = vpop.xlane.xlu0 %1122
    %v1124 = vsel %vm712, %v529, 0.0
    %1125 = vadd.xlane.f32.xlu0 %v1124
    %v1126 = vpop.xlane.xlu0 %1125
    %v1127 = vsel %vm712, %v530, 0.0
    %1128 = vadd.xlane.f32.xlu0 %v1127
    %v1129 = vpop.xlane.xlu0 %1128
    %v1130 = vsel %vm712, %v531, 0.0
    %1131 = vadd.xlane.f32.xlu0 %v1130
    %v1132 = vpop.xlane.xlu0 %1131
    %v1133 = vsel %vm712, %v532, 0.0
    %1134 = vadd.xlane.f32.xlu0 %v1133
    %v1135 = vpop.xlane.xlu0 %1134
    %v1136 = vsel %vm712, %v533, 0.0
    %1137 = vadd.xlane.f32.xlu0 %v1136
    %v1138 = vpop.xlane.xlu0 %1137
    %v1139 = vsel %vm712, %v534, 0.0
    %1140 = vadd.xlane.f32.xlu0 %v1139
    %v1141 = vpop.xlane.xlu0 %1140
    %v1142 = vsel %vm712, %v535, 0.0
    %1143 = vadd.xlane.f32.xlu0 %v1142
    %v1144 = vpop.xlane.xlu0 %1143
    %v1145 = vsel %vm712, %v536, 0.0
    %1146 = vadd.xlane.f32.xlu0 %v1145
    %v1147 = vpop.xlane.xlu0 %1146
    %v1148 = vsel %vm712, %v537, 0.0
    %1149 = vadd.xlane.f32.xlu0 %v1148
    %v1150 = vpop.xlane.xlu0 %1149
    %v1151 = vsel %vm712, %v538, 0.0
    %1152 = vadd.xlane.f32.xlu0 %v1151
    %v1153 = vpop.xlane.xlu0 %1152
    %v1154 = vsel %vm712, %v539, 0.0
    %1155 = vadd.xlane.f32.xlu0 %v1154
    %v1156 = vpop.xlane.xlu0 %1155
    %v1157 = vsel %vm712, %v540, 0.0
    %1158 = vadd.xlane.f32.xlu0 %v1157
    %v1159 = vpop.xlane.xlu0 %1158
    %v1160 = vsel %vm712, %v541, 0.0
    %1161 = vadd.xlane.f32.xlu0 %v1160
    %v1162 = vpop.xlane.xlu0 %1161
    %v1163 = vsel %vm712, %v542, 0.0
    %1164 = vadd.xlane.f32.xlu0 %v1163
    %v1165 = vpop.xlane.xlu0 %1164
    %v1166 = vsel %vm712, %v543, 0.0
    %1167 = vadd.xlane.f32.xlu0 %v1166
    %v1168 = vpop.xlane.xlu0 %1167
    %v1169 = vsel %vm712, %v544, 0.0
    %1170 = vadd.xlane.f32.xlu0 %v1169
    %v1171 = vpop.xlane.xlu0 %1170
    %v1172 = vsel %vm712, %v545, 0.0
    %1173 = vadd.xlane.f32.xlu0 %v1172
    %v1174 = vpop.xlane.xlu0 %1173
    %v1175 = vsel %vm712, %v546, 0.0
    %1176 = vadd.xlane.f32.xlu0 %v1175
    %v1177 = vpop.xlane.xlu0 %1176
    %v1178 = vsel %vm712, %v547, 0.0
    %1179 = vadd.xlane.f32.xlu0 %v1178
    %v1180 = vpop.xlane.xlu0 %1179
    %v1181 = vsel %vm712, %v548, 0.0
    %1182 = vadd.xlane.f32.xlu0 %v1181
    %v1183 = vpop.xlane.xlu0 %1182
    %v1184 = vsel %vm712, %v549, 0.0
    %1185 = vadd.xlane.f32.xlu0 %v1184
    %v1186 = vpop.xlane.xlu0 %1185
    %v1187 = vsel %vm712, %v550, 0.0
    %1188 = vadd.xlane.f32.xlu0 %v1187
    %v1189 = vpop.xlane.xlu0 %1188
    %v1190 = vsel %vm712, %v551, 0.0
    %1191 = vadd.xlane.f32.xlu0 %v1190
    %v1192 = vpop.xlane.xlu0 %1191
    %v1193 = vsel %vm712, %v552, 0.0
    %1194 = vadd.xlane.f32.xlu0 %v1193
    %v1195 = vpop.xlane.xlu0 %1194
    %v1196 = vsel %vm712, %v553, 0.0
    %1197 = vadd.xlane.f32.xlu0 %v1196
    %v1198 = vpop.xlane.xlu0 %1197
    %v1199 = vsel %vm712, %v554, 0.0
    %1200 = vadd.xlane.f32.xlu0 %v1199
    %v1201 = vpop.xlane.xlu0 %1200
    %v1202 = vsel %vm712, %v555, 0.0
    %1203 = vadd.xlane.f32.xlu0 %v1202
    %v1204 = vpop.xlane.xlu0 %1203
    %v1205 = vsel %vm712, %v556, 0.0
    %1206 = vadd.xlane.f32.xlu0 %v1205
    %v1207 = vpop.xlane.xlu0 %1206
    %v1208 = vsel %vm712, %v557, 0.0
    %1209 = vadd.xlane.f32.xlu0 %v1208
    %v1210 = vpop.xlane.xlu0 %1209
    %v1211 = vsel %vm712, %v558, 0.0
    %1212 = vadd.xlane.f32.xlu0 %v1211
    %v1213 = vpop.xlane.xlu0 %1212
    %v1214 = vsel %vm712, %v559, 0.0
    %1215 = vadd.xlane.f32.xlu0 %v1214
    %v1216 = vpop.xlane.xlu0 %1215
    %v1217 = vsel %vm712, %v560, 0.0
    %1218 = vadd.xlane.f32.xlu0 %v1217
    %v1219 = vpop.xlane.xlu0 %1218
    %v1220 = vsel %vm712, %v561, 0.0
    %1221 = vadd.xlane.f32.xlu0 %v1220
    %v1222 = vpop.xlane.xlu0 %1221
    %v1223 = vsel %vm712, %v562, 0.0
    %1224 = vadd.xlane.f32.xlu0 %v1223
    %v1225 = vpop.xlane.xlu0 %1224
    %v1226 = vsel %vm712, %v563, 0.0
    %1227 = vadd.xlane.f32.xlu0 %v1226
    %v1228 = vpop.xlane.xlu0 %1227
    %v1229 = vsel %vm712, %v564, 0.0
    %1230 = vadd.xlane.f32.xlu0 %v1229
    %v1231 = vpop.xlane.xlu0 %1230
    %v1232 = vsel %vm712, %v565, 0.0
    %1233 = vadd.xlane.f32.xlu0 %v1232
    %v1234 = vpop.xlane.xlu0 %1233
    %v1235 = vsel %vm712, %v566, 0.0
    %1236 = vadd.xlane.f32.xlu0 %v1235
    %v1237 = vpop.xlane.xlu0 %1236
    %v1238 = vsel %vm712, %v567, 0.0
    %1239 = vadd.xlane.f32.xlu0 %v1238
    %v1240 = vpop.xlane.xlu0 %1239
    %v1241 = vsel %vm712, %v568, 0.0
    %1242 = vadd.xlane.f32.xlu0 %v1241
    %v1243 = vpop.xlane.xlu0 %1242
    %v1244 = vsel %vm712, %v569, 0.0
    %1245 = vadd.xlane.f32.xlu0 %v1244
    %v1246 = vpop.xlane.xlu0 %1245
    %v1247 = vsel %vm712, %v570, 0.0
    %1248 = vadd.xlane.f32.xlu0 %v1247
    %v1249 = vpop.xlane.xlu0 %1248
    %v1250 = vsel %vm712, %v571, 0.0
    %1251 = vadd.xlane.f32.xlu0 %v1250
    %v1252 = vpop.xlane.xlu0 %1251
    %v1253 = vsel %vm712, %v572, 0.0
    %1254 = vadd.xlane.f32.xlu0 %v1253
    %v1255 = vpop.xlane.xlu0 %1254
    %v1256 = vsel %vm712, %v573, 0.0
    %1257 = vadd.xlane.f32.xlu0 %v1256
    %v1258 = vpop.xlane.xlu0 %1257
    %v1259 = vsel %vm712, %v574, 0.0
    %1260 = vadd.xlane.f32.xlu0 %v1259
    %v1261 = vpop.xlane.xlu0 %1260
    %v1262 = vsel %vm712, %v575, 0.0
    %1263 = vadd.xlane.f32.xlu0 %v1262
    %v1264 = vpop.xlane.xlu0 %1263
    %v1265 = vsel %vm712, %v576, 0.0
    %1266 = vadd.xlane.f32.xlu0 %v1265
    %v1267 = vpop.xlane.xlu0 %1266
    %v1268 = vsel %vm712, %v577, 0.0
    %1269 = vadd.xlane.f32.xlu0 %v1268
    %v1270 = vpop.xlane.xlu0 %1269
    %v1271 = vsel %vm712, %v578, 0.0
    %1272 = vadd.xlane.f32.xlu0 %v1271
    %v1273 = vpop.xlane.xlu0 %1272
    %v1274 = vsel %vm712, %v579, 0.0
    %1275 = vadd.xlane.f32.xlu0 %v1274
    %v1276 = vpop.xlane.xlu0 %1275
    %v1277 = vsel %vm712, %v580, 0.0
    %1278 = vadd.xlane.f32.xlu0 %v1277
    %v1279 = vpop.xlane.xlu0 %1278
    %v1280 = vsel %vm712, %v581, 0.0
    %1281 = vadd.xlane.f32.xlu0 %v1280
    %v1282 = vpop.xlane.xlu0 %1281
    %v1283 = vsel %vm712, %v582, 0.0
    %1284 = vadd.xlane.f32.xlu0 %v1283
    %v1285 = vpop.xlane.xlu0 %1284
    %v1286 = vsel %vm712, %v583, 0.0
    %1287 = vadd.xlane.f32.xlu0 %v1286
    %v1288 = vpop.xlane.xlu0 %1287
    %v1289 = vsel %vm712, %v584, 0.0
    %1290 = vadd.xlane.f32.xlu0 %v1289
    %v1291 = vpop.xlane.xlu0 %1290
    %v1292 = vsel %vm712, %v585, 0.0
    %1293 = vadd.xlane.f32.xlu0 %v1292
    %v1294 = vpop.xlane.xlu0 %1293
    %v1295 = vsel %vm712, %v586, 0.0
    %1296 = vadd.xlane.f32.xlu0 %v1295
    %v1297 = vpop.xlane.xlu0 %1296
    %v1298 = vsel %vm712, %v587, 0.0
    %1299 = vadd.xlane.f32.xlu0 %v1298
    %v1300 = vpop.xlane.xlu0 %1299
    %v1301 = vsel %vm712, %v588, 0.0
    %1302 = vadd.xlane.f32.xlu0 %v1301
    %v1303 = vpop.xlane.xlu0 %1302
    %v1304 = vsel %vm712, %v589, 0.0
    %1305 = vadd.xlane.f32.xlu0 %v1304
    %v1306 = vpop.xlane.xlu0 %1305
    %v1307 = vsel %vm712, %v590, 0.0
    %1308 = vadd.xlane.f32.xlu0 %v1307
    %v1309 = vpop.xlane.xlu0 %1308
    %v1310 = vsel %vm712, %v591, 0.0
    %1311 = vadd.xlane.f32.xlu0 %v1310
    %v1312 = vpop.xlane.xlu0 %1311
    %v1313 = vsel %vm712, %v592, 0.0
    %1314 = vadd.xlane.f32.xlu0 %v1313
    %v1315 = vpop.xlane.xlu0 %1314
    %v1316 = vsel %vm712, %v593, 0.0
    %1317 = vadd.xlane.f32.xlu0 %v1316
    %v1318 = vpop.xlane.xlu0 %1317
    %v1319 = vsel %vm712, %v594, 0.0
    %1320 = vadd.xlane.f32.xlu0 %v1319
    %v1321 = vpop.xlane.xlu0 %1320
    %v1322 = vsel %vm712, %v595, 0.0
    %1323 = vadd.xlane.f32.xlu0 %v1322
    %v1324 = vpop.xlane.xlu0 %1323
    %v1325 = vsel %vm712, %v596, 0.0
    %1326 = vadd.xlane.f32.xlu0 %v1325
    %v1327 = vpop.xlane.xlu0 %1326
    %v1328 = vsel %vm712, %v597, 0.0
    %1329 = vadd.xlane.f32.xlu0 %v1328
    %v1330 = vpop.xlane.xlu0 %1329
    %v1331 = vsel %vm712, %v598, 0.0
    %1332 = vadd.xlane.f32.xlu0 %v1331
    %v1333 = vpop.xlane.xlu0 %1332
    %v1334 = vsel %vm712, %v599, 0.0
    %1335 = vadd.xlane.f32.xlu0 %v1334
    %v1336 = vpop.xlane.xlu0 %1335
    %v1337 = vsel %vm712, %v600, 0.0
    %1338 = vadd.xlane.f32.xlu0 %v1337
    %v1339 = vpop.xlane.xlu0 %1338
    %v1340 = vsel %vm712, %v601, 0.0
    %1341 = vadd.xlane.f32.xlu0 %v1340
    %v1342 = vpop.xlane.xlu0 %1341
    %v1343 = vsel %vm712, %v602, 0.0
    %1344 = vadd.xlane.f32.xlu0 %v1343
    %v1345 = vpop.xlane.xlu0 %1344
    %v1346 = vsel %vm712, %v603, 0.0
    %1347 = vadd.xlane.f32.xlu0 %v1346
    %v1348 = vpop.xlane.xlu0 %1347
    %v1349 = vsel %vm712, %v604, 0.0
    %1350 = vadd.xlane.f32.xlu0 %v1349
    %v1351 = vpop.xlane.xlu0 %1350
    %v1352 = vsel %vm712, %v605, 0.0
    %1353 = vadd.xlane.f32.xlu0 %v1352
    %v1354 = vpop.xlane.xlu0 %1353
    %v1355 = vsel %vm712, %v606, 0.0
    %1356 = vadd.xlane.f32.xlu0 %v1355
    %v1357 = vpop.xlane.xlu0 %1356
    %v1358 = vsel %vm712, %v607, 0.0
    %1359 = vadd.xlane.f32.xlu0 %v1358
    %v1360 = vpop.xlane.xlu0 %1359
    %v1361 = vsel %vm712, %v608, 0.0
    %1362 = vadd.xlane.f32.xlu0 %v1361
    %v1363 = vpop.xlane.xlu0 %1362
    %v1364 = vsel %vm712, %v609, 0.0
    %1365 = vadd.xlane.f32.xlu0 %v1364
    %v1366 = vpop.xlane.xlu0 %1365
    %v1367 = vsel %vm712, %v610, 0.0
    %1368 = vadd.xlane.f32.xlu0 %v1367
    %v1369 = vpop.xlane.xlu0 %1368
    %v1370 = vsel %vm712, %v611, 0.0
    %1371 = vadd.xlane.f32.xlu0 %v1370
    %v1372 = vpop.xlane.xlu0 %1371
    %v1373 = vsel %vm712, %v612, 0.0
    %1374 = vadd.xlane.f32.xlu0 %v1373
    %v1375 = vpop.xlane.xlu0 %1374
    %v1376 = vsel %vm712, %v613, 0.0
    %1377 = vadd.xlane.f32.xlu0 %v1376
    %v1378 = vpop.xlane.xlu0 %1377
    %v1379 = vsel %vm712, %v614, 0.0
    %1380 = vadd.xlane.f32.xlu0 %v1379
    %v1381 = vpop.xlane.xlu0 %1380
    %v1382 = vsel %vm712, %v615, 0.0
    %1383 = vadd.xlane.f32.xlu0 %v1382
    %v1384 = vpop.xlane.xlu0 %1383
    %v1385 = vsel %vm712, %v616, 0.0
    %1386 = vadd.xlane.f32.xlu0 %v1385
    %v1387 = vpop.xlane.xlu0 %1386
    %v1388 = vsel %vm712, %v617, 0.0
    %1389 = vadd.xlane.f32.xlu0 %v1388
    %v1390 = vpop.xlane.xlu0 %1389
    %v1391 = vsel %vm712, %v618, 0.0
    %1392 = vadd.xlane.f32.xlu0 %v1391
    %v1393 = vpop.xlane.xlu0 %1392
    %v1394 = vsel %vm712, %v619, 0.0
    %1395 = vadd.xlane.f32.xlu0 %v1394
    %v1396 = vpop.xlane.xlu0 %1395
    %v1397 = vsel %vm712, %v620, 0.0
    %1398 = vadd.xlane.f32.xlu0 %v1397
    %v1399 = vpop.xlane.xlu0 %1398
    %v1400 = vsel %vm712, %v621, 0.0
    %1401 = vadd.xlane.f32.xlu0 %v1400
    %v1402 = vpop.xlane.xlu0 %1401
    %v1403 = vsel %vm712, %v622, 0.0
    %1404 = vadd.xlane.f32.xlu0 %v1403
    %v1405 = vpop.xlane.xlu0 %1404
    %v1406 = vsel %vm712, %v623, 0.0
    %1407 = vadd.xlane.f32.xlu0 %v1406
    %v1408 = vpop.xlane.xlu0 %1407
    %v1409 = vsel %vm712, %v624, 0.0
    %1410 = vadd.xlane.f32.xlu0 %v1409
    %v1411 = vpop.xlane.xlu0 %1410
    %v1412 = vsel %vm712, %v625, 0.0
    %1413 = vadd.xlane.f32.xlu0 %v1412
    %v1414 = vpop.xlane.xlu0 %1413
    %v1415 = vsel %vm712, %v626, 0.0
    %1416 = vadd.xlane.f32.xlu0 %v1415
    %v1417 = vpop.xlane.xlu0 %1416
    %v1418 = vsel %vm712, %v627, 0.0
    %1419 = vadd.xlane.f32.xlu0 %v1418
    %v1420 = vpop.xlane.xlu0 %1419
    %v1421 = vsel %vm712, %v628, 0.0
    %1422 = vadd.xlane.f32.xlu0 %v1421
    %v1423 = vpop.xlane.xlu0 %1422
    %v1424 = vsel %vm712, %v629, 0.0
    %1425 = vadd.xlane.f32.xlu0 %v1424
    %v1426 = vpop.xlane.xlu0 %1425
    %v1427 = vsel %vm712, %v630, 0.0
    %1428 = vadd.xlane.f32.xlu0 %v1427
    %v1429 = vpop.xlane.xlu0 %1428
    %v1430 = vsel %vm712, %v631, 0.0
    %1431 = vadd.xlane.f32.xlu0 %v1430
    %v1432 = vpop.xlane.xlu0 %1431
    %v1433 = vsel %vm712, %v632, 0.0
    %1434 = vadd.xlane.f32.xlu0 %v1433
    %v1435 = vpop.xlane.xlu0 %1434
    %v1436 = vsel %vm712, %v633, 0.0
    %1437 = vadd.xlane.f32.xlu0 %v1436
    %v1438 = vpop.xlane.xlu0 %1437
    %v1439 = vsel %vm712, %v634, 0.0
    %1440 = vadd.xlane.f32.xlu0 %v1439
    %v1441 = vpop.xlane.xlu0 %1440
    %v1442 = vsel %vm712, %v635, 0.0
    %1443 = vadd.xlane.f32.xlu0 %v1442
    %v1444 = vpop.xlane.xlu0 %1443
    %v1445 = vsel %vm712, %v636, 0.0
    %1446 = vadd.xlane.f32.xlu0 %v1445
    %v1447 = vpop.xlane.xlu0 %1446
    %v1448 = vsel %vm712, %v637, 0.0
    %1449 = vadd.xlane.f32.xlu0 %v1448
    %v1450 = vpop.xlane.xlu0 %1449
    %v1451 = vsel %vm712, %v638, 0.0
    %1452 = vadd.xlane.f32.xlu0 %v1451
    %v1453 = vpop.xlane.xlu0 %1452
    %v1454 = vsel %vm712, %v639, 0.0
    %1455 = vadd.xlane.f32.xlu0 %v1454
    %v1456 = vpop.xlane.xlu0 %1455
    %v1457 = vsel %vm712, %v640, 0.0
    %1458 = vadd.xlane.f32.xlu0 %v1457
    %v1459 = vpop.xlane.xlu0 %1458
    %v1460 = vsel %vm712, %v641, 0.0
    %1461 = vadd.xlane.f32.xlu0 %v1460
    %v1462 = vpop.xlane.xlu0 %1461
    %v1463 = vsel %vm712, %v642, 0.0
    %1464 = vadd.xlane.f32.xlu0 %v1463
    %v1465 = vpop.xlane.xlu0 %1464
    %v1466 = vsel %vm712, %v643, 0.0
    %1467 = vadd.xlane.f32.xlu0 %v1466
    %v1468 = vpop.xlane.xlu0 %1467
    %v1469 = vsel %vm712, %v644, 0.0
    %1470 = vadd.xlane.f32.xlu0 %v1469
    %v1471 = vpop.xlane.xlu0 %1470
    %v1472 = vsel %vm712, %v645, 0.0
    %1473 = vadd.xlane.f32.xlu0 %v1472
    %v1474 = vpop.xlane.xlu0 %1473
    %v1475 = vsel %vm712, %v646, 0.0
    %1476 = vadd.xlane.f32.xlu0 %v1475
    %v1477 = vpop.xlane.xlu0 %1476
    %v1478 = vsel %vm712, %v647, 0.0
    %1479 = vadd.xlane.f32.xlu0 %v1478
    %v1480 = vpop.xlane.xlu0 %1479
    %v1481 = vsel %vm712, %v648, 0.0
    %1482 = vadd.xlane.f32.xlu0 %v1481
    %v1483 = vpop.xlane.xlu0 %1482
    %v1484 = vsel %vm712, %v649, 0.0
    %1485 = vadd.xlane.f32.xlu0 %v1484
    %v1486 = vpop.xlane.xlu0 %1485
    %v1487 = vsel %vm712, %v650, 0.0
    %1488 = vadd.xlane.f32.xlu0 %v1487
    %v1489 = vpop.xlane.xlu0 %1488
    %v1490 = vsel %vm712, %v651, 0.0
    %1491 = vadd.xlane.f32.xlu0 %v1490
    %v1492 = vpop.xlane.xlu0 %1491
    %v1493 = vsel %vm712, %v652, 0.0
    %1494 = vadd.xlane.f32.xlu0 %v1493
    %v1495 = vpop.xlane.xlu0 %1494
    %v1496 = vsel %vm712, %v653, 0.0
    %1497 = vadd.xlane.f32.xlu0 %v1496
    %v1498 = vpop.xlane.xlu0 %1497
    %v1499 = vsel %vm712, %v654, 0.0
    %1500 = vadd.xlane.f32.xlu0 %v1499
    %v1501 = vpop.xlane.xlu0 %1500
    %v1502 = vsel %vm712, %v655, 0.0
    %1503 = vadd.xlane.f32.xlu0 %v1502
    %v1504 = vpop.xlane.xlu0 %1503
    %v1505 = vsel %vm712, %v656, 0.0
    %1506 = vadd.xlane.f32.xlu0 %v1505
    %v1507 = vpop.xlane.xlu0 %1506
    %v1508 = vsel %vm712, %v657, 0.0
    %1509 = vadd.xlane.f32.xlu0 %v1508
    %v1510 = vpop.xlane.xlu0 %1509
    %v1511 = vsel %vm712, %v658, 0.0
    %1512 = vadd.xlane.f32.xlu0 %v1511
    %v1513 = vpop.xlane.xlu0 %1512
    %v1514 = vsel %vm712, %v659, 0.0
    %1515 = vadd.xlane.f32.xlu0 %v1514
    %v1516 = vpop.xlane.xlu0 %1515
    %v1517 = vsel %vm712, %v660, 0.0
    %1518 = vadd.xlane.f32.xlu0 %v1517
    %v1519 = vpop.xlane.xlu0 %1518
    %v1520 = vsel %vm712, %v661, 0.0
    %1521 = vadd.xlane.f32.xlu0 %v1520
    %v1522 = vpop.xlane.xlu0 %1521
    %v1523 = vsel %vm712, %v662, 0.0
    %1524 = vadd.xlane.f32.xlu0 %v1523
    %v1525 = vpop.xlane.xlu0 %1524
    %v1526 = vsel %vm712, %v663, 0.0
    %1527 = vadd.xlane.f32.xlu0 %v1526
    %v1528 = vpop.xlane.xlu0 %1527
    %v1529 = vsel %vm712, %v664, 0.0
    %1530 = vadd.xlane.f32.xlu0 %v1529
    %v1531 = vpop.xlane.xlu0 %1530
    %v1532 = vsel %vm712, %v665, 0.0
    %1533 = vadd.xlane.f32.xlu0 %v1532
    %v1534 = vpop.xlane.xlu0 %1533
    %v1535 = vsel %vm712, %v666, 0.0
    %1536 = vadd.xlane.f32.xlu0 %v1535
    %v1537 = vpop.xlane.xlu0 %1536
    %v1538 = vsel %vm712, %v667, 0.0
    %1539 = vadd.xlane.f32.xlu0 %v1538
    %v1540 = vpop.xlane.xlu0 %1539
    %v1541 = vsel %vm712, %v668, 0.0
    %1542 = vadd.xlane.f32.xlu0 %v1541
    %v1543 = vpop.xlane.xlu0 %1542
    %v1544 = vsel %vm712, %v669, 0.0
    %1545 = vadd.xlane.f32.xlu0 %v1544
    %v1546 = vpop.xlane.xlu0 %1545
    %v1547 = vsel %vm712, %v670, 0.0
    %1548 = vadd.xlane.f32.xlu0 %v1547
    %v1549 = vpop.xlane.xlu0 %1548
    %v1550 = vsel %vm712, %v671, 0.0
    %1551 = vadd.xlane.f32.xlu0 %v1550
    %v1552 = vpop.xlane.xlu0 %1551
    %v1553 = vsel %vm712, %v672, 0.0
    %1554 = vadd.xlane.f32.xlu0 %v1553
    %v1555 = vpop.xlane.xlu0 %1554
    %v1556 = vsel %vm712, %v673, 0.0
    %1557 = vadd.xlane.f32.xlu0 %v1556
    %v1558 = vpop.xlane.xlu0 %1557
    %v1559 = vsel %vm712, %v674, 0.0
    %1560 = vadd.xlane.f32.xlu0 %v1559
    %v1561 = vpop.xlane.xlu0 %1560
    %v1562 = vsel %vm712, %v675, 0.0
    %1563 = vadd.xlane.f32.xlu0 %v1562
    %v1564 = vpop.xlane.xlu0 %1563
    %v1565 = vsel %vm712, %v676, 0.0
    %1566 = vadd.xlane.f32.xlu0 %v1565
    %v1567 = vpop.xlane.xlu0 %1566
    %v1568 = vsel %vm712, %v677, 0.0
    %1569 = vadd.xlane.f32.xlu0 %v1568
    %v1570 = vpop.xlane.xlu0 %1569
    %v1571 = vsel %vm712, %v678, 0.0
    %1572 = vadd.xlane.f32.xlu0 %v1571
    %v1573 = vpop.xlane.xlu0 %1572
    %v1574 = vsel %vm712, %v679, 0.0
    %1575 = vadd.xlane.f32.xlu0 %v1574
    %v1576 = vpop.xlane.xlu0 %1575
    %v1577 = vsel %vm712, %v680, 0.0
    %1578 = vadd.xlane.f32.xlu0 %v1577
    %v1579 = vpop.xlane.xlu0 %1578
    %v1580 = vsel %vm712, %v681, 0.0
    %1581 = vadd.xlane.f32.xlu0 %v1580
    %v1582 = vpop.xlane.xlu0 %1581
    %v1583 = vsel %vm712, %v682, 0.0
    %1584 = vadd.xlane.f32.xlu0 %v1583
    %v1585 = vpop.xlane.xlu0 %1584
    %v1586 = vsel %vm712, %v683, 0.0
    %1587 = vadd.xlane.f32.xlu0 %v1586
    %v1588 = vpop.xlane.xlu0 %1587
    %v1589 = vsel %vm712, %v684, 0.0
    %1590 = vadd.xlane.f32.xlu0 %v1589
    %v1591 = vpop.xlane.xlu0 %1590
    %v1592 = vsel %vm712, %v685, 0.0
    %1593 = vadd.xlane.f32.xlu0 %v1592
    %v1594 = vpop.xlane.xlu0 %1593
    %v1595 = vsel %vm712, %v686, 0.0
    %1596 = vadd.xlane.f32.xlu0 %v1595
    %v1597 = vpop.xlane.xlu0 %1596
    %v1598 = vsel %vm712, %v687, 0.0
    %1599 = vadd.xlane.f32.xlu0 %v1598
    %v1600 = vpop.xlane.xlu0 %1599
    %v1601 = vsel %vm712, %v688, 0.0
    %1602 = vadd.xlane.f32.xlu0 %v1601
    %v1603 = vpop.xlane.xlu0 %1602
    %v1604 = vsel %vm712, %v689, 0.0
    %1605 = vadd.xlane.f32.xlu0 %v1604
    %v1606 = vpop.xlane.xlu0 %1605
    %v1607 = vsel %vm712, %v690, 0.0
    %1608 = vadd.xlane.f32.xlu0 %v1607
    %v1609 = vpop.xlane.xlu0 %1608
    %v1610 = vsel %vm712, %v691, 0.0
    %1611 = vadd.xlane.f32.xlu0 %v1610
    %v1612 = vpop.xlane.xlu0 %1611
    %v1613 = vsel %vm712, %v692, 0.0
    %1614 = vadd.xlane.f32.xlu0 %v1613
    %v1615 = vpop.xlane.xlu0 %1614
    %v1616 = vsel %vm712, %v693, 0.0
    %1617 = vadd.xlane.f32.xlu0 %v1616
    %v1618 = vpop.xlane.xlu0 %1617
    %v1619 = vsel %vm712, %v694, 0.0
    %1620 = vadd.xlane.f32.xlu0 %v1619
    %v1621 = vpop.xlane.xlu0 %1620
    %v1622 = vsel %vm712, %v695, 0.0
    %1623 = vadd.xlane.f32.xlu0 %v1622
    %v1624 = vpop.xlane.xlu0 %1623
    %v1625 = vsel %vm712, %v696, 0.0
    %1626 = vadd.xlane.f32.xlu0 %v1625
    %v1627 = vpop.xlane.xlu0 %1626
    %v1628 = vsel %vm712, %v697, 0.0
    %1629 = vadd.xlane.f32.xlu0 %v1628
    %v1630 = vpop.xlane.xlu0 %1629
    %v1631 = vsel %vm712, %v698, 0.0
    %1632 = vadd.xlane.f32.xlu0 %v1631
    %v1633 = vpop.xlane.xlu0 %1632
    %v1634 = vsel %vm712, %v699, 0.0
    %1635 = vadd.xlane.f32.xlu0 %v1634
    %v1636 = vpop.xlane.xlu0 %1635
    %v1637 = vsel %vm712, %v700, 0.0
    %1638 = vadd.xlane.f32.xlu0 %v1637
    %v1639 = vpop.xlane.xlu0 %1638
    %v1640 = vsel %vm712, %v701, 0.0
    %1641 = vadd.xlane.f32.xlu0 %v1640
    %v1642 = vpop.xlane.xlu0 %1641
    %v1643 = vsel %vm712, %v702, 0.0
    %1644 = vadd.xlane.f32.xlu0 %v1643
    %v1645 = vpop.xlane.xlu0 %1644
    %v1646 = vsel %vm712, %v703, 0.0
    %1647 = vadd.xlane.f32.xlu0 %v1646
    %v1648 = vpop.xlane.xlu0 %1647
    %v1649 = vsel %vm712, %v704, 0.0
    %1650 = vadd.xlane.f32.xlu0 %v1649
    %v1651 = vpop.xlane.xlu0 %1650
    %v1652 = vsel %vm712, %v705, 0.0
    %1653 = vadd.xlane.f32.xlu0 %v1652
    %v1654 = vpop.xlane.xlu0 %1653
    %v1655 = vsel %vm712, %v706, 0.0
    %1656 = vadd.xlane.f32.xlu0 %v1655
    %v1657 = vpop.xlane.xlu0 %1656
    %v1658 = vsel %vm712, %v707, 0.0
    %1659 = vadd.xlane.f32.xlu0 %v1658
    %v1660 = vpop.xlane.xlu0 %1659
    %v1661 = vsel %vm712, %v708, 0.0
    %1662 = vadd.xlane.f32.xlu0 %v1661
    %v1663 = vpop.xlane.xlu0 %1662
    %v1664 = vsel %vm712, %v709, 0.0
    %1665 = vadd.xlane.f32.xlu0 %v1664
    %v1666 = vpop.xlane.xlu0 %1665
    %v1667 = vsel %vm712, %v710, 0.0
    %1668 = vadd.xlane.f32.xlu0 %v1667
    %v1669 = vpop.xlane.xlu0 %1668
    %v1670 = vsel %vm712, %v711, 0.0
    %1671 = vadd.xlane.f32.xlu0 %v1670
    %v1672 = vpop.xlane.xlu0 %1671
    %v1673 = vrcp.pop 16.0
    %v1674 = vmul.f32 %v715, %v1673
    %v1675 = vmul.f32 %v718, %v1673
    %v1676 = vmul.f32 %v721, %v1673
    %v1677 = vmul.f32 %v724, %v1673
    %v1678 = vmul.f32 %v727, %v1673
    %v1679 = vmul.f32 %v730, %v1673
    %v1680 = vmul.f32 %v733, %v1673
    %v1681 = vmul.f32 %v736, %v1673
    %v1682 = vmul.f32 %v739, %v1673
    %v1683 = vmul.f32 %v742, %v1673
    %v1684 = vmul.f32 %v745, %v1673
    %v1685 = vmul.f32 %v748, %v1673
    %v1686 = vmul.f32 %v751, %v1673
    %v1687 = vmul.f32 %v754, %v1673
    %v1688 = vmul.f32 %v757, %v1673
    %v1689 = vmul.f32 %v760, %v1673
    %v1690 = vmul.f32 %v763, %v1673
    %v1691 = vmul.f32 %v766, %v1673
    %v1692 = vmul.f32 %v769, %v1673
    %v1693 = vmul.f32 %v772, %v1673
    %v1694 = vmul.f32 %v775, %v1673
    %v1695 = vmul.f32 %v778, %v1673
    %v1696 = vmul.f32 %v781, %v1673
    %v1697 = vmul.f32 %v784, %v1673
    %v1698 = vmul.f32 %v787, %v1673
    %v1699 = vmul.f32 %v790, %v1673
    %v1700 = vmul.f32 %v793, %v1673
    %v1701 = vmul.f32 %v796, %v1673
    %v1702 = vmul.f32 %v799, %v1673
    %v1703 = vmul.f32 %v802, %v1673
    %v1704 = vmul.f32 %v805, %v1673
    %v1705 = vmul.f32 %v808, %v1673
    %v1706 = vmul.f32 %v811, %v1673
    %v1707 = vmul.f32 %v814, %v1673
    %v1708 = vmul.f32 %v817, %v1673
    %v1709 = vmul.f32 %v820, %v1673
    %v1710 = vmul.f32 %v823, %v1673
    %v1711 = vmul.f32 %v826, %v1673
    %v1712 = vmul.f32 %v829, %v1673
    %v1713 = vmul.f32 %v832, %v1673
    %v1714 = vmul.f32 %v835, %v1673
    %v1715 = vmul.f32 %v838, %v1673
    %v1716 = vmul.f32 %v841, %v1673
    %v1717 = vmul.f32 %v844, %v1673
    %v1718 = vmul.f32 %v847, %v1673
    %v1719 = vmul.f32 %v850, %v1673
    %v1720 = vmul.f32 %v853, %v1673
    %v1721 = vmul.f32 %v856, %v1673
    %v1722 = vmul.f32 %v859, %v1673
    %v1723 = vmul.f32 %v862, %v1673
    %v1724 = vmul.f32 %v865, %v1673
    %v1725 = vmul.f32 %v868, %v1673
    %v1726 = vmul.f32 %v871, %v1673
    %v1727 = vmul.f32 %v874, %v1673
    %v1728 = vmul.f32 %v877, %v1673
    %v1729 = vmul.f32 %v880, %v1673
    %v1730 = vmul.f32 %v883, %v1673
    %v1731 = vmul.f32 %v886, %v1673
    %v1732 = vmul.f32 %v889, %v1673
    %v1733 = vmul.f32 %v892, %v1673
    %v1734 = vmul.f32 %v895, %v1673
    %v1735 = vmul.f32 %v898, %v1673
    %v1736 = vmul.f32 %v901, %v1673
    %v1737 = vmul.f32 %v904, %v1673
    %v1738 = vmul.f32 %v907, %v1673
    %v1739 = vmul.f32 %v910, %v1673
    %v1740 = vmul.f32 %v913, %v1673
    %v1741 = vmul.f32 %v916, %v1673
    %v1742 = vmul.f32 %v919, %v1673
    %v1743 = vmul.f32 %v922, %v1673
    %v1744 = vmul.f32 %v925, %v1673
    %v1745 = vmul.f32 %v928, %v1673
    %v1746 = vmul.f32 %v931, %v1673
    %v1747 = vmul.f32 %v934, %v1673
    %v1748 = vmul.f32 %v937, %v1673
    %v1749 = vmul.f32 %v940, %v1673
    %v1750 = vmul.f32 %v943, %v1673
    %v1751 = vmul.f32 %v946, %v1673
    %v1752 = vmul.f32 %v949, %v1673
    %v1753 = vmul.f32 %v952, %v1673
    %v1754 = vmul.f32 %v955, %v1673
    %v1755 = vmul.f32 %v958, %v1673
    %v1756 = vmul.f32 %v961, %v1673
    %v1757 = vmul.f32 %v964, %v1673
    %v1758 = vmul.f32 %v967, %v1673
    %v1759 = vmul.f32 %v970, %v1673
    %v1760 = vmul.f32 %v973, %v1673
    %v1761 = vmul.f32 %v976, %v1673
    %v1762 = vmul.f32 %v979, %v1673
    %v1763 = vmul.f32 %v982, %v1673
    %v1764 = vmul.f32 %v985, %v1673
    %v1765 = vmul.f32 %v988, %v1673
    %v1766 = vmul.f32 %v991, %v1673
    %v1767 = vmul.f32 %v994, %v1673
    %v1768 = vmul.f32 %v997, %v1673
    %v1769 = vmul.f32 %v1000, %v1673
    %v1770 = vmul.f32 %v1003, %v1673
    %v1771 = vmul.f32 %v1006, %v1673
    %v1772 = vmul.f32 %v1009, %v1673
    %v1773 = vmul.f32 %v1012, %v1673
    %v1774 = vmul.f32 %v1015, %v1673
    %v1775 = vmul.f32 %v1018, %v1673
    %v1776 = vmul.f32 %v1021, %v1673
    %v1777 = vmul.f32 %v1024, %v1673
    %v1778 = vmul.f32 %v1027, %v1673
    %v1779 = vmul.f32 %v1030, %v1673
    %v1780 = vmul.f32 %v1033, %v1673
    %v1781 = vmul.f32 %v1036, %v1673
    %v1782 = vmul.f32 %v1039, %v1673
    %v1783 = vmul.f32 %v1042, %v1673
    %v1784 = vmul.f32 %v1045, %v1673
    %v1785 = vmul.f32 %v1048, %v1673
    %v1786 = vmul.f32 %v1051, %v1673
    %v1787 = vmul.f32 %v1054, %v1673
    %v1788 = vmul.f32 %v1057, %v1673
    %v1789 = vmul.f32 %v1060, %v1673
    %v1790 = vmul.f32 %v1063, %v1673
    %v1791 = vmul.f32 %v1066, %v1673
    %v1792 = vmul.f32 %v1069, %v1673
    %v1793 = vmul.f32 %v1072, %v1673
    %v1794 = vmul.f32 %v1075, %v1673
    %v1795 = vmul.f32 %v1078, %v1673
    %v1796 = vmul.f32 %v1081, %v1673
    %v1797 = vmul.f32 %v1084, %v1673
    %v1798 = vmul.f32 %v1087, %v1673
    %v1799 = vmul.f32 %v1090, %v1673
    %v1800 = vmul.f32 %v1093, %v1673
    %v1801 = vmul.f32 %v1096, %v1673
    %v1802 = vmul.f32 %v1099, %v1673
    %v1803 = vmul.f32 %v1102, %v1673
    %v1804 = vmul.f32 %v1105, %v1673
    %v1805 = vmul.f32 %v1108, %v1673
    %v1806 = vmul.f32 %v1111, %v1673
    %v1807 = vmul.f32 %v1114, %v1673
    %v1808 = vmul.f32 %v1117, %v1673
    %v1809 = vmul.f32 %v1120, %v1673
    %v1810 = vmul.f32 %v1123, %v1673
    %v1811 = vmul.f32 %v1126, %v1673
    %v1812 = vmul.f32 %v1129, %v1673
    %v1813 = vmul.f32 %v1132, %v1673
    %v1814 = vmul.f32 %v1135, %v1673
    %v1815 = vmul.f32 %v1138, %v1673
    %v1816 = vmul.f32 %v1141, %v1673
    %v1817 = vmul.f32 %v1144, %v1673
    %v1818 = vmul.f32 %v1147, %v1673
    %v1819 = vmul.f32 %v1150, %v1673
    %v1820 = vmul.f32 %v1153, %v1673
    %v1821 = vmul.f32 %v1156, %v1673
    %v1822 = vmul.f32 %v1159, %v1673
    %v1823 = vmul.f32 %v1162, %v1673
    %v1824 = vmul.f32 %v1165, %v1673
    %v1825 = vmul.f32 %v1168, %v1673
    %v1826 = vmul.f32 %v1171, %v1673
    %v1827 = vmul.f32 %v1174, %v1673
    %v1828 = vmul.f32 %v1177, %v1673
    %v1829 = vmul.f32 %v1180, %v1673
    %v1830 = vmul.f32 %v1183, %v1673
    %v1831 = vmul.f32 %v1186, %v1673
    %v1832 = vmul.f32 %v1189, %v1673
    %v1833 = vmul.f32 %v1192, %v1673
    %v1834 = vmul.f32 %v1195, %v1673
    %v1835 = vmul.f32 %v1198, %v1673
    %v1836 = vmul.f32 %v1201, %v1673
    %v1837 = vmul.f32 %v1204, %v1673
    %v1838 = vmul.f32 %v1207, %v1673
    %v1839 = vmul.f32 %v1210, %v1673
    %v1840 = vmul.f32 %v1213, %v1673
    %v1841 = vmul.f32 %v1216, %v1673
    %v1842 = vmul.f32 %v1219, %v1673
    %v1843 = vmul.f32 %v1222, %v1673
    %v1844 = vmul.f32 %v1225, %v1673
    %v1845 = vmul.f32 %v1228, %v1673
    %v1846 = vmul.f32 %v1231, %v1673
    %v1847 = vmul.f32 %v1234, %v1673
    %v1848 = vmul.f32 %v1237, %v1673
    %v1849 = vmul.f32 %v1240, %v1673
    %v1850 = vmul.f32 %v1243, %v1673
    %v1851 = vmul.f32 %v1246, %v1673
    %v1852 = vmul.f32 %v1249, %v1673
    %v1853 = vmul.f32 %v1252, %v1673
    %v1854 = vmul.f32 %v1255, %v1673
    %v1855 = vmul.f32 %v1258, %v1673
    %v1856 = vmul.f32 %v1261, %v1673
    %v1857 = vmul.f32 %v1264, %v1673
    %v1858 = vmul.f32 %v1267, %v1673
    %v1859 = vmul.f32 %v1270, %v1673
    %v1860 = vmul.f32 %v1273, %v1673
    %v1861 = vmul.f32 %v1276, %v1673
    %v1862 = vmul.f32 %v1279, %v1673
    %v1863 = vmul.f32 %v1282, %v1673
    %v1864 = vmul.f32 %v1285, %v1673
    %v1865 = vmul.f32 %v1288, %v1673
    %v1866 = vmul.f32 %v1291, %v1673
    %v1867 = vmul.f32 %v1294, %v1673
    %v1868 = vmul.f32 %v1297, %v1673
    %v1869 = vmul.f32 %v1300, %v1673
    %v1870 = vmul.f32 %v1303, %v1673
    %v1871 = vmul.f32 %v1306, %v1673
    %v1872 = vmul.f32 %v1309, %v1673
    %v1873 = vmul.f32 %v1312, %v1673
    %v1874 = vmul.f32 %v1315, %v1673
    %v1875 = vmul.f32 %v1318, %v1673
    %v1876 = vmul.f32 %v1321, %v1673
    %v1877 = vmul.f32 %v1324, %v1673
    %v1878 = vmul.f32 %v1327, %v1673
    %v1879 = vmul.f32 %v1330, %v1673
    %v1880 = vmul.f32 %v1333, %v1673
    %v1881 = vmul.f32 %v1336, %v1673
    %v1882 = vmul.f32 %v1339, %v1673
    %v1883 = vmul.f32 %v1342, %v1673
    %v1884 = vmul.f32 %v1345, %v1673
    %v1885 = vmul.f32 %v1348, %v1673
    %v1886 = vmul.f32 %v1351, %v1673
    %v1887 = vmul.f32 %v1354, %v1673
    %v1888 = vmul.f32 %v1357, %v1673
    %v1889 = vmul.f32 %v1360, %v1673
    %v1890 = vmul.f32 %v1363, %v1673
    %v1891 = vmul.f32 %v1366, %v1673
    %v1892 = vmul.f32 %v1369, %v1673
    %v1893 = vmul.f32 %v1372, %v1673
    %v1894 = vmul.f32 %v1375, %v1673
    %v1895 = vmul.f32 %v1378, %v1673
    %v1896 = vmul.f32 %v1381, %v1673
    %v1897 = vmul.f32 %v1384, %v1673
    %v1898 = vmul.f32 %v1387, %v1673
    %v1899 = vmul.f32 %v1390, %v1673
    %v1900 = vmul.f32 %v1393, %v1673
    %v1901 = vmul.f32 %v1396, %v1673
    %v1902 = vmul.f32 %v1399, %v1673
    %v1903 = vmul.f32 %v1402, %v1673
    %v1904 = vmul.f32 %v1405, %v1673
    %v1905 = vmul.f32 %v1408, %v1673
    %v1906 = vmul.f32 %v1411, %v1673
    %v1907 = vmul.f32 %v1414, %v1673
    %v1908 = vmul.f32 %v1417, %v1673
    %v1909 = vmul.f32 %v1420, %v1673
    %v1910 = vmul.f32 %v1423, %v1673
    %v1911 = vmul.f32 %v1426, %v1673
    %v1912 = vmul.f32 %v1429, %v1673
    %v1913 = vmul.f32 %v1432, %v1673
    %v1914 = vmul.f32 %v1435, %v1673
    %v1915 = vmul.f32 %v1438, %v1673
    %v1916 = vmul.f32 %v1441, %v1673
    %v1917 = vmul.f32 %v1444, %v1673
    %v1918 = vmul.f32 %v1447, %v1673
    %v1919 = vmul.f32 %v1450, %v1673
    %v1920 = vmul.f32 %v1453, %v1673
    %v1921 = vmul.f32 %v1456, %v1673
    %v1922 = vmul.f32 %v1459, %v1673
    %v1923 = vmul.f32 %v1462, %v1673
    %v1924 = vmul.f32 %v1465, %v1673
    %v1925 = vmul.f32 %v1468, %v1673
    %v1926 = vmul.f32 %v1471, %v1673
    %v1927 = vmul.f32 %v1474, %v1673
    %v1928 = vmul.f32 %v1477, %v1673
    %v1929 = vmul.f32 %v1480, %v1673
    %v1930 = vmul.f32 %v1483, %v1673
    %v1931 = vmul.f32 %v1486, %v1673
    %v1932 = vmul.f32 %v1489, %v1673
    %v1933 = vmul.f32 %v1492, %v1673
    %v1934 = vmul.f32 %v1495, %v1673
    %v1935 = vmul.f32 %v1498, %v1673
    %v1936 = vmul.f32 %v1501, %v1673
    %v1937 = vmul.f32 %v1504, %v1673
    %v1938 = vmul.f32 %v1507, %v1673
    %v1939 = vmul.f32 %v1510, %v1673
    %v1940 = vmul.f32 %v1513, %v1673
    %v1941 = vmul.f32 %v1516, %v1673
    %v1942 = vmul.f32 %v1519, %v1673
    %v1943 = vmul.f32 %v1522, %v1673
    %v1944 = vmul.f32 %v1525, %v1673
    %v1945 = vmul.f32 %v1528, %v1673
    %v1946 = vmul.f32 %v1531, %v1673
    %v1947 = vmul.f32 %v1534, %v1673
    %v1948 = vmul.f32 %v1537, %v1673
    %v1949 = vmul.f32 %v1540, %v1673
    %v1950 = vmul.f32 %v1543, %v1673
    %v1951 = vmul.f32 %v1546, %v1673
    %v1952 = vmul.f32 %v1549, %v1673
    %v1953 = vmul.f32 %v1552, %v1673
    %v1954 = vmul.f32 %v1555, %v1673
    %v1955 = vmul.f32 %v1558, %v1673
    %v1956 = vmul.f32 %v1561, %v1673
    %v1957 = vmul.f32 %v1564, %v1673
    %v1958 = vmul.f32 %v1567, %v1673
    %v1959 = vmul.f32 %v1570, %v1673
    %v1960 = vmul.f32 %v1573, %v1673
    %v1961 = vmul.f32 %v1576, %v1673
    %v1962 = vmul.f32 %v1579, %v1673
    %v1963 = vmul.f32 %v1582, %v1673
    %v1964 = vmul.f32 %v1585, %v1673
    %v1965 = vmul.f32 %v1588, %v1673
    %v1966 = vmul.f32 %v1591, %v1673
    %v1967 = vmul.f32 %v1594, %v1673
    %v1968 = vmul.f32 %v1597, %v1673
    %v1969 = vmul.f32 %v1600, %v1673
    %v1970 = vmul.f32 %v1603, %v1673
    %v1971 = vmul.f32 %v1606, %v1673
    %v1972 = vmul.f32 %v1609, %v1673
    %v1973 = vmul.f32 %v1612, %v1673
    %v1974 = vmul.f32 %v1615, %v1673
    %v1975 = vmul.f32 %v1618, %v1673
    %v1976 = vmul.f32 %v1621, %v1673
    %v1977 = vmul.f32 %v1624, %v1673
    %v1978 = vmul.f32 %v1627, %v1673
    %v1979 = vmul.f32 %v1630, %v1673
    %v1980 = vmul.f32 %v1633, %v1673
    %v1981 = vmul.f32 %v1636, %v1673
    %v1982 = vmul.f32 %v1639, %v1673
    %v1983 = vmul.f32 %v1642, %v1673
    %v1984 = vmul.f32 %v1645, %v1673
    %v1985 = vmul.f32 %v1648, %v1673
    %v1986 = vmul.f32 %v1651, %v1673
    %v1987 = vmul.f32 %v1654, %v1673
    %v1988 = vmul.f32 %v1657, %v1673
    %v1989 = vmul.f32 %v1660, %v1673
    %v1990 = vmul.f32 %v1663, %v1673
    %v1991 = vmul.f32 %v1666, %v1673
    %v1992 = vmul.f32 %v1669, %v1673
    %v1993 = vmul.f32 %v1672, %v1673
    %v1994 = vpack.c.bf16 %v1675, %v1674
    %v1995 = vpack.c.bf16 %v1677, %v1676
    %v1996 = vpack.c.bf16 %v1679, %v1678
    %v1997 = vpack.c.bf16 %v1681, %v1680
    %v1998 = vpack.c.bf16 %v1683, %v1682
    %v1999 = vpack.c.bf16 %v1685, %v1684
    %v2000 = vpack.c.bf16 %v1687, %v1686
    %v2001 = vpack.c.bf16 %v1689, %v1688
    %v2002 = vpack.c.bf16 %v1691, %v1690
    %v2003 = vpack.c.bf16 %v1693, %v1692
    %v2004 = vpack.c.bf16 %v1695, %v1694
    %v2005 = vpack.c.bf16 %v1697, %v1696
    %v2006 = vpack.c.bf16 %v1699, %v1698
    %v2007 = vpack.c.bf16 %v1701, %v1700
    %v2008 = vpack.c.bf16 %v1703, %v1702
    %v2009 = vpack.c.bf16 %v1705, %v1704
    %v2010 = vpack.c.bf16 %v1707, %v1706
    %v2011 = vpack.c.bf16 %v1709, %v1708
    %v2012 = vpack.c.bf16 %v1711, %v1710
    %v2013 = vpack.c.bf16 %v1713, %v1712
    %v2014 = vpack.c.bf16 %v1715, %v1714
    %v2015 = vpack.c.bf16 %v1717, %v1716
    %v2016 = vpack.c.bf16 %v1719, %v1718
    %v2017 = vpack.c.bf16 %v1721, %v1720
    %v2018 = vpack.c.bf16 %v1723, %v1722
    %v2019 = vpack.c.bf16 %v1725, %v1724
    %v2020 = vpack.c.bf16 %v1727, %v1726
    %v2021 = vpack.c.bf16 %v1729, %v1728
    %v2022 = vpack.c.bf16 %v1731, %v1730
    %v2023 = vpack.c.bf16 %v1733, %v1732
    %v2024 = vpack.c.bf16 %v1735, %v1734
    %v2025 = vpack.c.bf16 %v1737, %v1736
    %v2026 = vpack.c.bf16 %v1739, %v1738
    %v2027 = vpack.c.bf16 %v1741, %v1740
    %v2028 = vpack.c.bf16 %v1743, %v1742
    %v2029 = vpack.c.bf16 %v1745, %v1744
    %v2030 = vpack.c.bf16 %v1747, %v1746
    %v2031 = vpack.c.bf16 %v1749, %v1748
    %v2032 = vpack.c.bf16 %v1751, %v1750
    %v2033 = vpack.c.bf16 %v1753, %v1752
    %v2034 = vpack.c.bf16 %v1755, %v1754
    %v2035 = vpack.c.bf16 %v1757, %v1756
    %v2036 = vpack.c.bf16 %v1759, %v1758
    %v2037 = vpack.c.bf16 %v1761, %v1760
    %v2038 = vpack.c.bf16 %v1763, %v1762
    %v2039 = vpack.c.bf16 %v1765, %v1764
    %v2040 = vpack.c.bf16 %v1767, %v1766
    %v2041 = vpack.c.bf16 %v1769, %v1768
    %v2042 = vpack.c.bf16 %v1771, %v1770
    %v2043 = vpack.c.bf16 %v1773, %v1772
    %v2044 = vpack.c.bf16 %v1775, %v1774
    %v2045 = vpack.c.bf16 %v1777, %v1776
    %v2046 = vpack.c.bf16 %v1779, %v1778
    %v2047 = vpack.c.bf16 %v1781, %v1780
    %v2048 = vpack.c.bf16 %v1783, %v1782
    %v2049 = vpack.c.bf16 %v1785, %v1784
    %v2050 = vpack.c.bf16 %v1787, %v1786
    %v2051 = vpack.c.bf16 %v1789, %v1788
    %v2052 = vpack.c.bf16 %v1791, %v1790
    %v2053 = vpack.c.bf16 %v1793, %v1792
    %v2054 = vpack.c.bf16 %v1795, %v1794
    %v2055 = vpack.c.bf16 %v1797, %v1796
    %v2056 = vpack.c.bf16 %v1799, %v1798
    %v2057 = vpack.c.bf16 %v1801, %v1800
    %v2058 = vpack.c.bf16 %v1803, %v1802
    %v2059 = vpack.c.bf16 %v1805, %v1804
    %v2060 = vpack.c.bf16 %v1807, %v1806
    %v2061 = vpack.c.bf16 %v1809, %v1808
    %v2062 = vpack.c.bf16 %v1811, %v1810
    %v2063 = vpack.c.bf16 %v1813, %v1812
    %v2064 = vpack.c.bf16 %v1815, %v1814
    %v2065 = vpack.c.bf16 %v1817, %v1816
    %v2066 = vpack.c.bf16 %v1819, %v1818
    %v2067 = vpack.c.bf16 %v1821, %v1820
    %v2068 = vpack.c.bf16 %v1823, %v1822
    %v2069 = vpack.c.bf16 %v1825, %v1824
    %v2070 = vpack.c.bf16 %v1827, %v1826
    %v2071 = vpack.c.bf16 %v1829, %v1828
    %v2072 = vpack.c.bf16 %v1831, %v1830
    %v2073 = vpack.c.bf16 %v1833, %v1832
    %v2074 = vpack.c.bf16 %v1835, %v1834
    %v2075 = vpack.c.bf16 %v1837, %v1836
    %v2076 = vpack.c.bf16 %v1839, %v1838
    %v2077 = vpack.c.bf16 %v1841, %v1840
    %v2078 = vpack.c.bf16 %v1843, %v1842
    %v2079 = vpack.c.bf16 %v1845, %v1844
    %v2080 = vpack.c.bf16 %v1847, %v1846
    %v2081 = vpack.c.bf16 %v1849, %v1848
    %v2082 = vpack.c.bf16 %v1851, %v1850
    %v2083 = vpack.c.bf16 %v1853, %v1852
    %v2084 = vpack.c.bf16 %v1855, %v1854
    %v2085 = vpack.c.bf16 %v1857, %v1856
    %v2086 = vpack.c.bf16 %v1859, %v1858
    %v2087 = vpack.c.bf16 %v1861, %v1860
    %v2088 = vpack.c.bf16 %v1863, %v1862
    %v2089 = vpack.c.bf16 %v1865, %v1864
    %v2090 = vpack.c.bf16 %v1867, %v1866
    %v2091 = vpack.c.bf16 %v1869, %v1868
    %v2092 = vpack.c.bf16 %v1871, %v1870
    %v2093 = vpack.c.bf16 %v1873, %v1872
    %v2094 = vpack.c.bf16 %v1875, %v1874
    %v2095 = vpack.c.bf16 %v1877, %v1876
    %v2096 = vpack.c.bf16 %v1879, %v1878
    %v2097 = vpack.c.bf16 %v1881, %v1880
    %v2098 = vpack.c.bf16 %v1883, %v1882
    %v2099 = vpack.c.bf16 %v1885, %v1884
    %v2100 = vpack.c.bf16 %v1887, %v1886
    %v2101 = vpack.c.bf16 %v1889, %v1888
    %v2102 = vpack.c.bf16 %v1891, %v1890
    %v2103 = vpack.c.bf16 %v1893, %v1892
    %v2104 = vpack.c.bf16 %v1895, %v1894
    %v2105 = vpack.c.bf16 %v1897, %v1896
    %v2106 = vpack.c.bf16 %v1899, %v1898
    %v2107 = vpack.c.bf16 %v1901, %v1900
    %v2108 = vpack.c.bf16 %v1903, %v1902
    %v2109 = vpack.c.bf16 %v1905, %v1904
    %v2110 = vpack.c.bf16 %v1907, %v1906
    %v2111 = vpack.c.bf16 %v1909, %v1908
    %v2112 = vpack.c.bf16 %v1911, %v1910
    %v2113 = vpack.c.bf16 %v1913, %v1912
    %v2114 = vpack.c.bf16 %v1915, %v1914
    %v2115 = vpack.c.bf16 %v1917, %v1916
    %v2116 = vpack.c.bf16 %v1919, %v1918
    %v2117 = vpack.c.bf16 %v1921, %v1920
    %v2118 = vpack.c.bf16 %v1923, %v1922
    %v2119 = vpack.c.bf16 %v1925, %v1924
    %v2120 = vpack.c.bf16 %v1927, %v1926
    %v2121 = vpack.c.bf16 %v1929, %v1928
    %v2122 = vpack.c.bf16 %v1931, %v1930
    %v2123 = vpack.c.bf16 %v1933, %v1932
    %v2124 = vpack.c.bf16 %v1935, %v1934
    %v2125 = vpack.c.bf16 %v1937, %v1936
    %v2126 = vpack.c.bf16 %v1939, %v1938
    %v2127 = vpack.c.bf16 %v1941, %v1940
    %v2128 = vpack.c.bf16 %v1943, %v1942
    %v2129 = vpack.c.bf16 %v1945, %v1944
    %v2130 = vpack.c.bf16 %v1947, %v1946
    %v2131 = vpack.c.bf16 %v1949, %v1948
    %v2132 = vpack.c.bf16 %v1951, %v1950
    %v2133 = vpack.c.bf16 %v1953, %v1952
    %v2134 = vpack.c.bf16 %v1955, %v1954
    %v2135 = vpack.c.bf16 %v1957, %v1956
    %v2136 = vpack.c.bf16 %v1959, %v1958
    %v2137 = vpack.c.bf16 %v1961, %v1960
    %v2138 = vpack.c.bf16 %v1963, %v1962
    %v2139 = vpack.c.bf16 %v1965, %v1964
    %v2140 = vpack.c.bf16 %v1967, %v1966
    %v2141 = vpack.c.bf16 %v1969, %v1968
    %v2142 = vpack.c.bf16 %v1971, %v1970
    %v2143 = vpack.c.bf16 %v1973, %v1972
    %v2144 = vpack.c.bf16 %v1975, %v1974
    %v2145 = vpack.c.bf16 %v1977, %v1976
    %v2146 = vpack.c.bf16 %v1979, %v1978
    %v2147 = vpack.c.bf16 %v1981, %v1980
    %v2148 = vpack.c.bf16 %v1983, %v1982
    %v2149 = vpack.c.bf16 %v1985, %v1984
    %v2150 = vpack.c.bf16 %v1987, %v1986
    %v2151 = vpack.c.bf16 %v1989, %v1988
    %v2152 = vpack.c.bf16 %v1991, %v1990
    %v2153 = vpack.c.bf16 %v1993, %v1992
    %v2154 = vld [vmem:[#allocation2] sm:$0xff]
    %v2155 = vld [vmem:[#allocation2 + $0x8] sm:$0xff]
    %v2156 = vld [vmem:[#allocation2 + $0x10] sm:$0xff]
    %v2157 = vld [vmem:[#allocation2 + $0x18] sm:$0xff]
    %v2158 = vld [vmem:[#allocation2 + $0x20] sm:$0xff]
    %v2159 = vld [vmem:[#allocation2 + $0x28] sm:$0xff]
    %v2160 = vld [vmem:[#allocation2 + $0x30] sm:$0xff]
    %v2161 = vld [vmem:[#allocation2 + $0x38] sm:$0xff]
    %v2162 = vld [vmem:[#allocation2 + $0x40] sm:$0xff]
    %v2163 = vld [vmem:[#allocation2 + $0x48] sm:$0xff]
    %v2164 = vld [vmem:[#allocation2 + $0x50] sm:$0xff]
    %v2165 = vld [vmem:[#allocation2 + $0x58] sm:$0xff]
    %v2166 = vld [vmem:[#allocation2 + $0x60] sm:$0xff]
    %v2167 = vld [vmem:[#allocation2 + $0x68] sm:$0xff]
    %v2168 = vld [vmem:[#allocation2 + $0x70] sm:$0xff]
    %v2169 = vld [vmem:[#allocation2 + $0x78] sm:$0xff]
    %v2170 = vld [vmem:[#allocation2 + $0x80] sm:$0xff]
    %v2171 = vld [vmem:[#allocation2 + $0x88] sm:$0xff]
    %v2172 = vld [vmem:[#allocation2 + $0x90] sm:$0xff]
    %v2173 = vld [vmem:[#allocation2 + $0x98] sm:$0xff]
    %v2174 = vld [vmem:[#allocation2 + $0xa0] sm:$0xff]
    %v2175 = vld [vmem:[#allocation2 + $0xa8] sm:$0xff]
    %v2176 = vld [vmem:[#allocation2 + $0xb0] sm:$0xff]
    %v2177 = vld [vmem:[#allocation2 + $0xb8] sm:$0xff]
    %v2178 = vld [vmem:[#allocation2 + $0xc0] sm:$0xff]
    %v2179 = vld [vmem:[#allocation2 + $0xc8] sm:$0xff]
    %v2180 = vld [vmem:[#allocation2 + $0xd0] sm:$0xff]
    %v2181 = vld [vmem:[#allocation2 + $0xd8] sm:$0xff]
    %v2182 = vld [vmem:[#allocation2 + $0xe0] sm:$0xff]
    %v2183 = vld [vmem:[#allocation2 + $0xe8] sm:$0xff]
    %v2184 = vld [vmem:[#allocation2 + $0xf0] sm:$0xff]
    %v2185 = vld [vmem:[#allocation2 + $0xf8] sm:$0xff]
    %v2186 = vld [vmem:[#allocation2 + $0x100] sm:$0xff]
    %v2187 = vld [vmem:[#allocation2 + $0x108] sm:$0xff]
    %v2188 = vld [vmem:[#allocation2 + $0x110] sm:$0xff]
    %v2189 = vld [vmem:[#allocation2 + $0x118] sm:$0xff]
    %v2190 = vld [vmem:[#allocation2 + $0x120] sm:$0xff]
    %v2191 = vld [vmem:[#allocation2 + $0x128] sm:$0xff]
    %v2192 = vld [vmem:[#allocation2 + $0x130] sm:$0xff]
    %v2193 = vld [vmem:[#allocation2 + $0x138] sm:$0xff]
    %v2194 = vld [vmem:[#allocation2 + $0x140] sm:$0xff]
    %v2195 = vld [vmem:[#allocation2 + $0x148] sm:$0xff]
    %v2196 = vld [vmem:[#allocation2 + $0x150] sm:$0xff]
    %v2197 = vld [vmem:[#allocation2 + $0x158] sm:$0xff]
    %v2198 = vld [vmem:[#allocation2 + $0x160] sm:$0xff]
    %v2199 = vld [vmem:[#allocation2 + $0x168] sm:$0xff]
    %v2200 = vld [vmem:[#allocation2 + $0x170] sm:$0xff]
    %v2201 = vld [vmem:[#allocation2 + $0x178] sm:$0xff]
    %v2202 = vld [vmem:[#allocation2 + $0x180] sm:$0xff]
    %v2203 = vld [vmem:[#allocation2 + $0x188] sm:$0xff]
    %v2204 = vld [vmem:[#allocation2 + $0x190] sm:$0xff]
    %v2205 = vld [vmem:[#allocation2 + $0x198] sm:$0xff]
    %v2206 = vld [vmem:[#allocation2 + $0x1a0] sm:$0xff]
    %v2207 = vld [vmem:[#allocation2 + $0x1a8] sm:$0xff]
    %v2208 = vld [vmem:[#allocation2 + $0x1b0] sm:$0xff]
    %v2209 = vld [vmem:[#allocation2 + $0x1b8] sm:$0xff]
    %v2210 = vld [vmem:[#allocation2 + $0x1c0] sm:$0xff]
    %v2211 = vld [vmem:[#allocation2 + $0x1c8] sm:$0xff]
    %v2212 = vld [vmem:[#allocation2 + $0x1d0] sm:$0xff]
    %v2213 = vld [vmem:[#allocation2 + $0x1d8] sm:$0xff]
    %v2214 = vld [vmem:[#allocation2 + $0x1e0] sm:$0xff]
    %v2215 = vld [vmem:[#allocation2 + $0x1e8] sm:$0xff]
    %v2216 = vld [vmem:[#allocation2 + $0x1f0] sm:$0xff]
    %v2217 = vld [vmem:[#allocation2 + $0x1f8] sm:$0xff]
    %v2218 = vld [vmem:[#allocation2 + $0x200] sm:$0xff]
    %v2219 = vld [vmem:[#allocation2 + $0x208] sm:$0xff]
    %v2220 = vld [vmem:[#allocation2 + $0x210] sm:$0xff]
    %v2221 = vld [vmem:[#allocation2 + $0x218] sm:$0xff]
    %v2222 = vld [vmem:[#allocation2 + $0x220] sm:$0xff]
    %v2223 = vld [vmem:[#allocation2 + $0x228] sm:$0xff]
    %v2224 = vld [vmem:[#allocation2 + $0x230] sm:$0xff]
    %v2225 = vld [vmem:[#allocation2 + $0x238] sm:$0xff]
    %v2226 = vld [vmem:[#allocation2 + $0x240] sm:$0xff]
    %v2227 = vld [vmem:[#allocation2 + $0x248] sm:$0xff]
    %v2228 = vld [vmem:[#allocation2 + $0x250] sm:$0xff]
    %v2229 = vld [vmem:[#allocation2 + $0x258] sm:$0xff]
    %v2230 = vld [vmem:[#allocation2 + $0x260] sm:$0xff]
    %v2231 = vld [vmem:[#allocation2 + $0x268] sm:$0xff]
    %v2232 = vld [vmem:[#allocation2 + $0x270] sm:$0xff]
    %v2233 = vld [vmem:[#allocation2 + $0x278] sm:$0xff]
    %v2234 = vld [vmem:[#allocation2 + $0x280] sm:$0xff]
    %v2235 = vld [vmem:[#allocation2 + $0x288] sm:$0xff]
    %v2236 = vld [vmem:[#allocation2 + $0x290] sm:$0xff]
    %v2237 = vld [vmem:[#allocation2 + $0x298] sm:$0xff]
    %v2238 = vld [vmem:[#allocation2 + $0x2a0] sm:$0xff]
    %v2239 = vld [vmem:[#allocation2 + $0x2a8] sm:$0xff]
    %v2240 = vld [vmem:[#allocation2 + $0x2b0] sm:$0xff]
    %v2241 = vld [vmem:[#allocation2 + $0x2b8] sm:$0xff]
    %v2242 = vld [vmem:[#allocation2 + $0x2c0] sm:$0xff]
    %v2243 = vld [vmem:[#allocation2 + $0x2c8] sm:$0xff]
    %v2244 = vld [vmem:[#allocation2 + $0x2d0] sm:$0xff]
    %v2245 = vld [vmem:[#allocation2 + $0x2d8] sm:$0xff]
    %v2246 = vld [vmem:[#allocation2 + $0x2e0] sm:$0xff]
    %v2247 = vld [vmem:[#allocation2 + $0x2e8] sm:$0xff]
    %v2248 = vld [vmem:[#allocation2 + $0x2f0] sm:$0xff]
    %v2249 = vld [vmem:[#allocation2 + $0x2f8] sm:$0xff]
    %v2250 = vld [vmem:[#allocation2 + $0x300] sm:$0xff]
    %v2251 = vld [vmem:[#allocation2 + $0x308] sm:$0xff]
    %v2252 = vld [vmem:[#allocation2 + $0x310] sm:$0xff]
    %v2253 = vld [vmem:[#allocation2 + $0x318] sm:$0xff]
    %v2254 = vld [vmem:[#allocation2 + $0x320] sm:$0xff]
    %v2255 = vld [vmem:[#allocation2 + $0x328] sm:$0xff]
    %v2256 = vld [vmem:[#allocation2 + $0x330] sm:$0xff]
    %v2257 = vld [vmem:[#allocation2 + $0x338] sm:$0xff]
    %v2258 = vld [vmem:[#allocation2 + $0x340] sm:$0xff]
    %v2259 = vld [vmem:[#allocation2 + $0x348] sm:$0xff]
    %v2260 = vld [vmem:[#allocation2 + $0x350] sm:$0xff]
    %v2261 = vld [vmem:[#allocation2 + $0x358] sm:$0xff]
    %v2262 = vld [vmem:[#allocation2 + $0x360] sm:$0xff]
    %v2263 = vld [vmem:[#allocation2 + $0x368] sm:$0xff]
    %v2264 = vld [vmem:[#allocation2 + $0x370] sm:$0xff]
    %v2265 = vld [vmem:[#allocation2 + $0x378] sm:$0xff]
    %v2266 = vld [vmem:[#allocation2 + $0x380] sm:$0xff]
    %v2267 = vld [vmem:[#allocation2 + $0x388] sm:$0xff]
    %v2268 = vld [vmem:[#allocation2 + $0x390] sm:$0xff]
    %v2269 = vld [vmem:[#allocation2 + $0x398] sm:$0xff]
    %v2270 = vld [vmem:[#allocation2 + $0x3a0] sm:$0xff]
    %v2271 = vld [vmem:[#allocation2 + $0x3a8] sm:$0xff]
    %v2272 = vld [vmem:[#allocation2 + $0x3b0] sm:$0xff]
    %v2273 = vld [vmem:[#allocation2 + $0x3b8] sm:$0xff]
    %v2274 = vld [vmem:[#allocation2 + $0x3c0] sm:$0xff]
    %v2275 = vld [vmem:[#allocation2 + $0x3c8] sm:$0xff]
    %v2276 = vld [vmem:[#allocation2 + $0x3d0] sm:$0xff]
    %v2277 = vld [vmem:[#allocation2 + $0x3d8] sm:$0xff]
    %v2278 = vld [vmem:[#allocation2 + $0x3e0] sm:$0xff]
    %v2279 = vld [vmem:[#allocation2 + $0x3e8] sm:$0xff]
    %v2280 = vld [vmem:[#allocation2 + $0x3f0] sm:$0xff]
    %v2281 = vld [vmem:[#allocation2 + $0x3f8] sm:$0xff]
    %v2282 = vld [vmem:[#allocation2 + $0x400] sm:$0xff]
    %v2283 = vld [vmem:[#allocation2 + $0x408] sm:$0xff]
    %v2284 = vld [vmem:[#allocation2 + $0x410] sm:$0xff]
    %v2285 = vld [vmem:[#allocation2 + $0x418] sm:$0xff]
    %v2286 = vld [vmem:[#allocation2 + $0x420] sm:$0xff]
    %v2287 = vld [vmem:[#allocation2 + $0x428] sm:$0xff]
    %v2288 = vld [vmem:[#allocation2 + $0x430] sm:$0xff]
    %v2289 = vld [vmem:[#allocation2 + $0x438] sm:$0xff]
    %v2290 = vld [vmem:[#allocation2 + $0x440] sm:$0xff]
    %v2291 = vld [vmem:[#allocation2 + $0x448] sm:$0xff]
    %v2292 = vld [vmem:[#allocation2 + $0x450] sm:$0xff]
    %v2293 = vld [vmem:[#allocation2 + $0x458] sm:$0xff]
    %v2294 = vld [vmem:[#allocation2 + $0x460] sm:$0xff]
    %v2295 = vld [vmem:[#allocation2 + $0x468] sm:$0xff]
    %v2296 = vld [vmem:[#allocation2 + $0x470] sm:$0xff]
    %v2297 = vld [vmem:[#allocation2 + $0x478] sm:$0xff]
    %v2298 = vld [vmem:[#allocation2 + $0x480] sm:$0xff]
    %v2299 = vld [vmem:[#allocation2 + $0x488] sm:$0xff]
    %v2300 = vld [vmem:[#allocation2 + $0x490] sm:$0xff]
    %v2301 = vld [vmem:[#allocation2 + $0x498] sm:$0xff]
    %v2302 = vld [vmem:[#allocation2 + $0x4a0] sm:$0xff]
    %v2303 = vld [vmem:[#allocation2 + $0x4a8] sm:$0xff]
    %v2304 = vld [vmem:[#allocation2 + $0x4b0] sm:$0xff]
    %v2305 = vld [vmem:[#allocation2 + $0x4b8] sm:$0xff]
    %v2306 = vld [vmem:[#allocation2 + $0x4c0] sm:$0xff]
    %v2307 = vld [vmem:[#allocation2 + $0x4c8] sm:$0xff]
    %v2308 = vld [vmem:[#allocation2 + $0x4d0] sm:$0xff]
    %v2309 = vld [vmem:[#allocation2 + $0x4d8] sm:$0xff]
    %v2310 = vld [vmem:[#allocation2 + $0x4e0] sm:$0xff]
    %v2311 = vld [vmem:[#allocation2 + $0x4e8] sm:$0xff]
    %v2312 = vld [vmem:[#allocation2 + $0x4f0] sm:$0xff]
    %v2313 = vld [vmem:[#allocation2 + $0x4f8] sm:$0xff]
    %v2314 = vld [vmem:[#allocation2 + $0x500] sm:$0xff]
    %v2315 = vld [vmem:[#allocation2 + $0x508] sm:$0xff]
    %v2316 = vld [vmem:[#allocation2 + $0x510] sm:$0xff]
    %v2317 = vld [vmem:[#allocation2 + $0x518] sm:$0xff]
    %v2318 = vld [vmem:[#allocation2 + $0x520] sm:$0xff]
    %v2319 = vld [vmem:[#allocation2 + $0x528] sm:$0xff]
    %v2320 = vld [vmem:[#allocation2 + $0x530] sm:$0xff]
    %v2321 = vld [vmem:[#allocation2 + $0x538] sm:$0xff]
    %v2322 = vld [vmem:[#allocation2 + $0x540] sm:$0xff]
    %v2323 = vld [vmem:[#allocation2 + $0x548] sm:$0xff]
    %v2324 = vld [vmem:[#allocation2 + $0x550] sm:$0xff]
    %v2325 = vld [vmem:[#allocation2 + $0x558] sm:$0xff]
    %v2326 = vld [vmem:[#allocation2 + $0x560] sm:$0xff]
    %v2327 = vld [vmem:[#allocation2 + $0x568] sm:$0xff]
    %v2328 = vld [vmem:[#allocation2 + $0x570] sm:$0xff]
    %v2329 = vld [vmem:[#allocation2 + $0x578] sm:$0xff]
    %v2330 = vld [vmem:[#allocation2 + $0x580] sm:$0xff]
    %v2331 = vld [vmem:[#allocation2 + $0x588] sm:$0xff]
    %v2332 = vld [vmem:[#allocation2 + $0x590] sm:$0xff]
    %v2333 = vld [vmem:[#allocation2 + $0x598] sm:$0xff]
    %v2334 = vld [vmem:[#allocation2 + $0x5a0] sm:$0xff]
    %v2335 = vld [vmem:[#allocation2 + $0x5a8] sm:$0xff]
    %v2336 = vld [vmem:[#allocation2 + $0x5b0] sm:$0xff]
    %v2337 = vld [vmem:[#allocation2 + $0x5b8] sm:$0xff]
    %v2338 = vld [vmem:[#allocation2 + $0x5c0] sm:$0xff]
    %v2339 = vld [vmem:[#allocation2 + $0x5c8] sm:$0xff]
    %v2340 = vld [vmem:[#allocation2 + $0x5d0] sm:$0xff]
    %v2341 = vld [vmem:[#allocation2 + $0x5d8] sm:$0xff]
    %v2342 = vld [vmem:[#allocation2 + $0x5e0] sm:$0xff]
    %v2343 = vld [vmem:[#allocation2 + $0x5e8] sm:$0xff]
    %v2344 = vld [vmem:[#allocation2 + $0x5f0] sm:$0xff]
    %v2345 = vld [vmem:[#allocation2 + $0x5f8] sm:$0xff]
    %v2346 = vld [vmem:[#allocation2 + $0x600] sm:$0xff]
    %v2347 = vld [vmem:[#allocation2 + $0x608] sm:$0xff]
    %v2348 = vld [vmem:[#allocation2 + $0x610] sm:$0xff]
    %v2349 = vld [vmem:[#allocation2 + $0x618] sm:$0xff]
    %v2350 = vld [vmem:[#allocation2 + $0x620] sm:$0xff]
    %v2351 = vld [vmem:[#allocation2 + $0x628] sm:$0xff]
    %v2352 = vld [vmem:[#allocation2 + $0x630] sm:$0xff]
    %v2353 = vld [vmem:[#allocation2 + $0x638] sm:$0xff]
    %v2354 = vld [vmem:[#allocation2 + $0x640] sm:$0xff]
    %v2355 = vld [vmem:[#allocation2 + $0x648] sm:$0xff]
    %v2356 = vld [vmem:[#allocation2 + $0x650] sm:$0xff]
    %v2357 = vld [vmem:[#allocation2 + $0x658] sm:$0xff]
    %v2358 = vld [vmem:[#allocation2 + $0x660] sm:$0xff]
    %v2359 = vld [vmem:[#allocation2 + $0x668] sm:$0xff]
    %v2360 = vld [vmem:[#allocation2 + $0x670] sm:$0xff]
    %v2361 = vld [vmem:[#allocation2 + $0x678] sm:$0xff]
    %v2362 = vld [vmem:[#allocation2 + $0x680] sm:$0xff]
    %v2363 = vld [vmem:[#allocation2 + $0x688] sm:$0xff]
    %v2364 = vld [vmem:[#allocation2 + $0x690] sm:$0xff]
    %v2365 = vld [vmem:[#allocation2 + $0x698] sm:$0xff]
    %v2366 = vld [vmem:[#allocation2 + $0x6a0] sm:$0xff]
    %v2367 = vld [vmem:[#allocation2 + $0x6a8] sm:$0xff]
    %v2368 = vld [vmem:[#allocation2 + $0x6b0] sm:$0xff]
    %v2369 = vld [vmem:[#allocation2 + $0x6b8] sm:$0xff]
    %v2370 = vld [vmem:[#allocation2 + $0x6c0] sm:$0xff]
    %v2371 = vld [vmem:[#allocation2 + $0x6c8] sm:$0xff]
    %v2372 = vld [vmem:[#allocation2 + $0x6d0] sm:$0xff]
    %v2373 = vld [vmem:[#allocation2 + $0x6d8] sm:$0xff]
    %v2374 = vld [vmem:[#allocation2 + $0x6e0] sm:$0xff]
    %v2375 = vld [vmem:[#allocation2 + $0x6e8] sm:$0xff]
    %v2376 = vld [vmem:[#allocation2 + $0x6f0] sm:$0xff]
    %v2377 = vld [vmem:[#allocation2 + $0x6f8] sm:$0xff]
    %v2378 = vld [vmem:[#allocation2 + $0x700] sm:$0xff]
    %v2379 = vld [vmem:[#allocation2 + $0x708] sm:$0xff]
    %v2380 = vld [vmem:[#allocation2 + $0x710] sm:$0xff]
    %v2381 = vld [vmem:[#allocation2 + $0x718] sm:$0xff]
    %v2382 = vld [vmem:[#allocation2 + $0x720] sm:$0xff]
    %v2383 = vld [vmem:[#allocation2 + $0x728] sm:$0xff]
    %v2384 = vld [vmem:[#allocation2 + $0x730] sm:$0xff]
    %v2385 = vld [vmem:[#allocation2 + $0x738] sm:$0xff]
    %v2386 = vld [vmem:[#allocation2 + $0x740] sm:$0xff]
    %v2387 = vld [vmem:[#allocation2 + $0x748] sm:$0xff]
    %v2388 = vld [vmem:[#allocation2 + $0x750] sm:$0xff]
    %v2389 = vld [vmem:[#allocation2 + $0x758] sm:$0xff]
    %v2390 = vld [vmem:[#allocation2 + $0x760] sm:$0xff]
    %v2391 = vld [vmem:[#allocation2 + $0x768] sm:$0xff]
    %v2392 = vld [vmem:[#allocation2 + $0x770] sm:$0xff]
    %v2393 = vld [vmem:[#allocation2 + $0x778] sm:$0xff]
    %v2394 = vld [vmem:[#allocation2 + $0x780] sm:$0xff]
    %v2395 = vld [vmem:[#allocation2 + $0x788] sm:$0xff]
    %v2396 = vld [vmem:[#allocation2 + $0x790] sm:$0xff]
    %v2397 = vld [vmem:[#allocation2 + $0x798] sm:$0xff]
    %v2398 = vld [vmem:[#allocation2 + $0x7a0] sm:$0xff]
    %v2399 = vld [vmem:[#allocation2 + $0x7a8] sm:$0xff]
    %v2400 = vld [vmem:[#allocation2 + $0x7b0] sm:$0xff]
    %v2401 = vld [vmem:[#allocation2 + $0x7b8] sm:$0xff]
    %v2402 = vld [vmem:[#allocation2 + $0x7c0] sm:$0xff]
    %v2403 = vld [vmem:[#allocation2 + $0x7c8] sm:$0xff]
    %v2404 = vld [vmem:[#allocation2 + $0x7d0] sm:$0xff]
    %v2405 = vld [vmem:[#allocation2 + $0x7d8] sm:$0xff]
    %v2406 = vld [vmem:[#allocation2 + $0x7e0] sm:$0xff]
    %v2407 = vld [vmem:[#allocation2 + $0x7e8] sm:$0xff]
    %v2408 = vld [vmem:[#allocation2 + $0x7f0] sm:$0xff]
    %v2409 = vld [vmem:[#allocation2 + $0x7f8] sm:$0xff]
    %v2410 = vld [vmem:[#allocation2 + $0x800] sm:$0xff]
    %v2411 = vld [vmem:[#allocation2 + $0x808] sm:$0xff]
    %v2412 = vld [vmem:[#allocation2 + $0x810] sm:$0xff]
    %v2413 = vld [vmem:[#allocation2 + $0x818] sm:$0xff]
    %v2414 = vld [vmem:[#allocation2 + $0x820] sm:$0xff]
    %v2415 = vld [vmem:[#allocation2 + $0x828] sm:$0xff]
    %v2416 = vld [vmem:[#allocation2 + $0x830] sm:$0xff]
    %v2417 = vld [vmem:[#allocation2 + $0x838] sm:$0xff]
    %v2418 = vld [vmem:[#allocation2 + $0x840] sm:$0xff]
    %v2419 = vld [vmem:[#allocation2 + $0x848] sm:$0xff]
    %v2420 = vld [vmem:[#allocation2 + $0x850] sm:$0xff]
    %v2421 = vld [vmem:[#allocation2 + $0x858] sm:$0xff]
    %v2422 = vld [vmem:[#allocation2 + $0x860] sm:$0xff]
    %v2423 = vld [vmem:[#allocation2 + $0x868] sm:$0xff]
    %v2424 = vld [vmem:[#allocation2 + $0x870] sm:$0xff]
    %v2425 = vld [vmem:[#allocation2 + $0x878] sm:$0xff]
    %v2426 = vld [vmem:[#allocation2 + $0x880] sm:$0xff]
    %v2427 = vld [vmem:[#allocation2 + $0x888] sm:$0xff]
    %v2428 = vld [vmem:[#allocation2 + $0x890] sm:$0xff]
    %v2429 = vld [vmem:[#allocation2 + $0x898] sm:$0xff]
    %v2430 = vld [vmem:[#allocation2 + $0x8a0] sm:$0xff]
    %v2431 = vld [vmem:[#allocation2 + $0x8a8] sm:$0xff]
    %v2432 = vld [vmem:[#allocation2 + $0x8b0] sm:$0xff]
    %v2433 = vld [vmem:[#allocation2 + $0x8b8] sm:$0xff]
    %v2434 = vld [vmem:[#allocation2 + $0x8c0] sm:$0xff]
    %v2435 = vld [vmem:[#allocation2 + $0x8c8] sm:$0xff]
    %v2436 = vld [vmem:[#allocation2 + $0x8d0] sm:$0xff]
    %v2437 = vld [vmem:[#allocation2 + $0x8d8] sm:$0xff]
    %v2438 = vld [vmem:[#allocation2 + $0x8e0] sm:$0xff]
    %v2439 = vld [vmem:[#allocation2 + $0x8e8] sm:$0xff]
    %v2440 = vld [vmem:[#allocation2 + $0x8f0] sm:$0xff]
    %v2441 = vld [vmem:[#allocation2 + $0x8f8] sm:$0xff]
    %v2442 = vld [vmem:[#allocation2 + $0x900] sm:$0xff]
    %v2443 = vld [vmem:[#allocation2 + $0x908] sm:$0xff]
    %v2444 = vld [vmem:[#allocation2 + $0x910] sm:$0xff]
    %v2445 = vld [vmem:[#allocation2 + $0x918] sm:$0xff]
    %v2446 = vld [vmem:[#allocation2 + $0x920] sm:$0xff]
    %v2447 = vld [vmem:[#allocation2 + $0x928] sm:$0xff]
    %v2448 = vld [vmem:[#allocation2 + $0x930] sm:$0xff]
    %v2449 = vld [vmem:[#allocation2 + $0x938] sm:$0xff]
    %v2450 = vld [vmem:[#allocation2 + $0x940] sm:$0xff]
    %v2451 = vld [vmem:[#allocation2 + $0x948] sm:$0xff]
    %v2452 = vld [vmem:[#allocation2 + $0x950] sm:$0xff]
    %v2453 = vld [vmem:[#allocation2 + $0x958] sm:$0xff]
    %v2454 = vld [vmem:[#allocation2 + $0x960] sm:$0xff]
    %v2455 = vld [vmem:[#allocation2 + $0x968] sm:$0xff]
    %v2456 = vld [vmem:[#allocation2 + $0x970] sm:$0xff]
    %v2457 = vld [vmem:[#allocation2 + $0x978] sm:$0xff]
    %v2458 = vld [vmem:[#allocation2 + $0x980] sm:$0xff]
    %v2459 = vld [vmem:[#allocation2 + $0x988] sm:$0xff]
    %v2460 = vld [vmem:[#allocation2 + $0x990] sm:$0xff]
    %v2461 = vld [vmem:[#allocation2 + $0x998] sm:$0xff]
    %v2462 = vld [vmem:[#allocation2 + $0x9a0] sm:$0xff]
    %v2463 = vld [vmem:[#allocation2 + $0x9a8] sm:$0xff]
    %v2464 = vld [vmem:[#allocation2 + $0x9b0] sm:$0xff]
    %v2465 = vld [vmem:[#allocation2 + $0x9b8] sm:$0xff]
    %v2466 = vld [vmem:[#allocation2 + $0x9c0] sm:$0xff]
    %v2467 = vld [vmem:[#allocation2 + $0x9c8] sm:$0xff]
    %v2468 = vld [vmem:[#allocation2 + $0x9d0] sm:$0xff]
    %v2469 = vld [vmem:[#allocation2 + $0x9d8] sm:$0xff]
    %v2470 = vld [vmem:[#allocation2 + $0x9e0] sm:$0xff]
    %v2471 = vld [vmem:[#allocation2 + $0x9e8] sm:$0xff]
    %v2472 = vld [vmem:[#allocation2 + $0x9f0] sm:$0xff]
    %v2473 = vld [vmem:[#allocation2 + $0x9f8] sm:$0xff]
    %v2474 = vld [vmem:[#allocation5] sm:$0xf]
    %v2476 = vlaneseq
    %v2477 = vshrl.u32 %v2476, 7
    %v2478 = vsub.s32 0, %v2477
    %v2479 = vrot.slane %v2474, %v2478
    %v2480 = vlaneseq
    %v2481 = vshrl.u32 %v2480, 7
    %v2482 = vsub.s32 1, %v2481
    %v2483 = vrot.slane %v2474, %v2482
    %v2484 = vlaneseq
    %v2485 = vshrl.u32 %v2484, 7
    %v2486 = vsub.s32 2, %v2485
    %v2487 = vrot.slane %v2474, %v2486
    %v2488 = vlaneseq
    %v2489 = vshrl.u32 %v2488, 7
    %v2490 = vsub.s32 3, %v2489
    %v2491 = vrot.slane %v2474, %v2490
    %v2656 = vunpack.c.l.b16 %v1994
    %v2657 = vunpack.c.h.b16 %v1994
    %v2658 = vunpack.c.l.b16 %v1995
    %v2659 = vunpack.c.h.b16 %v1995
    %v2660 = vunpack.c.l.b16 %v1996
    %v2661 = vunpack.c.h.b16 %v1996
    %v2662 = vunpack.c.l.b16 %v1997
    %v2663 = vunpack.c.h.b16 %v1997
    %v2664 = vunpack.c.l.b16 %v1998
    %v2665 = vunpack.c.h.b16 %v1998
    %v2666 = vunpack.c.l.b16 %v1999
    %v2667 = vunpack.c.h.b16 %v1999
    %v2668 = vunpack.c.l.b16 %v2000
    %v2669 = vunpack.c.h.b16 %v2000
    %v2670 = vunpack.c.l.b16 %v2001
    %v2671 = vunpack.c.h.b16 %v2001
    %v2672 = vunpack.c.l.b16 %v2002
    %v2673 = vunpack.c.h.b16 %v2002
    %v2674 = vunpack.c.l.b16 %v2003
    %v2675 = vunpack.c.h.b16 %v2003
    %v2676 = vunpack.c.l.b16 %v2004
    %v2677 = vunpack.c.h.b16 %v2004
    %v2678 = vunpack.c.l.b16 %v2005
    %v2679 = vunpack.c.h.b16 %v2005
    %v2680 = vunpack.c.l.b16 %v2006
    %v2681 = vunpack.c.h.b16 %v2006
    %v2682 = vunpack.c.l.b16 %v2007
    %v2683 = vunpack.c.h.b16 %v2007
    %v2684 = vunpack.c.l.b16 %v2008
    %v2685 = vunpack.c.h.b16 %v2008
    %v2686 = vunpack.c.l.b16 %v2009
    %v2687 = vunpack.c.h.b16 %v2009
    %v2688 = vunpack.c.l.b16 %v2010
    %v2689 = vunpack.c.h.b16 %v2010
    %v2690 = vunpack.c.l.b16 %v2011
    %v2691 = vunpack.c.h.b16 %v2011
    %v2692 = vunpack.c.l.b16 %v2012
    %v2693 = vunpack.c.h.b16 %v2012
    %v2694 = vunpack.c.l.b16 %v2013
    %v2695 = vunpack.c.h.b16 %v2013
    %v2696 = vunpack.c.l.b16 %v2014
    %v2697 = vunpack.c.h.b16 %v2014
    %v2698 = vunpack.c.l.b16 %v2015
    %v2699 = vunpack.c.h.b16 %v2015
    %v2700 = vunpack.c.l.b16 %v2016
    %v2701 = vunpack.c.h.b16 %v2016
    %v2702 = vunpack.c.l.b16 %v2017
    %v2703 = vunpack.c.h.b16 %v2017
    %v2704 = vunpack.c.l.b16 %v2018
    %v2705 = vunpack.c.h.b16 %v2018
    %v2706 = vunpack.c.l.b16 %v2019
    %v2707 = vunpack.c.h.b16 %v2019
    %v2708 = vunpack.c.l.b16 %v2020
    %v2709 = vunpack.c.h.b16 %v2020
    %v2710 = vunpack.c.l.b16 %v2021
    %v2711 = vunpack.c.h.b16 %v2021
    %v2712 = vunpack.c.l.b16 %v2022
    %v2713 = vunpack.c.h.b16 %v2022
    %v2714 = vunpack.c.l.b16 %v2023
    %v2715 = vunpack.c.h.b16 %v2023
    %v2716 = vunpack.c.l.b16 %v2024
    %v2717 = vunpack.c.h.b16 %v2024
    %v2718 = vunpack.c.l.b16 %v2025
    %v2719 = vunpack.c.h.b16 %v2025
    %v2720 = vunpack.c.l.b16 %v2026
    %v2721 = vunpack.c.h.b16 %v2026
    %v2722 = vunpack.c.l.b16 %v2027
    %v2723 = vunpack.c.h.b16 %v2027
    %v2724 = vunpack.c.l.b16 %v2028
    %v2725 = vunpack.c.h.b16 %v2028
    %v2726 = vunpack.c.l.b16 %v2029
    %v2727 = vunpack.c.h.b16 %v2029
    %v2728 = vunpack.c.l.b16 %v2030
    %v2729 = vunpack.c.h.b16 %v2030
    %v2730 = vunpack.c.l.b16 %v2031
    %v2731 = vunpack.c.h.b16 %v2031
    %v2732 = vunpack.c.l.b16 %v2032
    %v2733 = vunpack.c.h.b16 %v2032
    %v2734 = vunpack.c.l.b16 %v2033
    %v2735 = vunpack.c.h.b16 %v2033
    %v2736 = vunpack.c.l.b16 %v2034
    %v2737 = vunpack.c.h.b16 %v2034
    %v2738 = vunpack.c.l.b16 %v2035
    %v2739 = vunpack.c.h.b16 %v2035
    %v2740 = vunpack.c.l.b16 %v2036
    %v2741 = vunpack.c.h.b16 %v2036
    %v2742 = vunpack.c.l.b16 %v2037
    %v2743 = vunpack.c.h.b16 %v2037
    %v2744 = vunpack.c.l.b16 %v2038
    %v2745 = vunpack.c.h.b16 %v2038
    %v2746 = vunpack.c.l.b16 %v2039
    %v2747 = vunpack.c.h.b16 %v2039
    %v2748 = vunpack.c.l.b16 %v2040
    %v2749 = vunpack.c.h.b16 %v2040
    %v2750 = vunpack.c.l.b16 %v2041
    %v2751 = vunpack.c.h.b16 %v2041
    %v2752 = vunpack.c.l.b16 %v2042
    %v2753 = vunpack.c.h.b16 %v2042
    %v2754 = vunpack.c.l.b16 %v2043
    %v2755 = vunpack.c.h.b16 %v2043
    %v2756 = vunpack.c.l.b16 %v2044
    %v2757 = vunpack.c.h.b16 %v2044
    %v2758 = vunpack.c.l.b16 %v2045
    %v2759 = vunpack.c.h.b16 %v2045
    %v2760 = vunpack.c.l.b16 %v2046
    %v2761 = vunpack.c.h.b16 %v2046
    %v2762 = vunpack.c.l.b16 %v2047
    %v2763 = vunpack.c.h.b16 %v2047
    %v2764 = vunpack.c.l.b16 %v2048
    %v2765 = vunpack.c.h.b16 %v2048
    %v2766 = vunpack.c.l.b16 %v2049
    %v2767 = vunpack.c.h.b16 %v2049
    %v2768 = vunpack.c.l.b16 %v2050
    %v2769 = vunpack.c.h.b16 %v2050
    %v2770 = vunpack.c.l.b16 %v2051
    %v2771 = vunpack.c.h.b16 %v2051
    %v2772 = vunpack.c.l.b16 %v2052
    %v2773 = vunpack.c.h.b16 %v2052
    %v2774 = vunpack.c.l.b16 %v2053
    %v2775 = vunpack.c.h.b16 %v2053
    %v2776 = vunpack.c.l.b16 %v2054
    %v2777 = vunpack.c.h.b16 %v2054
    %v2778 = vunpack.c.l.b16 %v2055
    %v2779 = vunpack.c.h.b16 %v2055
    %v2780 = vunpack.c.l.b16 %v2056
    %v2781 = vunpack.c.h.b16 %v2056
    %v2782 = vunpack.c.l.b16 %v2057
    %v2783 = vunpack.c.h.b16 %v2057
    %v2784 = vunpack.c.l.b16 %v2058
    %v2785 = vunpack.c.h.b16 %v2058
    %v2786 = vunpack.c.l.b16 %v2059
    %v2787 = vunpack.c.h.b16 %v2059
    %v2788 = vunpack.c.l.b16 %v2060
    %v2789 = vunpack.c.h.b16 %v2060
    %v2790 = vunpack.c.l.b16 %v2061
    %v2791 = vunpack.c.h.b16 %v2061
    %v2792 = vunpack.c.l.b16 %v2062
    %v2793 = vunpack.c.h.b16 %v2062
    %v2794 = vunpack.c.l.b16 %v2063
    %v2795 = vunpack.c.h.b16 %v2063
    %v2796 = vunpack.c.l.b16 %v2064
    %v2797 = vunpack.c.h.b16 %v2064
    %v2798 = vunpack.c.l.b16 %v2065
    %v2799 = vunpack.c.h.b16 %v2065
    %v2800 = vunpack.c.l.b16 %v2066
    %v2801 = vunpack.c.h.b16 %v2066
    %v2802 = vunpack.c.l.b16 %v2067
    %v2803 = vunpack.c.h.b16 %v2067
    %v2804 = vunpack.c.l.b16 %v2068
    %v2805 = vunpack.c.h.b16 %v2068
    %v2806 = vunpack.c.l.b16 %v2069
    %v2807 = vunpack.c.h.b16 %v2069
    %v2808 = vunpack.c.l.b16 %v2070
    %v2809 = vunpack.c.h.b16 %v2070
    %v2810 = vunpack.c.l.b16 %v2071
    %v2811 = vunpack.c.h.b16 %v2071
    %v2812 = vunpack.c.l.b16 %v2072
    %v2813 = vunpack.c.h.b16 %v2072
    %v2814 = vunpack.c.l.b16 %v2073
    %v2815 = vunpack.c.h.b16 %v2073
    %v2816 = vunpack.c.l.b16 %v2074
    %v2817 = vunpack.c.h.b16 %v2074
    %v2818 = vunpack.c.l.b16 %v2075
    %v2819 = vunpack.c.h.b16 %v2075
    %v2820 = vunpack.c.l.b16 %v2076
    %v2821 = vunpack.c.h.b16 %v2076
    %v2822 = vunpack.c.l.b16 %v2077
    %v2823 = vunpack.c.h.b16 %v2077
    %v2824 = vunpack.c.l.b16 %v2078
    %v2825 = vunpack.c.h.b16 %v2078
    %v2826 = vunpack.c.l.b16 %v2079
    %v2827 = vunpack.c.h.b16 %v2079
    %v2828 = vunpack.c.l.b16 %v2080
    %v2829 = vunpack.c.h.b16 %v2080
    %v2830 = vunpack.c.l.b16 %v2081
    %v2831 = vunpack.c.h.b16 %v2081
    %v2832 = vunpack.c.l.b16 %v2082
    %v2833 = vunpack.c.h.b16 %v2082
    %v2834 = vunpack.c.l.b16 %v2083
    %v2835 = vunpack.c.h.b16 %v2083
    %v2836 = vunpack.c.l.b16 %v2084
    %v2837 = vunpack.c.h.b16 %v2084
    %v2838 = vunpack.c.l.b16 %v2085
    %v2839 = vunpack.c.h.b16 %v2085
    %v2840 = vunpack.c.l.b16 %v2086
    %v2841 = vunpack.c.h.b16 %v2086
    %v2842 = vunpack.c.l.b16 %v2087
    %v2843 = vunpack.c.h.b16 %v2087
    %v2844 = vunpack.c.l.b16 %v2088
    %v2845 = vunpack.c.h.b16 %v2088
    %v2846 = vunpack.c.l.b16 %v2089
    %v2847 = vunpack.c.h.b16 %v2089
    %v2848 = vunpack.c.l.b16 %v2090
    %v2849 = vunpack.c.h.b16 %v2090
    %v2850 = vunpack.c.l.b16 %v2091
    %v2851 = vunpack.c.h.b16 %v2091
    %v2852 = vunpack.c.l.b16 %v2092
    %v2853 = vunpack.c.h.b16 %v2092
    %v2854 = vunpack.c.l.b16 %v2093
    %v2855 = vunpack.c.h.b16 %v2093
    %v2856 = vunpack.c.l.b16 %v2094
    %v2857 = vunpack.c.h.b16 %v2094
    %v2858 = vunpack.c.l.b16 %v2095
    %v2859 = vunpack.c.h.b16 %v2095
    %v2860 = vunpack.c.l.b16 %v2096
    %v2861 = vunpack.c.h.b16 %v2096
    %v2862 = vunpack.c.l.b16 %v2097
    %v2863 = vunpack.c.h.b16 %v2097
    %v2864 = vunpack.c.l.b16 %v2098
    %v2865 = vunpack.c.h.b16 %v2098
    %v2866 = vunpack.c.l.b16 %v2099
    %v2867 = vunpack.c.h.b16 %v2099
    %v2868 = vunpack.c.l.b16 %v2100
    %v2869 = vunpack.c.h.b16 %v2100
    %v2870 = vunpack.c.l.b16 %v2101
    %v2871 = vunpack.c.h.b16 %v2101
    %v2872 = vunpack.c.l.b16 %v2102
    %v2873 = vunpack.c.h.b16 %v2102
    %v2874 = vunpack.c.l.b16 %v2103
    %v2875 = vunpack.c.h.b16 %v2103
    %v2876 = vunpack.c.l.b16 %v2104
    %v2877 = vunpack.c.h.b16 %v2104
    %v2878 = vunpack.c.l.b16 %v2105
    %v2879 = vunpack.c.h.b16 %v2105
    %v2880 = vunpack.c.l.b16 %v2106
    %v2881 = vunpack.c.h.b16 %v2106
    %v2882 = vunpack.c.l.b16 %v2107
    %v2883 = vunpack.c.h.b16 %v2107
    %v2884 = vunpack.c.l.b16 %v2108
    %v2885 = vunpack.c.h.b16 %v2108
    %v2886 = vunpack.c.l.b16 %v2109
    %v2887 = vunpack.c.h.b16 %v2109
    %v2888 = vunpack.c.l.b16 %v2110
    %v2889 = vunpack.c.h.b16 %v2110
    %v2890 = vunpack.c.l.b16 %v2111
    %v2891 = vunpack.c.h.b16 %v2111
    %v2892 = vunpack.c.l.b16 %v2112
    %v2893 = vunpack.c.h.b16 %v2112
    %v2894 = vunpack.c.l.b16 %v2113
    %v2895 = vunpack.c.h.b16 %v2113
    %v2896 = vunpack.c.l.b16 %v2114
    %v2897 = vunpack.c.h.b16 %v2114
    %v2898 = vunpack.c.l.b16 %v2115
    %v2899 = vunpack.c.h.b16 %v2115
    %v2900 = vunpack.c.l.b16 %v2116
    %v2901 = vunpack.c.h.b16 %v2116
    %v2902 = vunpack.c.l.b16 %v2117
    %v2903 = vunpack.c.h.b16 %v2117
    %v2904 = vunpack.c.l.b16 %v2118
    %v2905 = vunpack.c.h.b16 %v2118
    %v2906 = vunpack.c.l.b16 %v2119
    %v2907 = vunpack.c.h.b16 %v2119
    %v2908 = vunpack.c.l.b16 %v2120
    %v2909 = vunpack.c.h.b16 %v2120
    %v2910 = vunpack.c.l.b16 %v2121
    %v2911 = vunpack.c.h.b16 %v2121
    %v2912 = vunpack.c.l.b16 %v2122
    %v2913 = vunpack.c.h.b16 %v2122
    %v2914 = vunpack.c.l.b16 %v2123
    %v2915 = vunpack.c.h.b16 %v2123
    %v2916 = vunpack.c.l.b16 %v2124
    %v2917 = vunpack.c.h.b16 %v2124
    %v2918 = vunpack.c.l.b16 %v2125
    %v2919 = vunpack.c.h.b16 %v2125
    %v2920 = vunpack.c.l.b16 %v2126
    %v2921 = vunpack.c.h.b16 %v2126
    %v2922 = vunpack.c.l.b16 %v2127
    %v2923 = vunpack.c.h.b16 %v2127
    %v2924 = vunpack.c.l.b16 %v2128
    %v2925 = vunpack.c.h.b16 %v2128
    %v2926 = vunpack.c.l.b16 %v2129
    %v2927 = vunpack.c.h.b16 %v2129
    %v2928 = vunpack.c.l.b16 %v2130
    %v2929 = vunpack.c.h.b16 %v2130
    %v2930 = vunpack.c.l.b16 %v2131
    %v2931 = vunpack.c.h.b16 %v2131
    %v2932 = vunpack.c.l.b16 %v2132
    %v2933 = vunpack.c.h.b16 %v2132
    %v2934 = vunpack.c.l.b16 %v2133
    %v2935 = vunpack.c.h.b16 %v2133
    %v2936 = vunpack.c.l.b16 %v2134
    %v2937 = vunpack.c.h.b16 %v2134
    %v2938 = vunpack.c.l.b16 %v2135
    %v2939 = vunpack.c.h.b16 %v2135
    %v2940 = vunpack.c.l.b16 %v2136
    %v2941 = vunpack.c.h.b16 %v2136
    %v2942 = vunpack.c.l.b16 %v2137
    %v2943 = vunpack.c.h.b16 %v2137
    %v2944 = vunpack.c.l.b16 %v2138
    %v2945 = vunpack.c.h.b16 %v2138
    %v2946 = vunpack.c.l.b16 %v2139
    %v2947 = vunpack.c.h.b16 %v2139
    %v2948 = vunpack.c.l.b16 %v2140
    %v2949 = vunpack.c.h.b16 %v2140
    %v2950 = vunpack.c.l.b16 %v2141
    %v2951 = vunpack.c.h.b16 %v2141
    %v2952 = vunpack.c.l.b16 %v2142
    %v2953 = vunpack.c.h.b16 %v2142
    %v2954 = vunpack.c.l.b16 %v2143
    %v2955 = vunpack.c.h.b16 %v2143
    %v2956 = vunpack.c.l.b16 %v2144
    %v2957 = vunpack.c.h.b16 %v2144
    %v2958 = vunpack.c.l.b16 %v2145
    %v2959 = vunpack.c.h.b16 %v2145
    %v2960 = vunpack.c.l.b16 %v2146
    %v2961 = vunpack.c.h.b16 %v2146
    %v2962 = vunpack.c.l.b16 %v2147
    %v2963 = vunpack.c.h.b16 %v2147
    %v2964 = vunpack.c.l.b16 %v2148
    %v2965 = vunpack.c.h.b16 %v2148
    %v2966 = vunpack.c.l.b16 %v2149
    %v2967 = vunpack.c.h.b16 %v2149
    %v2968 = vunpack.c.l.b16 %v2150
    %v2969 = vunpack.c.h.b16 %v2150
    %v2970 = vunpack.c.l.b16 %v2151
    %v2971 = vunpack.c.h.b16 %v2151
    %v2972 = vunpack.c.l.b16 %v2152
    %v2973 = vunpack.c.h.b16 %v2152
    %v2974 = vunpack.c.l.b16 %v2153
    %v2975 = vunpack.c.h.b16 %v2153
    %v2976 = vlaneseq
    %v2977 = vand.u32 %v2976, 127
    %v2978 = vlaneseq
    %v2979 = vshrl.u32 %v2978, 7
    %v2980 = vsub.s32 %v2977, %v2979
    %v2981 = vrot.slane %v2656, %v2980
    %v2982 = vadd.s32 %v2977, 4294967288
    %v2983 = vlaneseq
    %v2984 = vshrl.u32 %v2983, 7
    %v2985 = vsub.s32 %v2982, %v2984
    %v2986 = vrot.slane %v2657, %v2985
    %vm2987 = vcmask 130112
    %v2988 = vsel %vm2987, %v2986, %v2981
    %v2989 = vadd.s32 %v2977, 4294967280
    %v2990 = vlaneseq
    %v2991 = vshrl.u32 %v2990, 7
    %v2992 = vsub.s32 %v2989, %v2991
    %v2993 = vrot.slane %v2658, %v2992
    %vm2994 = vcmask 195712
    %v2995 = vsel %vm2994, %v2993, %v2988
    %v2996 = vadd.s32 %v2977, 4294967272
    %v2997 = vlaneseq
    %v2998 = vshrl.u32 %v2997, 7
    %v2999 = vsub.s32 %v2996, %v2998
    %v3000 = vrot.slane %v2659, %v2999
    %vm3001 = vcmask 261312
    %v3002 = vsel %vm3001, %v3000, %v2995
    %v3003 = vadd.s32 %v2977, 4294967264
    %v3004 = vlaneseq
    %v3005 = vshrl.u32 %v3004, 7
    %v3006 = vsub.s32 %v3003, %v3005
    %v3007 = vrot.slane %v2660, %v3006
    %vm3008 = vcmask 326912
    %v3009 = vsel %vm3008, %v3007, %v3002
    %v3010 = vadd.s32 %v2977, 4294967256
    %v3011 = vlaneseq
    %v3012 = vshrl.u32 %v3011, 7
    %v3013 = vsub.s32 %v3010, %v3012
    %v3014 = vrot.slane %v2661, %v3013
    %vm3015 = vcmask 392512
    %v3016 = vsel %vm3015, %v3014, %v3009
    %v3017 = vadd.s32 %v2977, 4294967248
    %v3018 = vlaneseq
    %v3019 = vshrl.u32 %v3018, 7
    %v3020 = vsub.s32 %v3017, %v3019
    %v3021 = vrot.slane %v2662, %v3020
    %vm3022 = vcmask 458112
    %v3023 = vsel %vm3022, %v3021, %v3016
    %v3024 = vadd.s32 %v2977, 4294967240
    %v3025 = vlaneseq
    %v3026 = vshrl.u32 %v3025, 7
    %v3027 = vsub.s32 %v3024, %v3026
    %v3028 = vrot.slane %v2663, %v3027
    %vm3029 = vcmask 523712
    %v3030 = vsel %vm3029, %v3028, %v3023
    %v3031 = vadd.s32 %v2977, 4294967232
    %v3032 = vlaneseq
    %v3033 = vshrl.u32 %v3032, 7
    %v3034 = vsub.s32 %v3031, %v3033
    %v3035 = vrot.slane %v2664, %v3034
    %vm3036 = vcmask 589312
    %v3037 = vsel %vm3036, %v3035, %v3030
    %v3038 = vadd.s32 %v2977, 4294967224
    %v3039 = vlaneseq
    %v3040 = vshrl.u32 %v3039, 7
    %v3041 = vsub.s32 %v3038, %v3040
    %v3042 = vrot.slane %v2665, %v3041
    %vm3043 = vcmask 654912
    %v3044 = vsel %vm3043, %v3042, %v3037
    %v3045 = vadd.s32 %v2977, 4294967216
    %v3046 = vlaneseq
    %v3047 = vshrl.u32 %v3046, 7
    %v3048 = vsub.s32 %v3045, %v3047
    %v3049 = vrot.slane %v2666, %v3048
    %vm3050 = vcmask 720512
    %v3051 = vsel %vm3050, %v3049, %v3044
    %v3052 = vadd.s32 %v2977, 4294967208
    %v3053 = vlaneseq
    %v3054 = vshrl.u32 %v3053, 7
    %v3055 = vsub.s32 %v3052, %v3054
    %v3056 = vrot.slane %v2667, %v3055
    %vm3057 = vcmask 786112
    %v3058 = vsel %vm3057, %v3056, %v3051
    %v3059 = vadd.s32 %v2977, 4294967200
    %v3060 = vlaneseq
    %v3061 = vshrl.u32 %v3060, 7
    %v3062 = vsub.s32 %v3059, %v3061
    %v3063 = vrot.slane %v2668, %v3062
    %vm3064 = vcmask 851712
    %v3065 = vsel %vm3064, %v3063, %v3058
    %v3066 = vadd.s32 %v2977, 4294967192
    %v3067 = vlaneseq
    %v3068 = vshrl.u32 %v3067, 7
    %v3069 = vsub.s32 %v3066, %v3068
    %v3070 = vrot.slane %v2669, %v3069
    %vm3071 = vcmask 917312
    %v3072 = vsel %vm3071, %v3070, %v3065
    %v3073 = vadd.s32 %v2977, 4294967184
    %v3074 = vlaneseq
    %v3075 = vshrl.u32 %v3074, 7
    %v3076 = vsub.s32 %v3073, %v3075
    %v3077 = vrot.slane %v2670, %v3076
    %vm3078 = vcmask 982912
    %v3079 = vsel %vm3078, %v3077, %v3072
    %v3080 = vadd.s32 %v2977, 4294967176
    %v3081 = vlaneseq
    %v3082 = vshrl.u32 %v3081, 7
    %v3083 = vsub.s32 %v3080, %v3082
    %v3084 = vrot.slane %v2671, %v3083
    %vm3085 = vcmask 1048512
    %v3086 = vsel %vm3085, %v3084, %v3079
    %v3087 = vlaneseq
    %v3088 = vshrl.u32 %v3087, 7
    %v3089 = vsub.s32 %v2977, %v3088
    %v3090 = vrot.slane %v2672, %v3089
    %v3091 = vlaneseq
    %v3092 = vshrl.u32 %v3091, 7
    %v3093 = vsub.s32 %v2982, %v3092
    %v3094 = vrot.slane %v2673, %v3093
    %v3095 = vsel %vm2987, %v3094, %v3090
    %v3096 = vlaneseq
    %v3097 = vshrl.u32 %v3096, 7
    %v3098 = vsub.s32 %v2989, %v3097
    %v3099 = vrot.slane %v2674, %v3098
    %v3100 = vsel %vm2994, %v3099, %v3095
    %v3101 = vlaneseq
    %v3102 = vshrl.u32 %v3101, 7
    %v3103 = vsub.s32 %v2996, %v3102
    %v3104 = vrot.slane %v2675, %v3103
    %v3105 = vsel %vm3001, %v3104, %v3100
    %v3106 = vlaneseq
    %v3107 = vshrl.u32 %v3106, 7
    %v3108 = vsub.s32 %v3003, %v3107
    %v3109 = vrot.slane %v2676, %v3108
    %v3110 = vsel %vm3008, %v3109, %v3105
    %v3111 = vlaneseq
    %v3112 = vshrl.u32 %v3111, 7
    %v3113 = vsub.s32 %v3010, %v3112
    %v3114 = vrot.slane %v2677, %v3113
    %v3115 = vsel %vm3015, %v3114, %v3110
    %v3116 = vlaneseq
    %v3117 = vshrl.u32 %v3116, 7
    %v3118 = vsub.s32 %v3017, %v3117
    %v3119 = vrot.slane %v2678, %v3118
    %v3120 = vsel %vm3022, %v3119, %v3115
    %v3121 = vlaneseq
    %v3122 = vshrl.u32 %v3121, 7
    %v3123 = vsub.s32 %v3024, %v3122
    %v3124 = vrot.slane %v2679, %v3123
    %v3125 = vsel %vm3029, %v3124, %v3120
    %v3126 = vlaneseq
    %v3127 = vshrl.u32 %v3126, 7
    %v3128 = vsub.s32 %v3031, %v3127
    %v3129 = vrot.slane %v2680, %v3128
    %v3130 = vsel %vm3036, %v3129, %v3125
    %v3131 = vlaneseq
    %v3132 = vshrl.u32 %v3131, 7
    %v3133 = vsub.s32 %v3038, %v3132
    %v3134 = vrot.slane %v2681, %v3133
    %v3135 = vsel %vm3043, %v3134, %v3130
    %v3136 = vlaneseq
    %v3137 = vshrl.u32 %v3136, 7
    %v3138 = vsub.s32 %v3045, %v3137
    %v3139 = vrot.slane %v2682, %v3138
    %v3140 = vsel %vm3050, %v3139, %v3135
    %v3141 = vlaneseq
    %v3142 = vshrl.u32 %v3141, 7
    %v3143 = vsub.s32 %v3052, %v3142
    %v3144 = vrot.slane %v2683, %v3143
    %v3145 = vsel %vm3057, %v3144, %v3140
    %v3146 = vlaneseq
    %v3147 = vshrl.u32 %v3146, 7
    %v3148 = vsub.s32 %v3059, %v3147
    %v3149 = vrot.slane %v2684, %v3148
    %v3150 = vsel %vm3064, %v3149, %v3145
    %v3151 = vlaneseq
    %v3152 = vshrl.u32 %v3151, 7
    %v3153 = vsub.s32 %v3066, %v3152
    %v3154 = vrot.slane %v2685, %v3153
    %v3155 = vsel %vm3071, %v3154, %v3150
    %v3156 = vlaneseq
    %v3157 = vshrl.u32 %v3156, 7
    %v3158 = vsub.s32 %v3073, %v3157
    %v3159 = vrot.slane %v2686, %v3158
    %v3160 = vsel %vm3078, %v3159, %v3155
    %v3161 = vlaneseq
    %v3162 = vshrl.u32 %v3161, 7
    %v3163 = vsub.s32 %v3080, %v3162
    %v3164 = vrot.slane %v2687, %v3163
    %v3165 = vsel %vm3085, %v3164, %v3160
    %v3166 = vlaneseq
    %v3167 = vshrl.u32 %v3166, 7
    %v3168 = vsub.s32 %v2977, %v3167
    %v3169 = vrot.slane %v2688, %v3168
    %v3170 = vlaneseq
    %v3171 = vshrl.u32 %v3170, 7
    %v3172 = vsub.s32 %v2982, %v3171
    %v3173 = vrot.slane %v2689, %v3172
    %v3174 = vsel %vm2987, %v3173, %v3169
    %v3175 = vlaneseq
    %v3176 = vshrl.u32 %v3175, 7
    %v3177 = vsub.s32 %v2989, %v3176
    %v3178 = vrot.slane %v2690, %v3177
    %v3179 = vsel %vm2994, %v3178, %v3174
    %v3180 = vlaneseq
    %v3181 = vshrl.u32 %v3180, 7
    %v3182 = vsub.s32 %v2996, %v3181
    %v3183 = vrot.slane %v2691, %v3182
    %v3184 = vsel %vm3001, %v3183, %v3179
    %v3185 = vlaneseq
    %v3186 = vshrl.u32 %v3185, 7
    %v3187 = vsub.s32 %v3003, %v3186
    %v3188 = vrot.slane %v2692, %v3187
    %v3189 = vsel %vm3008, %v3188, %v3184
    %v3190 = vlaneseq
    %v3191 = vshrl.u32 %v3190, 7
    %v3192 = vsub.s32 %v3010, %v3191
    %v3193 = vrot.slane %v2693, %v3192
    %v3194 = vsel %vm3015, %v3193, %v3189
    %v3195 = vlaneseq
    %v3196 = vshrl.u32 %v3195, 7
    %v3197 = vsub.s32 %v3017, %v3196
    %v3198 = vrot.slane %v2694, %v3197
    %v3199 = vsel %vm3022, %v3198, %v3194
    %v3200 = vlaneseq
    %v3201 = vshrl.u32 %v3200, 7
    %v3202 = vsub.s32 %v3024, %v3201
    %v3203 = vrot.slane %v2695, %v3202
    %v3204 = vsel %vm3029, %v3203, %v3199
    %v3205 = vlaneseq
    %v3206 = vshrl.u32 %v3205, 7
    %v3207 = vsub.s32 %v3031, %v3206
    %v3208 = vrot.slane %v2696, %v3207
    %v3209 = vsel %vm3036, %v3208, %v3204
    %v3210 = vlaneseq
    %v3211 = vshrl.u32 %v3210, 7
    %v3212 = vsub.s32 %v3038, %v3211
    %v3213 = vrot.slane %v2697, %v3212
    %v3214 = vsel %vm3043, %v3213, %v3209
    %v3215 = vlaneseq
    %v3216 = vshrl.u32 %v3215, 7
    %v3217 = vsub.s32 %v3045, %v3216
    %v3218 = vrot.slane %v2698, %v3217
    %v3219 = vsel %vm3050, %v3218, %v3214
    %v3220 = vlaneseq
    %v3221 = vshrl.u32 %v3220, 7
    %v3222 = vsub.s32 %v3052, %v3221
    %v3223 = vrot.slane %v2699, %v3222
    %v3224 = vsel %vm3057, %v3223, %v3219
    %v3225 = vlaneseq
    %v3226 = vshrl.u32 %v3225, 7
    %v3227 = vsub.s32 %v3059, %v3226
    %v3228 = vrot.slane %v2700, %v3227
    %v3229 = vsel %vm3064, %v3228, %v3224
    %v3230 = vlaneseq
    %v3231 = vshrl.u32 %v3230, 7
    %v3232 = vsub.s32 %v3066, %v3231
    %v3233 = vrot.slane %v2701, %v3232
    %v3234 = vsel %vm3071, %v3233, %v3229
    %v3235 = vlaneseq
    %v3236 = vshrl.u32 %v3235, 7
    %v3237 = vsub.s32 %v3073, %v3236
    %v3238 = vrot.slane %v2702, %v3237
    %v3239 = vsel %vm3078, %v3238, %v3234
    %v3240 = vlaneseq
    %v3241 = vshrl.u32 %v3240, 7
    %v3242 = vsub.s32 %v3080, %v3241
    %v3243 = vrot.slane %v2703, %v3242
    %v3244 = vsel %vm3085, %v3243, %v3239
    %v3245 = vlaneseq
    %v3246 = vshrl.u32 %v3245, 7
    %v3247 = vsub.s32 %v2977, %v3246
    %v3248 = vrot.slane %v2704, %v3247
    %v3249 = vlaneseq
    %v3250 = vshrl.u32 %v3249, 7
    %v3251 = vsub.s32 %v2982, %v3250
    %v3252 = vrot.slane %v2705, %v3251
    %v3253 = vsel %vm2987, %v3252, %v3248
    %v3254 = vlaneseq
    %v3255 = vshrl.u32 %v3254, 7
    %v3256 = vsub.s32 %v2989, %v3255
    %v3257 = vrot.slane %v2706, %v3256
    %v3258 = vsel %vm2994, %v3257, %v3253
    %v3259 = vlaneseq
    %v3260 = vshrl.u32 %v3259, 7
    %v3261 = vsub.s32 %v2996, %v3260
    %v3262 = vrot.slane %v2707, %v3261
    %v3263 = vsel %vm3001, %v3262, %v3258
    %v3264 = vlaneseq
    %v3265 = vshrl.u32 %v3264, 7
    %v3266 = vsub.s32 %v3003, %v3265
    %v3267 = vrot.slane %v2708, %v3266
    %v3268 = vsel %vm3008, %v3267, %v3263
    %v3269 = vlaneseq
    %v3270 = vshrl.u32 %v3269, 7
    %v3271 = vsub.s32 %v3010, %v3270
    %v3272 = vrot.slane %v2709, %v3271
    %v3273 = vsel %vm3015, %v3272, %v3268
    %v3274 = vlaneseq
    %v3275 = vshrl.u32 %v3274, 7
    %v3276 = vsub.s32 %v3017, %v3275
    %v3277 = vrot.slane %v2710, %v3276
    %v3278 = vsel %vm3022, %v3277, %v3273
    %v3279 = vlaneseq
    %v3280 = vshrl.u32 %v3279, 7
    %v3281 = vsub.s32 %v3024, %v3280
    %v3282 = vrot.slane %v2711, %v3281
    %v3283 = vsel %vm3029, %v3282, %v3278
    %v3284 = vlaneseq
    %v3285 = vshrl.u32 %v3284, 7
    %v3286 = vsub.s32 %v3031, %v3285
    %v3287 = vrot.slane %v2712, %v3286
    %v3288 = vsel %vm3036, %v3287, %v3283
    %v3289 = vlaneseq
    %v3290 = vshrl.u32 %v3289, 7
    %v3291 = vsub.s32 %v3038, %v3290
    %v3292 = vrot.slane %v2713, %v3291
    %v3293 = vsel %vm3043, %v3292, %v3288
    %v3294 = vlaneseq
    %v3295 = vshrl.u32 %v3294, 7
    %v3296 = vsub.s32 %v3045, %v3295
    %v3297 = vrot.slane %v2714, %v3296
    %v3298 = vsel %vm3050, %v3297, %v3293
    %v3299 = vlaneseq
    %v3300 = vshrl.u32 %v3299, 7
    %v3301 = vsub.s32 %v3052, %v3300
    %v3302 = vrot.slane %v2715, %v3301
    %v3303 = vsel %vm3057, %v3302, %v3298
    %v3304 = vlaneseq
    %v3305 = vshrl.u32 %v3304, 7
    %v3306 = vsub.s32 %v3059, %v3305
    %v3307 = vrot.slane %v2716, %v3306
    %v3308 = vsel %vm3064, %v3307, %v3303
    %v3309 = vlaneseq
    %v3310 = vshrl.u32 %v3309, 7
    %v3311 = vsub.s32 %v3066, %v3310
    %v3312 = vrot.slane %v2717, %v3311
    %v3313 = vsel %vm3071, %v3312, %v3308
    %v3314 = vlaneseq
    %v3315 = vshrl.u32 %v3314, 7
    %v3316 = vsub.s32 %v3073, %v3315
    %v3317 = vrot.slane %v2718, %v3316
    %v3318 = vsel %vm3078, %v3317, %v3313
    %v3319 = vlaneseq
    %v3320 = vshrl.u32 %v3319, 7
    %v3321 = vsub.s32 %v3080, %v3320
    %v3322 = vrot.slane %v2719, %v3321
    %v3323 = vsel %vm3085, %v3322, %v3318
    %v3324 = vlaneseq
    %v3325 = vshrl.u32 %v3324, 7
    %v3326 = vsub.s32 %v2977, %v3325
    %v3327 = vrot.slane %v2720, %v3326
    %v3328 = vlaneseq
    %v3329 = vshrl.u32 %v3328, 7
    %v3330 = vsub.s32 %v2982, %v3329
    %v3331 = vrot.slane %v2721, %v3330
    %v3332 = vsel %vm2987, %v3331, %v3327
    %v3333 = vlaneseq
    %v3334 = vshrl.u32 %v3333, 7
    %v3335 = vsub.s32 %v2989, %v3334
    %v3336 = vrot.slane %v2722, %v3335
    %v3337 = vsel %vm2994, %v3336, %v3332
    %v3338 = vlaneseq
    %v3339 = vshrl.u32 %v3338, 7
    %v3340 = vsub.s32 %v2996, %v3339
    %v3341 = vrot.slane %v2723, %v3340
    %v3342 = vsel %vm3001, %v3341, %v3337
    %v3343 = vlaneseq
    %v3344 = vshrl.u32 %v3343, 7
    %v3345 = vsub.s32 %v3003, %v3344
    %v3346 = vrot.slane %v2724, %v3345
    %v3347 = vsel %vm3008, %v3346, %v3342
    %v3348 = vlaneseq
    %v3349 = vshrl.u32 %v3348, 7
    %v3350 = vsub.s32 %v3010, %v3349
    %v3351 = vrot.slane %v2725, %v3350
    %v3352 = vsel %vm3015, %v3351, %v3347
    %v3353 = vlaneseq
    %v3354 = vshrl.u32 %v3353, 7
    %v3355 = vsub.s32 %v3017, %v3354
    %v3356 = vrot.slane %v2726, %v3355
    %v3357 = vsel %vm3022, %v3356, %v3352
    %v3358 = vlaneseq
    %v3359 = vshrl.u32 %v3358, 7
    %v3360 = vsub.s32 %v3024, %v3359
    %v3361 = vrot.slane %v2727, %v3360
    %v3362 = vsel %vm3029, %v3361, %v3357
    %v3363 = vlaneseq
    %v3364 = vshrl.u32 %v3363, 7
    %v3365 = vsub.s32 %v3031, %v3364
    %v3366 = vrot.slane %v2728, %v3365
    %v3367 = vsel %vm3036, %v3366, %v3362
    %v3368 = vlaneseq
    %v3369 = vshrl.u32 %v3368, 7
    %v3370 = vsub.s32 %v3038, %v3369
    %v3371 = vrot.slane %v2729, %v3370
    %v3372 = vsel %vm3043, %v3371, %v3367
    %v3373 = vlaneseq
    %v3374 = vshrl.u32 %v3373, 7
    %v3375 = vsub.s32 %v3045, %v3374
    %v3376 = vrot.slane %v2730, %v3375
    %v3377 = vsel %vm3050, %v3376, %v3372
    %v3378 = vlaneseq
    %v3379 = vshrl.u32 %v3378, 7
    %v3380 = vsub.s32 %v3052, %v3379
    %v3381 = vrot.slane %v2731, %v3380
    %v3382 = vsel %vm3057, %v3381, %v3377
    %v3383 = vlaneseq
    %v3384 = vshrl.u32 %v3383, 7
    %v3385 = vsub.s32 %v3059, %v3384
    %v3386 = vrot.slane %v2732, %v3385
    %v3387 = vsel %vm3064, %v3386, %v3382
    %v3388 = vlaneseq
    %v3389 = vshrl.u32 %v3388, 7
    %v3390 = vsub.s32 %v3066, %v3389
    %v3391 = vrot.slane %v2733, %v3390
    %v3392 = vsel %vm3071, %v3391, %v3387
    %v3393 = vlaneseq
    %v3394 = vshrl.u32 %v3393, 7
    %v3395 = vsub.s32 %v3073, %v3394
    %v3396 = vrot.slane %v2734, %v3395
    %v3397 = vsel %vm3078, %v3396, %v3392
    %v3398 = vlaneseq
    %v3399 = vshrl.u32 %v3398, 7
    %v3400 = vsub.s32 %v3080, %v3399
    %v3401 = vrot.slane %v2735, %v3400
    %v3402 = vsel %vm3085, %v3401, %v3397
    %v3403 = vlaneseq
    %v3404 = vshrl.u32 %v3403, 7
    %v3405 = vsub.s32 %v2977, %v3404
    %v3406 = vrot.slane %v2736, %v3405
    %v3407 = vlaneseq
    %v3408 = vshrl.u32 %v3407, 7
    %v3409 = vsub.s32 %v2982, %v3408
    %v3410 = vrot.slane %v2737, %v3409
    %v3411 = vsel %vm2987, %v3410, %v3406
    %v3412 = vlaneseq
    %v3413 = vshrl.u32 %v3412, 7
    %v3414 = vsub.s32 %v2989, %v3413
    %v3415 = vrot.slane %v2738, %v3414
    %v3416 = vsel %vm2994, %v3415, %v3411
    %v3417 = vlaneseq
    %v3418 = vshrl.u32 %v3417, 7
    %v3419 = vsub.s32 %v2996, %v3418
    %v3420 = vrot.slane %v2739, %v3419
    %v3421 = vsel %vm3001, %v3420, %v3416
    %v3422 = vlaneseq
    %v3423 = vshrl.u32 %v3422, 7
    %v3424 = vsub.s32 %v3003, %v3423
    %v3425 = vrot.slane %v2740, %v3424
    %v3426 = vsel %vm3008, %v3425, %v3421
    %v3427 = vlaneseq
    %v3428 = vshrl.u32 %v3427, 7
    %v3429 = vsub.s32 %v3010, %v3428
    %v3430 = vrot.slane %v2741, %v3429
    %v3431 = vsel %vm3015, %v3430, %v3426
    %v3432 = vlaneseq
    %v3433 = vshrl.u32 %v3432, 7
    %v3434 = vsub.s32 %v3017, %v3433
    %v3435 = vrot.slane %v2742, %v3434
    %v3436 = vsel %vm3022, %v3435, %v3431
    %v3437 = vlaneseq
    %v3438 = vshrl.u32 %v3437, 7
    %v3439 = vsub.s32 %v3024, %v3438
    %v3440 = vrot.slane %v2743, %v3439
    %v3441 = vsel %vm3029, %v3440, %v3436
    %v3442 = vlaneseq
    %v3443 = vshrl.u32 %v3442, 7
    %v3444 = vsub.s32 %v3031, %v3443
    %v3445 = vrot.slane %v2744, %v3444
    %v3446 = vsel %vm3036, %v3445, %v3441
    %v3447 = vlaneseq
    %v3448 = vshrl.u32 %v3447, 7
    %v3449 = vsub.s32 %v3038, %v3448
    %v3450 = vrot.slane %v2745, %v3449
    %v3451 = vsel %vm3043, %v3450, %v3446
    %v3452 = vlaneseq
    %v3453 = vshrl.u32 %v3452, 7
    %v3454 = vsub.s32 %v3045, %v3453
    %v3455 = vrot.slane %v2746, %v3454
    %v3456 = vsel %vm3050, %v3455, %v3451
    %v3457 = vlaneseq
    %v3458 = vshrl.u32 %v3457, 7
    %v3459 = vsub.s32 %v3052, %v3458
    %v3460 = vrot.slane %v2747, %v3459
    %v3461 = vsel %vm3057, %v3460, %v3456
    %v3462 = vlaneseq
    %v3463 = vshrl.u32 %v3462, 7
    %v3464 = vsub.s32 %v3059, %v3463
    %v3465 = vrot.slane %v2748, %v3464
    %v3466 = vsel %vm3064, %v3465, %v3461
    %v3467 = vlaneseq
    %v3468 = vshrl.u32 %v3467, 7
    %v3469 = vsub.s32 %v3066, %v3468
    %v3470 = vrot.slane %v2749, %v3469
    %v3471 = vsel %vm3071, %v3470, %v3466
    %v3472 = vlaneseq
    %v3473 = vshrl.u32 %v3472, 7
    %v3474 = vsub.s32 %v3073, %v3473
    %v3475 = vrot.slane %v2750, %v3474
    %v3476 = vsel %vm3078, %v3475, %v3471
    %v3477 = vlaneseq
    %v3478 = vshrl.u32 %v3477, 7
    %v3479 = vsub.s32 %v3080, %v3478
    %v3480 = vrot.slane %v2751, %v3479
    %v3481 = vsel %vm3085, %v3480, %v3476
    %v3482 = vlaneseq
    %v3483 = vshrl.u32 %v3482, 7
    %v3484 = vsub.s32 %v2977, %v3483
    %v3485 = vrot.slane %v2752, %v3484
    %v3486 = vlaneseq
    %v3487 = vshrl.u32 %v3486, 7
    %v3488 = vsub.s32 %v2982, %v3487
    %v3489 = vrot.slane %v2753, %v3488
    %v3490 = vsel %vm2987, %v3489, %v3485
    %v3491 = vlaneseq
    %v3492 = vshrl.u32 %v3491, 7
    %v3493 = vsub.s32 %v2989, %v3492
    %v3494 = vrot.slane %v2754, %v3493
    %v3495 = vsel %vm2994, %v3494, %v3490
    %v3496 = vlaneseq
    %v3497 = vshrl.u32 %v3496, 7
    %v3498 = vsub.s32 %v2996, %v3497
    %v3499 = vrot.slane %v2755, %v3498
    %v3500 = vsel %vm3001, %v3499, %v3495
    %v3501 = vlaneseq
    %v3502 = vshrl.u32 %v3501, 7
    %v3503 = vsub.s32 %v3003, %v3502
    %v3504 = vrot.slane %v2756, %v3503
    %v3505 = vsel %vm3008, %v3504, %v3500
    %v3506 = vlaneseq
    %v3507 = vshrl.u32 %v3506, 7
    %v3508 = vsub.s32 %v3010, %v3507
    %v3509 = vrot.slane %v2757, %v3508
    %v3510 = vsel %vm3015, %v3509, %v3505
    %v3511 = vlaneseq
    %v3512 = vshrl.u32 %v3511, 7
    %v3513 = vsub.s32 %v3017, %v3512
    %v3514 = vrot.slane %v2758, %v3513
    %v3515 = vsel %vm3022, %v3514, %v3510
    %v3516 = vlaneseq
    %v3517 = vshrl.u32 %v3516, 7
    %v3518 = vsub.s32 %v3024, %v3517
    %v3519 = vrot.slane %v2759, %v3518
    %v3520 = vsel %vm3029, %v3519, %v3515
    %v3521 = vlaneseq
    %v3522 = vshrl.u32 %v3521, 7
    %v3523 = vsub.s32 %v3031, %v3522
    %v3524 = vrot.slane %v2760, %v3523
    %v3525 = vsel %vm3036, %v3524, %v3520
    %v3526 = vlaneseq
    %v3527 = vshrl.u32 %v3526, 7
    %v3528 = vsub.s32 %v3038, %v3527
    %v3529 = vrot.slane %v2761, %v3528
    %v3530 = vsel %vm3043, %v3529, %v3525
    %v3531 = vlaneseq
    %v3532 = vshrl.u32 %v3531, 7
    %v3533 = vsub.s32 %v3045, %v3532
    %v3534 = vrot.slane %v2762, %v3533
    %v3535 = vsel %vm3050, %v3534, %v3530
    %v3536 = vlaneseq
    %v3537 = vshrl.u32 %v3536, 7
    %v3538 = vsub.s32 %v3052, %v3537
    %v3539 = vrot.slane %v2763, %v3538
    %v3540 = vsel %vm3057, %v3539, %v3535
    %v3541 = vlaneseq
    %v3542 = vshrl.u32 %v3541, 7
    %v3543 = vsub.s32 %v3059, %v3542
    %v3544 = vrot.slane %v2764, %v3543
    %v3545 = vsel %vm3064, %v3544, %v3540
    %v3546 = vlaneseq
    %v3547 = vshrl.u32 %v3546, 7
    %v3548 = vsub.s32 %v3066, %v3547
    %v3549 = vrot.slane %v2765, %v3548
    %v3550 = vsel %vm3071, %v3549, %v3545
    %v3551 = vlaneseq
    %v3552 = vshrl.u32 %v3551, 7
    %v3553 = vsub.s32 %v3073, %v3552
    %v3554 = vrot.slane %v2766, %v3553
    %v3555 = vsel %vm3078, %v3554, %v3550
    %v3556 = vlaneseq
    %v3557 = vshrl.u32 %v3556, 7
    %v3558 = vsub.s32 %v3080, %v3557
    %v3559 = vrot.slane %v2767, %v3558
    %v3560 = vsel %vm3085, %v3559, %v3555
    %v3561 = vlaneseq
    %v3562 = vshrl.u32 %v3561, 7
    %v3563 = vsub.s32 %v2977, %v3562
    %v3564 = vrot.slane %v2768, %v3563
    %v3565 = vlaneseq
    %v3566 = vshrl.u32 %v3565, 7
    %v3567 = vsub.s32 %v2982, %v3566
    %v3568 = vrot.slane %v2769, %v3567
    %v3569 = vsel %vm2987, %v3568, %v3564
    %v3570 = vlaneseq
    %v3571 = vshrl.u32 %v3570, 7
    %v3572 = vsub.s32 %v2989, %v3571
    %v3573 = vrot.slane %v2770, %v3572
    %v3574 = vsel %vm2994, %v3573, %v3569
    %v3575 = vlaneseq
    %v3576 = vshrl.u32 %v3575, 7
    %v3577 = vsub.s32 %v2996, %v3576
    %v3578 = vrot.slane %v2771, %v3577
    %v3579 = vsel %vm3001, %v3578, %v3574
    %v3580 = vlaneseq
    %v3581 = vshrl.u32 %v3580, 7
    %v3582 = vsub.s32 %v3003, %v3581
    %v3583 = vrot.slane %v2772, %v3582
    %v3584 = vsel %vm3008, %v3583, %v3579
    %v3585 = vlaneseq
    %v3586 = vshrl.u32 %v3585, 7
    %v3587 = vsub.s32 %v3010, %v3586
    %v3588 = vrot.slane %v2773, %v3587
    %v3589 = vsel %vm3015, %v3588, %v3584
    %v3590 = vlaneseq
    %v3591 = vshrl.u32 %v3590, 7
    %v3592 = vsub.s32 %v3017, %v3591
    %v3593 = vrot.slane %v2774, %v3592
    %v3594 = vsel %vm3022, %v3593, %v3589
    %v3595 = vlaneseq
    %v3596 = vshrl.u32 %v3595, 7
    %v3597 = vsub.s32 %v3024, %v3596
    %v3598 = vrot.slane %v2775, %v3597
    %v3599 = vsel %vm3029, %v3598, %v3594
    %v3600 = vlaneseq
    %v3601 = vshrl.u32 %v3600, 7
    %v3602 = vsub.s32 %v3031, %v3601
    %v3603 = vrot.slane %v2776, %v3602
    %v3604 = vsel %vm3036, %v3603, %v3599
    %v3605 = vlaneseq
    %v3606 = vshrl.u32 %v3605, 7
    %v3607 = vsub.s32 %v3038, %v3606
    %v3608 = vrot.slane %v2777, %v3607
    %v3609 = vsel %vm3043, %v3608, %v3604
    %v3610 = vlaneseq
    %v3611 = vshrl.u32 %v3610, 7
    %v3612 = vsub.s32 %v3045, %v3611
    %v3613 = vrot.slane %v2778, %v3612
    %v3614 = vsel %vm3050, %v3613, %v3609
    %v3615 = vlaneseq
    %v3616 = vshrl.u32 %v3615, 7
    %v3617 = vsub.s32 %v3052, %v3616
    %v3618 = vrot.slane %v2779, %v3617
    %v3619 = vsel %vm3057, %v3618, %v3614
    %v3620 = vlaneseq
    %v3621 = vshrl.u32 %v3620, 7
    %v3622 = vsub.s32 %v3059, %v3621
    %v3623 = vrot.slane %v2780, %v3622
    %v3624 = vsel %vm3064, %v3623, %v3619
    %v3625 = vlaneseq
    %v3626 = vshrl.u32 %v3625, 7
    %v3627 = vsub.s32 %v3066, %v3626
    %v3628 = vrot.slane %v2781, %v3627
    %v3629 = vsel %vm3071, %v3628, %v3624
    %v3630 = vlaneseq
    %v3631 = vshrl.u32 %v3630, 7
    %v3632 = vsub.s32 %v3073, %v3631
    %v3633 = vrot.slane %v2782, %v3632
    %v3634 = vsel %vm3078, %v3633, %v3629
    %v3635 = vlaneseq
    %v3636 = vshrl.u32 %v3635, 7
    %v3637 = vsub.s32 %v3080, %v3636
    %v3638 = vrot.slane %v2783, %v3637
    %v3639 = vsel %vm3085, %v3638, %v3634
    %v3640 = vlaneseq
    %v3641 = vshrl.u32 %v3640, 7
    %v3642 = vsub.s32 %v2977, %v3641
    %v3643 = vrot.slane %v2784, %v3642
    %v3644 = vlaneseq
    %v3645 = vshrl.u32 %v3644, 7
    %v3646 = vsub.s32 %v2982, %v3645
    %v3647 = vrot.slane %v2785, %v3646
    %v3648 = vsel %vm2987, %v3647, %v3643
    %v3649 = vlaneseq
    %v3650 = vshrl.u32 %v3649, 7
    %v3651 = vsub.s32 %v2989, %v3650
    %v3652 = vrot.slane %v2786, %v3651
    %v3653 = vsel %vm2994, %v3652, %v3648
    %v3654 = vlaneseq
    %v3655 = vshrl.u32 %v3654, 7
    %v3656 = vsub.s32 %v2996, %v3655
    %v3657 = vrot.slane %v2787, %v3656
    %v3658 = vsel %vm3001, %v3657, %v3653
    %v3659 = vlaneseq
    %v3660 = vshrl.u32 %v3659, 7
    %v3661 = vsub.s32 %v3003, %v3660
    %v3662 = vrot.slane %v2788, %v3661
    %v3663 = vsel %vm3008, %v3662, %v3658
    %v3664 = vlaneseq
    %v3665 = vshrl.u32 %v3664, 7
    %v3666 = vsub.s32 %v3010, %v3665
    %v3667 = vrot.slane %v2789, %v3666
    %v3668 = vsel %vm3015, %v3667, %v3663
    %v3669 = vlaneseq
    %v3670 = vshrl.u32 %v3669, 7
    %v3671 = vsub.s32 %v3017, %v3670
    %v3672 = vrot.slane %v2790, %v3671
    %v3673 = vsel %vm3022, %v3672, %v3668
    %v3674 = vlaneseq
    %v3675 = vshrl.u32 %v3674, 7
    %v3676 = vsub.s32 %v3024, %v3675
    %v3677 = vrot.slane %v2791, %v3676
    %v3678 = vsel %vm3029, %v3677, %v3673
    %v3679 = vlaneseq
    %v3680 = vshrl.u32 %v3679, 7
    %v3681 = vsub.s32 %v3031, %v3680
    %v3682 = vrot.slane %v2792, %v3681
    %v3683 = vsel %vm3036, %v3682, %v3678
    %v3684 = vlaneseq
    %v3685 = vshrl.u32 %v3684, 7
    %v3686 = vsub.s32 %v3038, %v3685
    %v3687 = vrot.slane %v2793, %v3686
    %v3688 = vsel %vm3043, %v3687, %v3683
    %v3689 = vlaneseq
    %v3690 = vshrl.u32 %v3689, 7
    %v3691 = vsub.s32 %v3045, %v3690
    %v3692 = vrot.slane %v2794, %v3691
    %v3693 = vsel %vm3050, %v3692, %v3688
    %v3694 = vlaneseq
    %v3695 = vshrl.u32 %v3694, 7
    %v3696 = vsub.s32 %v3052, %v3695
    %v3697 = vrot.slane %v2795, %v3696
    %v3698 = vsel %vm3057, %v3697, %v3693
    %v3699 = vlaneseq
    %v3700 = vshrl.u32 %v3699, 7
    %v3701 = vsub.s32 %v3059, %v3700
    %v3702 = vrot.slane %v2796, %v3701
    %v3703 = vsel %vm3064, %v3702, %v3698
    %v3704 = vlaneseq
    %v3705 = vshrl.u32 %v3704, 7
    %v3706 = vsub.s32 %v3066, %v3705
    %v3707 = vrot.slane %v2797, %v3706
    %v3708 = vsel %vm3071, %v3707, %v3703
    %v3709 = vlaneseq
    %v3710 = vshrl.u32 %v3709, 7
    %v3711 = vsub.s32 %v3073, %v3710
    %v3712 = vrot.slane %v2798, %v3711
    %v3713 = vsel %vm3078, %v3712, %v3708
    %v3714 = vlaneseq
    %v3715 = vshrl.u32 %v3714, 7
    %v3716 = vsub.s32 %v3080, %v3715
    %v3717 = vrot.slane %v2799, %v3716
    %v3718 = vsel %vm3085, %v3717, %v3713
    %v3719 = vlaneseq
    %v3720 = vshrl.u32 %v3719, 7
    %v3721 = vsub.s32 %v2977, %v3720
    %v3722 = vrot.slane %v2800, %v3721
    %v3723 = vlaneseq
    %v3724 = vshrl.u32 %v3723, 7
    %v3725 = vsub.s32 %v2982, %v3724
    %v3726 = vrot.slane %v2801, %v3725
    %v3727 = vsel %vm2987, %v3726, %v3722
    %v3728 = vlaneseq
    %v3729 = vshrl.u32 %v3728, 7
    %v3730 = vsub.s32 %v2989, %v3729
    %v3731 = vrot.slane %v2802, %v3730
    %v3732 = vsel %vm2994, %v3731, %v3727
    %v3733 = vlaneseq
    %v3734 = vshrl.u32 %v3733, 7
    %v3735 = vsub.s32 %v2996, %v3734
    %v3736 = vrot.slane %v2803, %v3735
    %v3737 = vsel %vm3001, %v3736, %v3732
    %v3738 = vlaneseq
    %v3739 = vshrl.u32 %v3738, 7
    %v3740 = vsub.s32 %v3003, %v3739
    %v3741 = vrot.slane %v2804, %v3740
    %v3742 = vsel %vm3008, %v3741, %v3737
    %v3743 = vlaneseq
    %v3744 = vshrl.u32 %v3743, 7
    %v3745 = vsub.s32 %v3010, %v3744
    %v3746 = vrot.slane %v2805, %v3745
    %v3747 = vsel %vm3015, %v3746, %v3742
    %v3748 = vlaneseq
    %v3749 = vshrl.u32 %v3748, 7
    %v3750 = vsub.s32 %v3017, %v3749
    %v3751 = vrot.slane %v2806, %v3750
    %v3752 = vsel %vm3022, %v3751, %v3747
    %v3753 = vlaneseq
    %v3754 = vshrl.u32 %v3753, 7
    %v3755 = vsub.s32 %v3024, %v3754
    %v3756 = vrot.slane %v2807, %v3755
    %v3757 = vsel %vm3029, %v3756, %v3752
    %v3758 = vlaneseq
    %v3759 = vshrl.u32 %v3758, 7
    %v3760 = vsub.s32 %v3031, %v3759
    %v3761 = vrot.slane %v2808, %v3760
    %v3762 = vsel %vm3036, %v3761, %v3757
    %v3763 = vlaneseq
    %v3764 = vshrl.u32 %v3763, 7
    %v3765 = vsub.s32 %v3038, %v3764
    %v3766 = vrot.slane %v2809, %v3765
    %v3767 = vsel %vm3043, %v3766, %v3762
    %v3768 = vlaneseq
    %v3769 = vshrl.u32 %v3768, 7
    %v3770 = vsub.s32 %v3045, %v3769
    %v3771 = vrot.slane %v2810, %v3770
    %v3772 = vsel %vm3050, %v3771, %v3767
    %v3773 = vlaneseq
    %v3774 = vshrl.u32 %v3773, 7
    %v3775 = vsub.s32 %v3052, %v3774
    %v3776 = vrot.slane %v2811, %v3775
    %v3777 = vsel %vm3057, %v3776, %v3772
    %v3778 = vlaneseq
    %v3779 = vshrl.u32 %v3778, 7
    %v3780 = vsub.s32 %v3059, %v3779
    %v3781 = vrot.slane %v2812, %v3780
    %v3782 = vsel %vm3064, %v3781, %v3777
    %v3783 = vlaneseq
    %v3784 = vshrl.u32 %v3783, 7
    %v3785 = vsub.s32 %v3066, %v3784
    %v3786 = vrot.slane %v2813, %v3785
    %v3787 = vsel %vm3071, %v3786, %v3782
    %v3788 = vlaneseq
    %v3789 = vshrl.u32 %v3788, 7
    %v3790 = vsub.s32 %v3073, %v3789
    %v3791 = vrot.slane %v2814, %v3790
    %v3792 = vsel %vm3078, %v3791, %v3787
    %v3793 = vlaneseq
    %v3794 = vshrl.u32 %v3793, 7
    %v3795 = vsub.s32 %v3080, %v3794
    %v3796 = vrot.slane %v2815, %v3795
    %v3797 = vsel %vm3085, %v3796, %v3792
    %v3798 = vlaneseq
    %v3799 = vshrl.u32 %v3798, 7
    %v3800 = vsub.s32 %v2977, %v3799
    %v3801 = vrot.slane %v2816, %v3800
    %v3802 = vlaneseq
    %v3803 = vshrl.u32 %v3802, 7
    %v3804 = vsub.s32 %v2982, %v3803
    %v3805 = vrot.slane %v2817, %v3804
    %v3806 = vsel %vm2987, %v3805, %v3801
    %v3807 = vlaneseq
    %v3808 = vshrl.u32 %v3807, 7
    %v3809 = vsub.s32 %v2989, %v3808
    %v3810 = vrot.slane %v2818, %v3809
    %v3811 = vsel %vm2994, %v3810, %v3806
    %v3812 = vlaneseq
    %v3813 = vshrl.u32 %v3812, 7
    %v3814 = vsub.s32 %v2996, %v3813
    %v3815 = vrot.slane %v2819, %v3814
    %v3816 = vsel %vm3001, %v3815, %v3811
    %v3817 = vlaneseq
    %v3818 = vshrl.u32 %v3817, 7
    %v3819 = vsub.s32 %v3003, %v3818
    %v3820 = vrot.slane %v2820, %v3819
    %v3821 = vsel %vm3008, %v3820, %v3816
    %v3822 = vlaneseq
    %v3823 = vshrl.u32 %v3822, 7
    %v3824 = vsub.s32 %v3010, %v3823
    %v3825 = vrot.slane %v2821, %v3824
    %v3826 = vsel %vm3015, %v3825, %v3821
    %v3827 = vlaneseq
    %v3828 = vshrl.u32 %v3827, 7
    %v3829 = vsub.s32 %v3017, %v3828
    %v3830 = vrot.slane %v2822, %v3829
    %v3831 = vsel %vm3022, %v3830, %v3826
    %v3832 = vlaneseq
    %v3833 = vshrl.u32 %v3832, 7
    %v3834 = vsub.s32 %v3024, %v3833
    %v3835 = vrot.slane %v2823, %v3834
    %v3836 = vsel %vm3029, %v3835, %v3831
    %v3837 = vlaneseq
    %v3838 = vshrl.u32 %v3837, 7
    %v3839 = vsub.s32 %v3031, %v3838
    %v3840 = vrot.slane %v2824, %v3839
    %v3841 = vsel %vm3036, %v3840, %v3836
    %v3842 = vlaneseq
    %v3843 = vshrl.u32 %v3842, 7
    %v3844 = vsub.s32 %v3038, %v3843
    %v3845 = vrot.slane %v2825, %v3844
    %v3846 = vsel %vm3043, %v3845, %v3841
    %v3847 = vlaneseq
    %v3848 = vshrl.u32 %v3847, 7
    %v3849 = vsub.s32 %v3045, %v3848
    %v3850 = vrot.slane %v2826, %v3849
    %v3851 = vsel %vm3050, %v3850, %v3846
    %v3852 = vlaneseq
    %v3853 = vshrl.u32 %v3852, 7
    %v3854 = vsub.s32 %v3052, %v3853
    %v3855 = vrot.slane %v2827, %v3854
    %v3856 = vsel %vm3057, %v3855, %v3851
    %v3857 = vlaneseq
    %v3858 = vshrl.u32 %v3857, 7
    %v3859 = vsub.s32 %v3059, %v3858
    %v3860 = vrot.slane %v2828, %v3859
    %v3861 = vsel %vm3064, %v3860, %v3856
    %v3862 = vlaneseq
    %v3863 = vshrl.u32 %v3862, 7
    %v3864 = vsub.s32 %v3066, %v3863
    %v3865 = vrot.slane %v2829, %v3864
    %v3866 = vsel %vm3071, %v3865, %v3861
    %v3867 = vlaneseq
    %v3868 = vshrl.u32 %v3867, 7
    %v3869 = vsub.s32 %v3073, %v3868
    %v3870 = vrot.slane %v2830, %v3869
    %v3871 = vsel %vm3078, %v3870, %v3866
    %v3872 = vlaneseq
    %v3873 = vshrl.u32 %v3872, 7
    %v3874 = vsub.s32 %v3080, %v3873
    %v3875 = vrot.slane %v2831, %v3874
    %v3876 = vsel %vm3085, %v3875, %v3871
    %v3877 = vlaneseq
    %v3878 = vshrl.u32 %v3877, 7
    %v3879 = vsub.s32 %v2977, %v3878
    %v3880 = vrot.slane %v2832, %v3879
    %v3881 = vlaneseq
    %v3882 = vshrl.u32 %v3881, 7
    %v3883 = vsub.s32 %v2982, %v3882
    %v3884 = vrot.slane %v2833, %v3883
    %v3885 = vsel %vm2987, %v3884, %v3880
    %v3886 = vlaneseq
    %v3887 = vshrl.u32 %v3886, 7
    %v3888 = vsub.s32 %v2989, %v3887
    %v3889 = vrot.slane %v2834, %v3888
    %v3890 = vsel %vm2994, %v3889, %v3885
    %v3891 = vlaneseq
    %v3892 = vshrl.u32 %v3891, 7
    %v3893 = vsub.s32 %v2996, %v3892
    %v3894 = vrot.slane %v2835, %v3893
    %v3895 = vsel %vm3001, %v3894, %v3890
    %v3896 = vlaneseq
    %v3897 = vshrl.u32 %v3896, 7
    %v3898 = vsub.s32 %v3003, %v3897
    %v3899 = vrot.slane %v2836, %v3898
    %v3900 = vsel %vm3008, %v3899, %v3895
    %v3901 = vlaneseq
    %v3902 = vshrl.u32 %v3901, 7
    %v3903 = vsub.s32 %v3010, %v3902
    %v3904 = vrot.slane %v2837, %v3903
    %v3905 = vsel %vm3015, %v3904, %v3900
    %v3906 = vlaneseq
    %v3907 = vshrl.u32 %v3906, 7
    %v3908 = vsub.s32 %v3017, %v3907
    %v3909 = vrot.slane %v2838, %v3908
    %v3910 = vsel %vm3022, %v3909, %v3905
    %v3911 = vlaneseq
    %v3912 = vshrl.u32 %v3911, 7
    %v3913 = vsub.s32 %v3024, %v3912
    %v3914 = vrot.slane %v2839, %v3913
    %v3915 = vsel %vm3029, %v3914, %v3910
    %v3916 = vlaneseq
    %v3917 = vshrl.u32 %v3916, 7
    %v3918 = vsub.s32 %v3031, %v3917
    %v3919 = vrot.slane %v2840, %v3918
    %v3920 = vsel %vm3036, %v3919, %v3915
    %v3921 = vlaneseq
    %v3922 = vshrl.u32 %v3921, 7
    %v3923 = vsub.s32 %v3038, %v3922
    %v3924 = vrot.slane %v2841, %v3923
    %v3925 = vsel %vm3043, %v3924, %v3920
    %v3926 = vlaneseq
    %v3927 = vshrl.u32 %v3926, 7
    %v3928 = vsub.s32 %v3045, %v3927
    %v3929 = vrot.slane %v2842, %v3928
    %v3930 = vsel %vm3050, %v3929, %v3925
    %v3931 = vlaneseq
    %v3932 = vshrl.u32 %v3931, 7
    %v3933 = vsub.s32 %v3052, %v3932
    %v3934 = vrot.slane %v2843, %v3933
    %v3935 = vsel %vm3057, %v3934, %v3930
    %v3936 = vlaneseq
    %v3937 = vshrl.u32 %v3936, 7
    %v3938 = vsub.s32 %v3059, %v3937
    %v3939 = vrot.slane %v2844, %v3938
    %v3940 = vsel %vm3064, %v3939, %v3935
    %v3941 = vlaneseq
    %v3942 = vshrl.u32 %v3941, 7
    %v3943 = vsub.s32 %v3066, %v3942
    %v3944 = vrot.slane %v2845, %v3943
    %v3945 = vsel %vm3071, %v3944, %v3940
    %v3946 = vlaneseq
    %v3947 = vshrl.u32 %v3946, 7
    %v3948 = vsub.s32 %v3073, %v3947
    %v3949 = vrot.slane %v2846, %v3948
    %v3950 = vsel %vm3078, %v3949, %v3945
    %v3951 = vlaneseq
    %v3952 = vshrl.u32 %v3951, 7
    %v3953 = vsub.s32 %v3080, %v3952
    %v3954 = vrot.slane %v2847, %v3953
    %v3955 = vsel %vm3085, %v3954, %v3950
    %v3956 = vlaneseq
    %v3957 = vshrl.u32 %v3956, 7
    %v3958 = vsub.s32 %v2977, %v3957
    %v3959 = vrot.slane %v2848, %v3958
    %v3960 = vlaneseq
    %v3961 = vshrl.u32 %v3960, 7
    %v3962 = vsub.s32 %v2982, %v3961
    %v3963 = vrot.slane %v2849, %v3962
    %v3964 = vsel %vm2987, %v3963, %v3959
    %v3965 = vlaneseq
    %v3966 = vshrl.u32 %v3965, 7
    %v3967 = vsub.s32 %v2989, %v3966
    %v3968 = vrot.slane %v2850, %v3967
    %v3969 = vsel %vm2994, %v3968, %v3964
    %v3970 = vlaneseq
    %v3971 = vshrl.u32 %v3970, 7
    %v3972 = vsub.s32 %v2996, %v3971
    %v3973 = vrot.slane %v2851, %v3972
    %v3974 = vsel %vm3001, %v3973, %v3969
    %v3975 = vlaneseq
    %v3976 = vshrl.u32 %v3975, 7
    %v3977 = vsub.s32 %v3003, %v3976
    %v3978 = vrot.slane %v2852, %v3977
    %v3979 = vsel %vm3008, %v3978, %v3974
    %v3980 = vlaneseq
    %v3981 = vshrl.u32 %v3980, 7
    %v3982 = vsub.s32 %v3010, %v3981
    %v3983 = vrot.slane %v2853, %v3982
    %v3984 = vsel %vm3015, %v3983, %v3979
    %v3985 = vlaneseq
    %v3986 = vshrl.u32 %v3985, 7
    %v3987 = vsub.s32 %v3017, %v3986
    %v3988 = vrot.slane %v2854, %v3987
    %v3989 = vsel %vm3022, %v3988, %v3984
    %v3990 = vlaneseq
    %v3991 = vshrl.u32 %v3990, 7
    %v3992 = vsub.s32 %v3024, %v3991
    %v3993 = vrot.slane %v2855, %v3992
    %v3994 = vsel %vm3029, %v3993, %v3989
    %v3995 = vlaneseq
    %v3996 = vshrl.u32 %v3995, 7
    %v3997 = vsub.s32 %v3031, %v3996
    %v3998 = vrot.slane %v2856, %v3997
    %v3999 = vsel %vm3036, %v3998, %v3994
    %v4000 = vlaneseq
    %v4001 = vshrl.u32 %v4000, 7
    %v4002 = vsub.s32 %v3038, %v4001
    %v4003 = vrot.slane %v2857, %v4002
    %v4004 = vsel %vm3043, %v4003, %v3999
    %v4005 = vlaneseq
    %v4006 = vshrl.u32 %v4005, 7
    %v4007 = vsub.s32 %v3045, %v4006
    %v4008 = vrot.slane %v2858, %v4007
    %v4009 = vsel %vm3050, %v4008, %v4004
    %v4010 = vlaneseq
    %v4011 = vshrl.u32 %v4010, 7
    %v4012 = vsub.s32 %v3052, %v4011
    %v4013 = vrot.slane %v2859, %v4012
    %v4014 = vsel %vm3057, %v4013, %v4009
    %v4015 = vlaneseq
    %v4016 = vshrl.u32 %v4015, 7
    %v4017 = vsub.s32 %v3059, %v4016
    %v4018 = vrot.slane %v2860, %v4017
    %v4019 = vsel %vm3064, %v4018, %v4014
    %v4020 = vlaneseq
    %v4021 = vshrl.u32 %v4020, 7
    %v4022 = vsub.s32 %v3066, %v4021
    %v4023 = vrot.slane %v2861, %v4022
    %v4024 = vsel %vm3071, %v4023, %v4019
    %v4025 = vlaneseq
    %v4026 = vshrl.u32 %v4025, 7
    %v4027 = vsub.s32 %v3073, %v4026
    %v4028 = vrot.slane %v2862, %v4027
    %v4029 = vsel %vm3078, %v4028, %v4024
    %v4030 = vlaneseq
    %v4031 = vshrl.u32 %v4030, 7
    %v4032 = vsub.s32 %v3080, %v4031
    %v4033 = vrot.slane %v2863, %v4032
    %v4034 = vsel %vm3085, %v4033, %v4029
    %v4035 = vlaneseq
    %v4036 = vshrl.u32 %v4035, 7
    %v4037 = vsub.s32 %v2977, %v4036
    %v4038 = vrot.slane %v2864, %v4037
    %v4039 = vlaneseq
    %v4040 = vshrl.u32 %v4039, 7
    %v4041 = vsub.s32 %v2982, %v4040
    %v4042 = vrot.slane %v2865, %v4041
    %v4043 = vsel %vm2987, %v4042, %v4038
    %v4044 = vlaneseq
    %v4045 = vshrl.u32 %v4044, 7
    %v4046 = vsub.s32 %v2989, %v4045
    %v4047 = vrot.slane %v2866, %v4046
    %v4048 = vsel %vm2994, %v4047, %v4043
    %v4049 = vlaneseq
    %v4050 = vshrl.u32 %v4049, 7
    %v4051 = vsub.s32 %v2996, %v4050
    %v4052 = vrot.slane %v2867, %v4051
    %v4053 = vsel %vm3001, %v4052, %v4048
    %v4054 = vlaneseq
    %v4055 = vshrl.u32 %v4054, 7
    %v4056 = vsub.s32 %v3003, %v4055
    %v4057 = vrot.slane %v2868, %v4056
    %v4058 = vsel %vm3008, %v4057, %v4053
    %v4059 = vlaneseq
    %v4060 = vshrl.u32 %v4059, 7
    %v4061 = vsub.s32 %v3010, %v4060
    %v4062 = vrot.slane %v2869, %v4061
    %v4063 = vsel %vm3015, %v4062, %v4058
    %v4064 = vlaneseq
    %v4065 = vshrl.u32 %v4064, 7
    %v4066 = vsub.s32 %v3017, %v4065
    %v4067 = vrot.slane %v2870, %v4066
    %v4068 = vsel %vm3022, %v4067, %v4063
    %v4069 = vlaneseq
    %v4070 = vshrl.u32 %v4069, 7
    %v4071 = vsub.s32 %v3024, %v4070
    %v4072 = vrot.slane %v2871, %v4071
    %v4073 = vsel %vm3029, %v4072, %v4068
    %v4074 = vlaneseq
    %v4075 = vshrl.u32 %v4074, 7
    %v4076 = vsub.s32 %v3031, %v4075
    %v4077 = vrot.slane %v2872, %v4076
    %v4078 = vsel %vm3036, %v4077, %v4073
    %v4079 = vlaneseq
    %v4080 = vshrl.u32 %v4079, 7
    %v4081 = vsub.s32 %v3038, %v4080
    %v4082 = vrot.slane %v2873, %v4081
    %v4083 = vsel %vm3043, %v4082, %v4078
    %v4084 = vlaneseq
    %v4085 = vshrl.u32 %v4084, 7
    %v4086 = vsub.s32 %v3045, %v4085
    %v4087 = vrot.slane %v2874, %v4086
    %v4088 = vsel %vm3050, %v4087, %v4083
    %v4089 = vlaneseq
    %v4090 = vshrl.u32 %v4089, 7
    %v4091 = vsub.s32 %v3052, %v4090
    %v4092 = vrot.slane %v2875, %v4091
    %v4093 = vsel %vm3057, %v4092, %v4088
    %v4094 = vlaneseq
    %v4095 = vshrl.u32 %v4094, 7
    %v4096 = vsub.s32 %v3059, %v4095
    %v4097 = vrot.slane %v2876, %v4096
    %v4098 = vsel %vm3064, %v4097, %v4093
    %v4099 = vlaneseq
    %v4100 = vshrl.u32 %v4099, 7
    %v4101 = vsub.s32 %v3066, %v4100
    %v4102 = vrot.slane %v2877, %v4101
    %v4103 = vsel %vm3071, %v4102, %v4098
    %v4104 = vlaneseq
    %v4105 = vshrl.u32 %v4104, 7
    %v4106 = vsub.s32 %v3073, %v4105
    %v4107 = vrot.slane %v2878, %v4106
    %v4108 = vsel %vm3078, %v4107, %v4103
    %v4109 = vlaneseq
    %v4110 = vshrl.u32 %v4109, 7
    %v4111 = vsub.s32 %v3080, %v4110
    %v4112 = vrot.slane %v2879, %v4111
    %v4113 = vsel %vm3085, %v4112, %v4108
    %v4114 = vlaneseq
    %v4115 = vshrl.u32 %v4114, 7
    %v4116 = vsub.s32 %v2977, %v4115
    %v4117 = vrot.slane %v2880, %v4116
    %v4118 = vlaneseq
    %v4119 = vshrl.u32 %v4118, 7
    %v4120 = vsub.s32 %v2982, %v4119
    %v4121 = vrot.slane %v2881, %v4120
    %v4122 = vsel %vm2987, %v4121, %v4117
    %v4123 = vlaneseq
    %v4124 = vshrl.u32 %v4123, 7
    %v4125 = vsub.s32 %v2989, %v4124
    %v4126 = vrot.slane %v2882, %v4125
    %v4127 = vsel %vm2994, %v4126, %v4122
    %v4128 = vlaneseq
    %v4129 = vshrl.u32 %v4128, 7
    %v4130 = vsub.s32 %v2996, %v4129
    %v4131 = vrot.slane %v2883, %v4130
    %v4132 = vsel %vm3001, %v4131, %v4127
    %v4133 = vlaneseq
    %v4134 = vshrl.u32 %v4133, 7
    %v4135 = vsub.s32 %v3003, %v4134
    %v4136 = vrot.slane %v2884, %v4135
    %v4137 = vsel %vm3008, %v4136, %v4132
    %v4138 = vlaneseq
    %v4139 = vshrl.u32 %v4138, 7
    %v4140 = vsub.s32 %v3010, %v4139
    %v4141 = vrot.slane %v2885, %v4140
    %v4142 = vsel %vm3015, %v4141, %v4137
    %v4143 = vlaneseq
    %v4144 = vshrl.u32 %v4143, 7
    %v4145 = vsub.s32 %v3017, %v4144
    %v4146 = vrot.slane %v2886, %v4145
    %v4147 = vsel %vm3022, %v4146, %v4142
    %v4148 = vlaneseq
    %v4149 = vshrl.u32 %v4148, 7
    %v4150 = vsub.s32 %v3024, %v4149
    %v4151 = vrot.slane %v2887, %v4150
    %v4152 = vsel %vm3029, %v4151, %v4147
    %v4153 = vlaneseq
    %v4154 = vshrl.u32 %v4153, 7
    %v4155 = vsub.s32 %v3031, %v4154
    %v4156 = vrot.slane %v2888, %v4155
    %v4157 = vsel %vm3036, %v4156, %v4152
    %v4158 = vlaneseq
    %v4159 = vshrl.u32 %v4158, 7
    %v4160 = vsub.s32 %v3038, %v4159
    %v4161 = vrot.slane %v2889, %v4160
    %v4162 = vsel %vm3043, %v4161, %v4157
    %v4163 = vlaneseq
    %v4164 = vshrl.u32 %v4163, 7
    %v4165 = vsub.s32 %v3045, %v4164
    %v4166 = vrot.slane %v2890, %v4165
    %v4167 = vsel %vm3050, %v4166, %v4162
    %v4168 = vlaneseq
    %v4169 = vshrl.u32 %v4168, 7
    %v4170 = vsub.s32 %v3052, %v4169
    %v4171 = vrot.slane %v2891, %v4170
    %v4172 = vsel %vm3057, %v4171, %v4167
    %v4173 = vlaneseq
    %v4174 = vshrl.u32 %v4173, 7
    %v4175 = vsub.s32 %v3059, %v4174
    %v4176 = vrot.slane %v2892, %v4175
    %v4177 = vsel %vm3064, %v4176, %v4172
    %v4178 = vlaneseq
    %v4179 = vshrl.u32 %v4178, 7
    %v4180 = vsub.s32 %v3066, %v4179
    %v4181 = vrot.slane %v2893, %v4180
    %v4182 = vsel %vm3071, %v4181, %v4177
    %v4183 = vlaneseq
    %v4184 = vshrl.u32 %v4183, 7
    %v4185 = vsub.s32 %v3073, %v4184
    %v4186 = vrot.slane %v2894, %v4185
    %v4187 = vsel %vm3078, %v4186, %v4182
    %v4188 = vlaneseq
    %v4189 = vshrl.u32 %v4188, 7
    %v4190 = vsub.s32 %v3080, %v4189
    %v4191 = vrot.slane %v2895, %v4190
    %v4192 = vsel %vm3085, %v4191, %v4187
    %v4193 = vlaneseq
    %v4194 = vshrl.u32 %v4193, 7
    %v4195 = vsub.s32 %v2977, %v4194
    %v4196 = vrot.slane %v2896, %v4195
    %v4197 = vlaneseq
    %v4198 = vshrl.u32 %v4197, 7
    %v4199 = vsub.s32 %v2982, %v4198
    %v4200 = vrot.slane %v2897, %v4199
    %v4201 = vsel %vm2987, %v4200, %v4196
    %v4202 = vlaneseq
    %v4203 = vshrl.u32 %v4202, 7
    %v4204 = vsub.s32 %v2989, %v4203
    %v4205 = vrot.slane %v2898, %v4204
    %v4206 = vsel %vm2994, %v4205, %v4201
    %v4207 = vlaneseq
    %v4208 = vshrl.u32 %v4207, 7
    %v4209 = vsub.s32 %v2996, %v4208
    %v4210 = vrot.slane %v2899, %v4209
    %v4211 = vsel %vm3001, %v4210, %v4206
    %v4212 = vlaneseq
    %v4213 = vshrl.u32 %v4212, 7
    %v4214 = vsub.s32 %v3003, %v4213
    %v4215 = vrot.slane %v2900, %v4214
    %v4216 = vsel %vm3008, %v4215, %v4211
    %v4217 = vlaneseq
    %v4218 = vshrl.u32 %v4217, 7
    %v4219 = vsub.s32 %v3010, %v4218
    %v4220 = vrot.slane %v2901, %v4219
    %v4221 = vsel %vm3015, %v4220, %v4216
    %v4222 = vlaneseq
    %v4223 = vshrl.u32 %v4222, 7
    %v4224 = vsub.s32 %v3017, %v4223
    %v4225 = vrot.slane %v2902, %v4224
    %v4226 = vsel %vm3022, %v4225, %v4221
    %v4227 = vlaneseq
    %v4228 = vshrl.u32 %v4227, 7
    %v4229 = vsub.s32 %v3024, %v4228
    %v4230 = vrot.slane %v2903, %v4229
    %v4231 = vsel %vm3029, %v4230, %v4226
    %v4232 = vlaneseq
    %v4233 = vshrl.u32 %v4232, 7
    %v4234 = vsub.s32 %v3031, %v4233
    %v4235 = vrot.slane %v2904, %v4234
    %v4236 = vsel %vm3036, %v4235, %v4231
    %v4237 = vlaneseq
    %v4238 = vshrl.u32 %v4237, 7
    %v4239 = vsub.s32 %v3038, %v4238
    %v4240 = vrot.slane %v2905, %v4239
    %v4241 = vsel %vm3043, %v4240, %v4236
    %v4242 = vlaneseq
    %v4243 = vshrl.u32 %v4242, 7
    %v4244 = vsub.s32 %v3045, %v4243
    %v4245 = vrot.slane %v2906, %v4244
    %v4246 = vsel %vm3050, %v4245, %v4241
    %v4247 = vlaneseq
    %v4248 = vshrl.u32 %v4247, 7
    %v4249 = vsub.s32 %v3052, %v4248
    %v4250 = vrot.slane %v2907, %v4249
    %v4251 = vsel %vm3057, %v4250, %v4246
    %v4252 = vlaneseq
    %v4253 = vshrl.u32 %v4252, 7
    %v4254 = vsub.s32 %v3059, %v4253
    %v4255 = vrot.slane %v2908, %v4254
    %v4256 = vsel %vm3064, %v4255, %v4251
    %v4257 = vlaneseq
    %v4258 = vshrl.u32 %v4257, 7
    %v4259 = vsub.s32 %v3066, %v4258
    %v4260 = vrot.slane %v2909, %v4259
    %v4261 = vsel %vm3071, %v4260, %v4256
    %v4262 = vlaneseq
    %v4263 = vshrl.u32 %v4262, 7
    %v4264 = vsub.s32 %v3073, %v4263
    %v4265 = vrot.slane %v2910, %v4264
    %v4266 = vsel %vm3078, %v4265, %v4261
    %v4267 = vlaneseq
    %v4268 = vshrl.u32 %v4267, 7
    %v4269 = vsub.s32 %v3080, %v4268
    %v4270 = vrot.slane %v2911, %v4269
    %v4271 = vsel %vm3085, %v4270, %v4266
    %v4272 = vlaneseq
    %v4273 = vshrl.u32 %v4272, 7
    %v4274 = vsub.s32 %v2977, %v4273
    %v4275 = vrot.slane %v2912, %v4274
    %v4276 = vlaneseq
    %v4277 = vshrl.u32 %v4276, 7
    %v4278 = vsub.s32 %v2982, %v4277
    %v4279 = vrot.slane %v2913, %v4278
    %v4280 = vsel %vm2987, %v4279, %v4275
    %v4281 = vlaneseq
    %v4282 = vshrl.u32 %v4281, 7
    %v4283 = vsub.s32 %v2989, %v4282
    %v4284 = vrot.slane %v2914, %v4283
    %v4285 = vsel %vm2994, %v4284, %v4280
    %v4286 = vlaneseq
    %v4287 = vshrl.u32 %v4286, 7
    %v4288 = vsub.s32 %v2996, %v4287
    %v4289 = vrot.slane %v2915, %v4288
    %v4290 = vsel %vm3001, %v4289, %v4285
    %v4291 = vlaneseq
    %v4292 = vshrl.u32 %v4291, 7
    %v4293 = vsub.s32 %v3003, %v4292
    %v4294 = vrot.slane %v2916, %v4293
    %v4295 = vsel %vm3008, %v4294, %v4290
    %v4296 = vlaneseq
    %v4297 = vshrl.u32 %v4296, 7
    %v4298 = vsub.s32 %v3010, %v4297
    %v4299 = vrot.slane %v2917, %v4298
    %v4300 = vsel %vm3015, %v4299, %v4295
    %v4301 = vlaneseq
    %v4302 = vshrl.u32 %v4301, 7
    %v4303 = vsub.s32 %v3017, %v4302
    %v4304 = vrot.slane %v2918, %v4303
    %v4305 = vsel %vm3022, %v4304, %v4300
    %v4306 = vlaneseq
    %v4307 = vshrl.u32 %v4306, 7
    %v4308 = vsub.s32 %v3024, %v4307
    %v4309 = vrot.slane %v2919, %v4308
    %v4310 = vsel %vm3029, %v4309, %v4305
    %v4311 = vlaneseq
    %v4312 = vshrl.u32 %v4311, 7
    %v4313 = vsub.s32 %v3031, %v4312
    %v4314 = vrot.slane %v2920, %v4313
    %v4315 = vsel %vm3036, %v4314, %v4310
    %v4316 = vlaneseq
    %v4317 = vshrl.u32 %v4316, 7
    %v4318 = vsub.s32 %v3038, %v4317
    %v4319 = vrot.slane %v2921, %v4318
    %v4320 = vsel %vm3043, %v4319, %v4315
    %v4321 = vlaneseq
    %v4322 = vshrl.u32 %v4321, 7
    %v4323 = vsub.s32 %v3045, %v4322
    %v4324 = vrot.slane %v2922, %v4323
    %v4325 = vsel %vm3050, %v4324, %v4320
    %v4326 = vlaneseq
    %v4327 = vshrl.u32 %v4326, 7
    %v4328 = vsub.s32 %v3052, %v4327
    %v4329 = vrot.slane %v2923, %v4328
    %v4330 = vsel %vm3057, %v4329, %v4325
    %v4331 = vlaneseq
    %v4332 = vshrl.u32 %v4331, 7
    %v4333 = vsub.s32 %v3059, %v4332
    %v4334 = vrot.slane %v2924, %v4333
    %v4335 = vsel %vm3064, %v4334, %v4330
    %v4336 = vlaneseq
    %v4337 = vshrl.u32 %v4336, 7
    %v4338 = vsub.s32 %v3066, %v4337
    %v4339 = vrot.slane %v2925, %v4338
    %v4340 = vsel %vm3071, %v4339, %v4335
    %v4341 = vlaneseq
    %v4342 = vshrl.u32 %v4341, 7
    %v4343 = vsub.s32 %v3073, %v4342
    %v4344 = vrot.slane %v2926, %v4343
    %v4345 = vsel %vm3078, %v4344, %v4340
    %v4346 = vlaneseq
    %v4347 = vshrl.u32 %v4346, 7
    %v4348 = vsub.s32 %v3080, %v4347
    %v4349 = vrot.slane %v2927, %v4348
    %v4350 = vsel %vm3085, %v4349, %v4345
    %v4351 = vlaneseq
    %v4352 = vshrl.u32 %v4351, 7
    %v4353 = vsub.s32 %v2977, %v4352
    %v4354 = vrot.slane %v2928, %v4353
    %v4355 = vlaneseq
    %v4356 = vshrl.u32 %v4355, 7
    %v4357 = vsub.s32 %v2982, %v4356
    %v4358 = vrot.slane %v2929, %v4357
    %v4359 = vsel %vm2987, %v4358, %v4354
    %v4360 = vlaneseq
    %v4361 = vshrl.u32 %v4360, 7
    %v4362 = vsub.s32 %v2989, %v4361
    %v4363 = vrot.slane %v2930, %v4362
    %v4364 = vsel %vm2994, %v4363, %v4359
    %v4365 = vlaneseq
    %v4366 = vshrl.u32 %v4365, 7
    %v4367 = vsub.s32 %v2996, %v4366
    %v4368 = vrot.slane %v2931, %v4367
    %v4369 = vsel %vm3001, %v4368, %v4364
    %v4370 = vlaneseq
    %v4371 = vshrl.u32 %v4370, 7
    %v4372 = vsub.s32 %v3003, %v4371
    %v4373 = vrot.slane %v2932, %v4372
    %v4374 = vsel %vm3008, %v4373, %v4369
    %v4375 = vlaneseq
    %v4376 = vshrl.u32 %v4375, 7
    %v4377 = vsub.s32 %v3010, %v4376
    %v4378 = vrot.slane %v2933, %v4377
    %v4379 = vsel %vm3015, %v4378, %v4374
    %v4380 = vlaneseq
    %v4381 = vshrl.u32 %v4380, 7
    %v4382 = vsub.s32 %v3017, %v4381
    %v4383 = vrot.slane %v2934, %v4382
    %v4384 = vsel %vm3022, %v4383, %v4379
    %v4385 = vlaneseq
    %v4386 = vshrl.u32 %v4385, 7
    %v4387 = vsub.s32 %v3024, %v4386
    %v4388 = vrot.slane %v2935, %v4387
    %v4389 = vsel %vm3029, %v4388, %v4384
    %v4390 = vlaneseq
    %v4391 = vshrl.u32 %v4390, 7
    %v4392 = vsub.s32 %v3031, %v4391
    %v4393 = vrot.slane %v2936, %v4392
    %v4394 = vsel %vm3036, %v4393, %v4389
    %v4395 = vlaneseq
    %v4396 = vshrl.u32 %v4395, 7
    %v4397 = vsub.s32 %v3038, %v4396
    %v4398 = vrot.slane %v2937, %v4397
    %v4399 = vsel %vm3043, %v4398, %v4394
    %v4400 = vlaneseq
    %v4401 = vshrl.u32 %v4400, 7
    %v4402 = vsub.s32 %v3045, %v4401
    %v4403 = vrot.slane %v2938, %v4402
    %v4404 = vsel %vm3050, %v4403, %v4399
    %v4405 = vlaneseq
    %v4406 = vshrl.u32 %v4405, 7
    %v4407 = vsub.s32 %v3052, %v4406
    %v4408 = vrot.slane %v2939, %v4407
    %v4409 = vsel %vm3057, %v4408, %v4404
    %v4410 = vlaneseq
    %v4411 = vshrl.u32 %v4410, 7
    %v4412 = vsub.s32 %v3059, %v4411
    %v4413 = vrot.slane %v2940, %v4412
    %v4414 = vsel %vm3064, %v4413, %v4409
    %v4415 = vlaneseq
    %v4416 = vshrl.u32 %v4415, 7
    %v4417 = vsub.s32 %v3066, %v4416
    %v4418 = vrot.slane %v2941, %v4417
    %v4419 = vsel %vm3071, %v4418, %v4414
    %v4420 = vlaneseq
    %v4421 = vshrl.u32 %v4420, 7
    %v4422 = vsub.s32 %v3073, %v4421
    %v4423 = vrot.slane %v2942, %v4422
    %v4424 = vsel %vm3078, %v4423, %v4419
    %v4425 = vlaneseq
    %v4426 = vshrl.u32 %v4425, 7
    %v4427 = vsub.s32 %v3080, %v4426
    %v4428 = vrot.slane %v2943, %v4427
    %v4429 = vsel %vm3085, %v4428, %v4424
    %v4430 = vlaneseq
    %v4431 = vshrl.u32 %v4430, 7
    %v4432 = vsub.s32 %v2977, %v4431
    %v4433 = vrot.slane %v2944, %v4432
    %v4434 = vlaneseq
    %v4435 = vshrl.u32 %v4434, 7
    %v4436 = vsub.s32 %v2982, %v4435
    %v4437 = vrot.slane %v2945, %v4436
    %v4438 = vsel %vm2987, %v4437, %v4433
    %v4439 = vlaneseq
    %v4440 = vshrl.u32 %v4439, 7
    %v4441 = vsub.s32 %v2989, %v4440
    %v4442 = vrot.slane %v2946, %v4441
    %v4443 = vsel %vm2994, %v4442, %v4438
    %v4444 = vlaneseq
    %v4445 = vshrl.u32 %v4444, 7
    %v4446 = vsub.s32 %v2996, %v4445
    %v4447 = vrot.slane %v2947, %v4446
    %v4448 = vsel %vm3001, %v4447, %v4443
    %v4449 = vlaneseq
    %v4450 = vshrl.u32 %v4449, 7
    %v4451 = vsub.s32 %v3003, %v4450
    %v4452 = vrot.slane %v2948, %v4451
    %v4453 = vsel %vm3008, %v4452, %v4448
    %v4454 = vlaneseq
    %v4455 = vshrl.u32 %v4454, 7
    %v4456 = vsub.s32 %v3010, %v4455
    %v4457 = vrot.slane %v2949, %v4456
    %v4458 = vsel %vm3015, %v4457, %v4453
    %v4459 = vlaneseq
    %v4460 = vshrl.u32 %v4459, 7
    %v4461 = vsub.s32 %v3017, %v4460
    %v4462 = vrot.slane %v2950, %v4461
    %v4463 = vsel %vm3022, %v4462, %v4458
    %v4464 = vlaneseq
    %v4465 = vshrl.u32 %v4464, 7
    %v4466 = vsub.s32 %v3024, %v4465
    %v4467 = vrot.slane %v2951, %v4466
    %v4468 = vsel %vm3029, %v4467, %v4463
    %v4469 = vlaneseq
    %v4470 = vshrl.u32 %v4469, 7
    %v4471 = vsub.s32 %v3031, %v4470
    %v4472 = vrot.slane %v2952, %v4471
    %v4473 = vsel %vm3036, %v4472, %v4468
    %v4474 = vlaneseq
    %v4475 = vshrl.u32 %v4474, 7
    %v4476 = vsub.s32 %v3038, %v4475
    %v4477 = vrot.slane %v2953, %v4476
    %v4478 = vsel %vm3043, %v4477, %v4473
    %v4479 = vlaneseq
    %v4480 = vshrl.u32 %v4479, 7
    %v4481 = vsub.s32 %v3045, %v4480
    %v4482 = vrot.slane %v2954, %v4481
    %v4483 = vsel %vm3050, %v4482, %v4478
    %v4484 = vlaneseq
    %v4485 = vshrl.u32 %v4484, 7
    %v4486 = vsub.s32 %v3052, %v4485
    %v4487 = vrot.slane %v2955, %v4486
    %v4488 = vsel %vm3057, %v4487, %v4483
    %v4489 = vlaneseq
    %v4490 = vshrl.u32 %v4489, 7
    %v4491 = vsub.s32 %v3059, %v4490
    %v4492 = vrot.slane %v2956, %v4491
    %v4493 = vsel %vm3064, %v4492, %v4488
    %v4494 = vlaneseq
    %v4495 = vshrl.u32 %v4494, 7
    %v4496 = vsub.s32 %v3066, %v4495
    %v4497 = vrot.slane %v2957, %v4496
    %v4498 = vsel %vm3071, %v4497, %v4493
    %v4499 = vlaneseq
    %v4500 = vshrl.u32 %v4499, 7
    %v4501 = vsub.s32 %v3073, %v4500
    %v4502 = vrot.slane %v2958, %v4501
    %v4503 = vsel %vm3078, %v4502, %v4498
    %v4504 = vlaneseq
    %v4505 = vshrl.u32 %v4504, 7
    %v4506 = vsub.s32 %v3080, %v4505
    %v4507 = vrot.slane %v2959, %v4506
    %v4508 = vsel %vm3085, %v4507, %v4503
    %v4509 = vlaneseq
    %v4510 = vshrl.u32 %v4509, 7
    %v4511 = vsub.s32 %v2977, %v4510
    %v4512 = vrot.slane %v2960, %v4511
    %v4513 = vlaneseq
    %v4514 = vshrl.u32 %v4513, 7
    %v4515 = vsub.s32 %v2982, %v4514
    %v4516 = vrot.slane %v2961, %v4515
    %v4517 = vsel %vm2987, %v4516, %v4512
    %v4518 = vlaneseq
    %v4519 = vshrl.u32 %v4518, 7
    %v4520 = vsub.s32 %v2989, %v4519
    %v4521 = vrot.slane %v2962, %v4520
    %v4522 = vsel %vm2994, %v4521, %v4517
    %v4523 = vlaneseq
    %v4524 = vshrl.u32 %v4523, 7
    %v4525 = vsub.s32 %v2996, %v4524
    %v4526 = vrot.slane %v2963, %v4525
    %v4527 = vsel %vm3001, %v4526, %v4522
    %v4528 = vlaneseq
    %v4529 = vshrl.u32 %v4528, 7
    %v4530 = vsub.s32 %v3003, %v4529
    %v4531 = vrot.slane %v2964, %v4530
    %v4532 = vsel %vm3008, %v4531, %v4527
    %v4533 = vlaneseq
    %v4534 = vshrl.u32 %v4533, 7
    %v4535 = vsub.s32 %v3010, %v4534
    %v4536 = vrot.slane %v2965, %v4535
    %v4537 = vsel %vm3015, %v4536, %v4532
    %v4538 = vlaneseq
    %v4539 = vshrl.u32 %v4538, 7
    %v4540 = vsub.s32 %v3017, %v4539
    %v4541 = vrot.slane %v2966, %v4540
    %v4542 = vsel %vm3022, %v4541, %v4537
    %v4543 = vlaneseq
    %v4544 = vshrl.u32 %v4543, 7
    %v4545 = vsub.s32 %v3024, %v4544
    %v4546 = vrot.slane %v2967, %v4545
    %v4547 = vsel %vm3029, %v4546, %v4542
    %v4548 = vlaneseq
    %v4549 = vshrl.u32 %v4548, 7
    %v4550 = vsub.s32 %v3031, %v4549
    %v4551 = vrot.slane %v2968, %v4550
    %v4552 = vsel %vm3036, %v4551, %v4547
    %v4553 = vlaneseq
    %v4554 = vshrl.u32 %v4553, 7
    %v4555 = vsub.s32 %v3038, %v4554
    %v4556 = vrot.slane %v2969, %v4555
    %v4557 = vsel %vm3043, %v4556, %v4552
    %v4558 = vlaneseq
    %v4559 = vshrl.u32 %v4558, 7
    %v4560 = vsub.s32 %v3045, %v4559
    %v4561 = vrot.slane %v2970, %v4560
    %v4562 = vsel %vm3050, %v4561, %v4557
    %v4563 = vlaneseq
    %v4564 = vshrl.u32 %v4563, 7
    %v4565 = vsub.s32 %v3052, %v4564
    %v4566 = vrot.slane %v2971, %v4565
    %v4567 = vsel %vm3057, %v4566, %v4562
    %v4568 = vlaneseq
    %v4569 = vshrl.u32 %v4568, 7
    %v4570 = vsub.s32 %v3059, %v4569
    %v4571 = vrot.slane %v2972, %v4570
    %v4572 = vsel %vm3064, %v4571, %v4567
    %v4573 = vlaneseq
    %v4574 = vshrl.u32 %v4573, 7
    %v4575 = vsub.s32 %v3066, %v4574
    %v4576 = vrot.slane %v2973, %v4575
    %v4577 = vsel %vm3071, %v4576, %v4572
    %v4578 = vlaneseq
    %v4579 = vshrl.u32 %v4578, 7
    %v4580 = vsub.s32 %v3073, %v4579
    %v4581 = vrot.slane %v2974, %v4580
    %v4582 = vsel %vm3078, %v4581, %v4577
    %v4583 = vlaneseq
    %v4584 = vshrl.u32 %v4583, 7
    %v4585 = vsub.s32 %v3080, %v4584
    %v4586 = vrot.slane %v2975, %v4585
    %v4587 = vsel %vm3085, %v4586, %v4582
    %vm4588 = vcmask 1041409
    %v4589 = vsel %vm4588, %v3876, %v3086
    %v4590 = vsel %vm4588, %v3955, %v3165
    %v4591 = vsel %vm4588, %v4034, %v3244
    %v4592 = vsel %vm4588, %v4113, %v3323
    %v4593 = vsel %vm4588, %v4192, %v3402
    %v4594 = vsel %vm4588, %v4271, %v3481
    %v4595 = vsel %vm4588, %v4350, %v3560
    %v4596 = vsel %vm4588, %v4429, %v3639
    %v4597 = vsel %vm4588, %v4508, %v3718
    %v4598 = vsel %vm4588, %v4587, %v3797
    %v4599 = vpack.c.b16 %v4589, %v4589
    %v4600 = vpack.c.b16 %v4590, %v4590
    %v4601 = vpack.c.b16 %v4591, %v4591
    %v4602 = vpack.c.b16 %v4592, %v4592
    %v4603 = vpack.c.b16 %v4593, %v4593
    %v4604 = vpack.c.b16 %v4594, %v4594
    %v4605 = vpack.c.b16 %v4595, %v4595
    %v4606 = vpack.c.b16 %v4596, %v4596
    %v4607 = vpack.c.b16 %v4597, %v4597
    %v4608 = vpack.c.b16 %v4598, %v4598
    %v4939 = vunpack.c.l.b16 %v2154
    %v4940 = vunpack.c.h.b16 %v2154
    %v4941 = vunpack.c.l.b16 %v2155
    %v4942 = vunpack.c.h.b16 %v2155
    %v4943 = vunpack.c.l.b16 %v2156
    %v4944 = vunpack.c.h.b16 %v2156
    %v4945 = vunpack.c.l.b16 %v2157
    %v4946 = vunpack.c.h.b16 %v2157
    %v4947 = vunpack.c.l.b16 %v2158
    %v4948 = vunpack.c.h.b16 %v2158
    %v4949 = vunpack.c.l.b16 %v2159
    %v4950 = vunpack.c.h.b16 %v2159
    %v4951 = vunpack.c.l.b16 %v2160
    %v4952 = vunpack.c.h.b16 %v2160
    %v4953 = vunpack.c.l.b16 %v2161
    %v4954 = vunpack.c.h.b16 %v2161
    %v4955 = vunpack.c.l.b16 %v2162
    %v4956 = vunpack.c.h.b16 %v2162
    %v4957 = vunpack.c.l.b16 %v2163
    %v4958 = vunpack.c.h.b16 %v2163
    %v4959 = vunpack.c.l.b16 %v2164
    %v4960 = vunpack.c.h.b16 %v2164
    %v4961 = vunpack.c.l.b16 %v2165
    %v4962 = vunpack.c.h.b16 %v2165
    %v4963 = vunpack.c.l.b16 %v2166
    %v4964 = vunpack.c.h.b16 %v2166
    %v4965 = vunpack.c.l.b16 %v2167
    %v4966 = vunpack.c.h.b16 %v2167
    %v4967 = vunpack.c.l.b16 %v2168
    %v4968 = vunpack.c.h.b16 %v2168
    %v4969 = vunpack.c.l.b16 %v2169
    %v4970 = vunpack.c.h.b16 %v2169
    %v4971 = vunpack.c.l.b16 %v2170
    %v4972 = vunpack.c.h.b16 %v2170
    %v4973 = vunpack.c.l.b16 %v2171
    %v4974 = vunpack.c.h.b16 %v2171
    %v4975 = vunpack.c.l.b16 %v2172
    %v4976 = vunpack.c.h.b16 %v2172
    %v4977 = vunpack.c.l.b16 %v2173
    %v4978 = vunpack.c.h.b16 %v2173
    %v4979 = vunpack.c.l.b16 %v2174
    %v4980 = vunpack.c.h.b16 %v2174
    %v4981 = vunpack.c.l.b16 %v2175
    %v4982 = vunpack.c.h.b16 %v2175
    %v4983 = vunpack.c.l.b16 %v2176
    %v4984 = vunpack.c.h.b16 %v2176
    %v4985 = vunpack.c.l.b16 %v2177
    %v4986 = vunpack.c.h.b16 %v2177
    %v4987 = vunpack.c.l.b16 %v2178
    %v4988 = vunpack.c.h.b16 %v2178
    %v4989 = vunpack.c.l.b16 %v2179
    %v4990 = vunpack.c.h.b16 %v2179
    %v4991 = vunpack.c.l.b16 %v2180
    %v4992 = vunpack.c.h.b16 %v2180
    %v4993 = vunpack.c.l.b16 %v2181
    %v4994 = vunpack.c.h.b16 %v2181
    %v4995 = vunpack.c.l.b16 %v2182
    %v4996 = vunpack.c.h.b16 %v2182
    %v4997 = vunpack.c.l.b16 %v2183
    %v4998 = vunpack.c.h.b16 %v2183
    %v4999 = vunpack.c.l.b16 %v2184
    %v5000 = vunpack.c.h.b16 %v2184
    %v5001 = vunpack.c.l.b16 %v2185
    %v5002 = vunpack.c.h.b16 %v2185
    %v5003 = vunpack.c.l.b16 %v2186
    %v5004 = vunpack.c.h.b16 %v2186
    %v5005 = vunpack.c.l.b16 %v2187
    %v5006 = vunpack.c.h.b16 %v2187
    %v5007 = vunpack.c.l.b16 %v2188
    %v5008 = vunpack.c.h.b16 %v2188
    %v5009 = vunpack.c.l.b16 %v2189
    %v5010 = vunpack.c.h.b16 %v2189
    %v5011 = vunpack.c.l.b16 %v2190
    %v5012 = vunpack.c.h.b16 %v2190
    %v5013 = vunpack.c.l.b16 %v2191
    %v5014 = vunpack.c.h.b16 %v2191
    %v5015 = vunpack.c.l.b16 %v2192
    %v5016 = vunpack.c.h.b16 %v2192
    %v5017 = vunpack.c.l.b16 %v2193
    %v5018 = vunpack.c.h.b16 %v2193
    %v5019 = vunpack.c.l.b16 %v2194
    %v5020 = vunpack.c.h.b16 %v2194
    %v5021 = vunpack.c.l.b16 %v2195
    %v5022 = vunpack.c.h.b16 %v2195
    %v5023 = vunpack.c.l.b16 %v2196
    %v5024 = vunpack.c.h.b16 %v2196
    %v5025 = vunpack.c.l.b16 %v2197
    %v5026 = vunpack.c.h.b16 %v2197
    %v5027 = vunpack.c.l.b16 %v2198
    %v5028 = vunpack.c.h.b16 %v2198
    %v5029 = vunpack.c.l.b16 %v2199
    %v5030 = vunpack.c.h.b16 %v2199
    %v5031 = vunpack.c.l.b16 %v2200
    %v5032 = vunpack.c.h.b16 %v2200
    %v5033 = vunpack.c.l.b16 %v2201
    %v5034 = vunpack.c.h.b16 %v2201
    %v5035 = vunpack.c.l.b16 %v2202
    %v5036 = vunpack.c.h.b16 %v2202
    %v5037 = vunpack.c.l.b16 %v2203
    %v5038 = vunpack.c.h.b16 %v2203
    %v5039 = vunpack.c.l.b16 %v2204
    %v5040 = vunpack.c.h.b16 %v2204
    %v5041 = vunpack.c.l.b16 %v2205
    %v5042 = vunpack.c.h.b16 %v2205
    %v5043 = vunpack.c.l.b16 %v2206
    %v5044 = vunpack.c.h.b16 %v2206
    %v5045 = vunpack.c.l.b16 %v2207
    %v5046 = vunpack.c.h.b16 %v2207
    %v5047 = vunpack.c.l.b16 %v2208
    %v5048 = vunpack.c.h.b16 %v2208
    %v5049 = vunpack.c.l.b16 %v2209
    %v5050 = vunpack.c.h.b16 %v2209
    %v5051 = vunpack.c.l.b16 %v2210
    %v5052 = vunpack.c.h.b16 %v2210
    %v5053 = vunpack.c.l.b16 %v2211
    %v5054 = vunpack.c.h.b16 %v2211
    %v5055 = vunpack.c.l.b16 %v2212
    %v5056 = vunpack.c.h.b16 %v2212
    %v5057 = vunpack.c.l.b16 %v2213
    %v5058 = vunpack.c.h.b16 %v2213
    %v5059 = vunpack.c.l.b16 %v2214
    %v5060 = vunpack.c.h.b16 %v2214
    %v5061 = vunpack.c.l.b16 %v2215
    %v5062 = vunpack.c.h.b16 %v2215
    %v5063 = vunpack.c.l.b16 %v2216
    %v5064 = vunpack.c.h.b16 %v2216
    %v5065 = vunpack.c.l.b16 %v2217
    %v5066 = vunpack.c.h.b16 %v2217
    %v5067 = vunpack.c.l.b16 %v2218
    %v5068 = vunpack.c.h.b16 %v2218
    %v5069 = vunpack.c.l.b16 %v2219
    %v5070 = vunpack.c.h.b16 %v2219
    %v5071 = vunpack.c.l.b16 %v2220
    %v5072 = vunpack.c.h.b16 %v2220
    %v5073 = vunpack.c.l.b16 %v2221
    %v5074 = vunpack.c.h.b16 %v2221
    %v5075 = vunpack.c.l.b16 %v2222
    %v5076 = vunpack.c.h.b16 %v2222
    %v5077 = vunpack.c.l.b16 %v2223
    %v5078 = vunpack.c.h.b16 %v2223
    %v5079 = vunpack.c.l.b16 %v2224
    %v5080 = vunpack.c.h.b16 %v2224
    %v5081 = vunpack.c.l.b16 %v2225
    %v5082 = vunpack.c.h.b16 %v2225
    %v5083 = vunpack.c.l.b16 %v2226
    %v5084 = vunpack.c.h.b16 %v2226
    %v5085 = vunpack.c.l.b16 %v2227
    %v5086 = vunpack.c.h.b16 %v2227
    %v5087 = vunpack.c.l.b16 %v2228
    %v5088 = vunpack.c.h.b16 %v2228
    %v5089 = vunpack.c.l.b16 %v2229
    %v5090 = vunpack.c.h.b16 %v2229
    %v5091 = vunpack.c.l.b16 %v2230
    %v5092 = vunpack.c.h.b16 %v2230
    %v5093 = vunpack.c.l.b16 %v2231
    %v5094 = vunpack.c.h.b16 %v2231
    %v5095 = vunpack.c.l.b16 %v2232
    %v5096 = vunpack.c.h.b16 %v2232
    %v5097 = vunpack.c.l.b16 %v2233
    %v5098 = vunpack.c.h.b16 %v2233
    %v5099 = vunpack.c.l.b16 %v2234
    %v5100 = vunpack.c.h.b16 %v2234
    %v5101 = vunpack.c.l.b16 %v2235
    %v5102 = vunpack.c.h.b16 %v2235
    %v5103 = vunpack.c.l.b16 %v2236
    %v5104 = vunpack.c.h.b16 %v2236
    %v5105 = vunpack.c.l.b16 %v2237
    %v5106 = vunpack.c.h.b16 %v2237
    %v5107 = vunpack.c.l.b16 %v2238
    %v5108 = vunpack.c.h.b16 %v2238
    %v5109 = vunpack.c.l.b16 %v2239
    %v5110 = vunpack.c.h.b16 %v2239
    %v5111 = vunpack.c.l.b16 %v2240
    %v5112 = vunpack.c.h.b16 %v2240
    %v5113 = vunpack.c.l.b16 %v2241
    %v5114 = vunpack.c.h.b16 %v2241
    %v5115 = vunpack.c.l.b16 %v2242
    %v5116 = vunpack.c.h.b16 %v2242
    %v5117 = vunpack.c.l.b16 %v2243
    %v5118 = vunpack.c.h.b16 %v2243
    %v5119 = vunpack.c.l.b16 %v2244
    %v5120 = vunpack.c.h.b16 %v2244
    %v5121 = vunpack.c.l.b16 %v2245
    %v5122 = vunpack.c.h.b16 %v2245
    %v5123 = vunpack.c.l.b16 %v2246
    %v5124 = vunpack.c.h.b16 %v2246
    %v5125 = vunpack.c.l.b16 %v2247
    %v5126 = vunpack.c.h.b16 %v2247
    %v5127 = vunpack.c.l.b16 %v2248
    %v5128 = vunpack.c.h.b16 %v2248
    %v5129 = vunpack.c.l.b16 %v2249
    %v5130 = vunpack.c.h.b16 %v2249
    %v5131 = vunpack.c.l.b16 %v2250
    %v5132 = vunpack.c.h.b16 %v2250
    %v5133 = vunpack.c.l.b16 %v2251
    %v5134 = vunpack.c.h.b16 %v2251
    %v5135 = vunpack.c.l.b16 %v2252
    %v5136 = vunpack.c.h.b16 %v2252
    %v5137 = vunpack.c.l.b16 %v2253
    %v5138 = vunpack.c.h.b16 %v2253
    %v5139 = vunpack.c.l.b16 %v2254
    %v5140 = vunpack.c.h.b16 %v2254
    %v5141 = vunpack.c.l.b16 %v2255
    %v5142 = vunpack.c.h.b16 %v2255
    %v5143 = vunpack.c.l.b16 %v2256
    %v5144 = vunpack.c.h.b16 %v2256
    %v5145 = vunpack.c.l.b16 %v2257
    %v5146 = vunpack.c.h.b16 %v2257
    %v5147 = vunpack.c.l.b16 %v2258
    %v5148 = vunpack.c.h.b16 %v2258
    %v5149 = vunpack.c.l.b16 %v2259
    %v5150 = vunpack.c.h.b16 %v2259
    %v5151 = vunpack.c.l.b16 %v2260
    %v5152 = vunpack.c.h.b16 %v2260
    %v5153 = vunpack.c.l.b16 %v2261
    %v5154 = vunpack.c.h.b16 %v2261
    %v5155 = vunpack.c.l.b16 %v2262
    %v5156 = vunpack.c.h.b16 %v2262
    %v5157 = vunpack.c.l.b16 %v2263
    %v5158 = vunpack.c.h.b16 %v2263
    %v5159 = vunpack.c.l.b16 %v2264
    %v5160 = vunpack.c.h.b16 %v2264
    %v5161 = vunpack.c.l.b16 %v2265
    %v5162 = vunpack.c.h.b16 %v2265
    %v5163 = vunpack.c.l.b16 %v2266
    %v5164 = vunpack.c.h.b16 %v2266
    %v5165 = vunpack.c.l.b16 %v2267
    %v5166 = vunpack.c.h.b16 %v2267
    %v5167 = vunpack.c.l.b16 %v2268
    %v5168 = vunpack.c.h.b16 %v2268
    %v5169 = vunpack.c.l.b16 %v2269
    %v5170 = vunpack.c.h.b16 %v2269
    %v5171 = vunpack.c.l.b16 %v2270
    %v5172 = vunpack.c.h.b16 %v2270
    %v5173 = vunpack.c.l.b16 %v2271
    %v5174 = vunpack.c.h.b16 %v2271
    %v5175 = vunpack.c.l.b16 %v2272
    %v5176 = vunpack.c.h.b16 %v2272
    %v5177 = vunpack.c.l.b16 %v2273
    %v5178 = vunpack.c.h.b16 %v2273
    %v5179 = vunpack.c.l.b16 %v2274
    %v5180 = vunpack.c.h.b16 %v2274
    %v5181 = vunpack.c.l.b16 %v2275
    %v5182 = vunpack.c.h.b16 %v2275
    %v5183 = vunpack.c.l.b16 %v2276
    %v5184 = vunpack.c.h.b16 %v2276
    %v5185 = vunpack.c.l.b16 %v2277
    %v5186 = vunpack.c.h.b16 %v2277
    %v5187 = vunpack.c.l.b16 %v2278
    %v5188 = vunpack.c.h.b16 %v2278
    %v5189 = vunpack.c.l.b16 %v2279
    %v5190 = vunpack.c.h.b16 %v2279
    %v5191 = vunpack.c.l.b16 %v2280
    %v5192 = vunpack.c.h.b16 %v2280
    %v5193 = vunpack.c.l.b16 %v2281
    %v5194 = vunpack.c.h.b16 %v2281
    %v5195 = vunpack.c.l.b16 %v2282
    %v5196 = vunpack.c.h.b16 %v2282
    %v5197 = vunpack.c.l.b16 %v2283
    %v5198 = vunpack.c.h.b16 %v2283
    %v5199 = vunpack.c.l.b16 %v2284
    %v5200 = vunpack.c.h.b16 %v2284
    %v5201 = vunpack.c.l.b16 %v2285
    %v5202 = vunpack.c.h.b16 %v2285
    %v5203 = vunpack.c.l.b16 %v2286
    %v5204 = vunpack.c.h.b16 %v2286
    %v5205 = vunpack.c.l.b16 %v2287
    %v5206 = vunpack.c.h.b16 %v2287
    %v5207 = vunpack.c.l.b16 %v2288
    %v5208 = vunpack.c.h.b16 %v2288
    %v5209 = vunpack.c.l.b16 %v2289
    %v5210 = vunpack.c.h.b16 %v2289
    %v5211 = vunpack.c.l.b16 %v2290
    %v5212 = vunpack.c.h.b16 %v2290
    %v5213 = vunpack.c.l.b16 %v2291
    %v5214 = vunpack.c.h.b16 %v2291
    %v5215 = vunpack.c.l.b16 %v2292
    %v5216 = vunpack.c.h.b16 %v2292
    %v5217 = vunpack.c.l.b16 %v2293
    %v5218 = vunpack.c.h.b16 %v2293
    %v5219 = vunpack.c.l.b16 %v2294
    %v5220 = vunpack.c.h.b16 %v2294
    %v5221 = vunpack.c.l.b16 %v2295
    %v5222 = vunpack.c.h.b16 %v2295
    %v5223 = vunpack.c.l.b16 %v2296
    %v5224 = vunpack.c.h.b16 %v2296
    %v5225 = vunpack.c.l.b16 %v2297
    %v5226 = vunpack.c.h.b16 %v2297
    %v5227 = vunpack.c.l.b16 %v2298
    %v5228 = vunpack.c.h.b16 %v2298
    %v5229 = vunpack.c.l.b16 %v2299
    %v5230 = vunpack.c.h.b16 %v2299
    %v5231 = vunpack.c.l.b16 %v2300
    %v5232 = vunpack.c.h.b16 %v2300
    %v5233 = vunpack.c.l.b16 %v2301
    %v5234 = vunpack.c.h.b16 %v2301
    %v5235 = vunpack.c.l.b16 %v2302
    %v5236 = vunpack.c.h.b16 %v2302
    %v5237 = vunpack.c.l.b16 %v2303
    %v5238 = vunpack.c.h.b16 %v2303
    %v5239 = vunpack.c.l.b16 %v2304
    %v5240 = vunpack.c.h.b16 %v2304
    %v5241 = vunpack.c.l.b16 %v2305
    %v5242 = vunpack.c.h.b16 %v2305
    %v5243 = vunpack.c.l.b16 %v2306
    %v5244 = vunpack.c.h.b16 %v2306
    %v5245 = vunpack.c.l.b16 %v2307
    %v5246 = vunpack.c.h.b16 %v2307
    %v5247 = vunpack.c.l.b16 %v2308
    %v5248 = vunpack.c.h.b16 %v2308
    %v5249 = vunpack.c.l.b16 %v2309
    %v5250 = vunpack.c.h.b16 %v2309
    %v5251 = vunpack.c.l.b16 %v2310
    %v5252 = vunpack.c.h.b16 %v2310
    %v5253 = vunpack.c.l.b16 %v2311
    %v5254 = vunpack.c.h.b16 %v2311
    %v5255 = vunpack.c.l.b16 %v2312
    %v5256 = vunpack.c.h.b16 %v2312
    %v5257 = vunpack.c.l.b16 %v2313
    %v5258 = vunpack.c.h.b16 %v2313
    %v5259 = vunpack.c.l.b16 %v2314
    %v5260 = vunpack.c.h.b16 %v2314
    %v5261 = vunpack.c.l.b16 %v2315
    %v5262 = vunpack.c.h.b16 %v2315
    %v5263 = vunpack.c.l.b16 %v2316
    %v5264 = vunpack.c.h.b16 %v2316
    %v5265 = vunpack.c.l.b16 %v2317
    %v5266 = vunpack.c.h.b16 %v2317
    %v5267 = vunpack.c.l.b16 %v2318
    %v5268 = vunpack.c.h.b16 %v2318
    %v5269 = vunpack.c.l.b16 %v2319
    %v5270 = vunpack.c.h.b16 %v2319
    %v5271 = vunpack.c.l.b16 %v2320
    %v5272 = vunpack.c.h.b16 %v2320
    %v5273 = vunpack.c.l.b16 %v2321
    %v5274 = vunpack.c.h.b16 %v2321
    %v5275 = vunpack.c.l.b16 %v2322
    %v5276 = vunpack.c.h.b16 %v2322
    %v5277 = vunpack.c.l.b16 %v2323
    %v5278 = vunpack.c.h.b16 %v2323
    %v5279 = vunpack.c.l.b16 %v2324
    %v5280 = vunpack.c.h.b16 %v2324
    %v5281 = vunpack.c.l.b16 %v2325
    %v5282 = vunpack.c.h.b16 %v2325
    %v5283 = vunpack.c.l.b16 %v2326
    %v5284 = vunpack.c.h.b16 %v2326
    %v5285 = vunpack.c.l.b16 %v2327
    %v5286 = vunpack.c.h.b16 %v2327
    %v5287 = vunpack.c.l.b16 %v2328
    %v5288 = vunpack.c.h.b16 %v2328
    %v5289 = vunpack.c.l.b16 %v2329
    %v5290 = vunpack.c.h.b16 %v2329
    %v5291 = vunpack.c.l.b16 %v2330
    %v5292 = vunpack.c.h.b16 %v2330
    %v5293 = vunpack.c.l.b16 %v2331
    %v5294 = vunpack.c.h.b16 %v2331
    %v5295 = vunpack.c.l.b16 %v2332
    %v5296 = vunpack.c.h.b16 %v2332
    %v5297 = vunpack.c.l.b16 %v2333
    %v5298 = vunpack.c.h.b16 %v2333
    %v5299 = vunpack.c.l.b16 %v2334
    %v5300 = vunpack.c.h.b16 %v2334
    %v5301 = vunpack.c.l.b16 %v2335
    %v5302 = vunpack.c.h.b16 %v2335
    %v5303 = vunpack.c.l.b16 %v2336
    %v5304 = vunpack.c.h.b16 %v2336
    %v5305 = vunpack.c.l.b16 %v2337
    %v5306 = vunpack.c.h.b16 %v2337
    %v5307 = vunpack.c.l.b16 %v2338
    %v5308 = vunpack.c.h.b16 %v2338
    %v5309 = vunpack.c.l.b16 %v2339
    %v5310 = vunpack.c.h.b16 %v2339
    %v5311 = vunpack.c.l.b16 %v2340
    %v5312 = vunpack.c.h.b16 %v2340
    %v5313 = vunpack.c.l.b16 %v2341
    %v5314 = vunpack.c.h.b16 %v2341
    %v5315 = vunpack.c.l.b16 %v2342
    %v5316 = vunpack.c.h.b16 %v2342
    %v5317 = vunpack.c.l.b16 %v2343
    %v5318 = vunpack.c.h.b16 %v2343
    %v5319 = vunpack.c.l.b16 %v2344
    %v5320 = vunpack.c.h.b16 %v2344
    %v5321 = vunpack.c.l.b16 %v2345
    %v5322 = vunpack.c.h.b16 %v2345
    %v5323 = vunpack.c.l.b16 %v2346
    %v5324 = vunpack.c.h.b16 %v2346
    %v5325 = vunpack.c.l.b16 %v2347
    %v5326 = vunpack.c.h.b16 %v2347
    %v5327 = vunpack.c.l.b16 %v2348
    %v5328 = vunpack.c.h.b16 %v2348
    %v5329 = vunpack.c.l.b16 %v2349
    %v5330 = vunpack.c.h.b16 %v2349
    %v5331 = vunpack.c.l.b16 %v2350
    %v5332 = vunpack.c.h.b16 %v2350
    %v5333 = vunpack.c.l.b16 %v2351
    %v5334 = vunpack.c.h.b16 %v2351
    %v5335 = vunpack.c.l.b16 %v2352
    %v5336 = vunpack.c.h.b16 %v2352
    %v5337 = vunpack.c.l.b16 %v2353
    %v5338 = vunpack.c.h.b16 %v2353
    %v5339 = vunpack.c.l.b16 %v2354
    %v5340 = vunpack.c.h.b16 %v2354
    %v5341 = vunpack.c.l.b16 %v2355
    %v5342 = vunpack.c.h.b16 %v2355
    %v5343 = vunpack.c.l.b16 %v2356
    %v5344 = vunpack.c.h.b16 %v2356
    %v5345 = vunpack.c.l.b16 %v2357
    %v5346 = vunpack.c.h.b16 %v2357
    %v5347 = vunpack.c.l.b16 %v2358
    %v5348 = vunpack.c.h.b16 %v2358
    %v5349 = vunpack.c.l.b16 %v2359
    %v5350 = vunpack.c.h.b16 %v2359
    %v5351 = vunpack.c.l.b16 %v2360
    %v5352 = vunpack.c.h.b16 %v2360
    %v5353 = vunpack.c.l.b16 %v2361
    %v5354 = vunpack.c.h.b16 %v2361
    %v5355 = vunpack.c.l.b16 %v2362
    %v5356 = vunpack.c.h.b16 %v2362
    %v5357 = vunpack.c.l.b16 %v2363
    %v5358 = vunpack.c.h.b16 %v2363
    %v5359 = vunpack.c.l.b16 %v2364
    %v5360 = vunpack.c.h.b16 %v2364
    %v5361 = vunpack.c.l.b16 %v2365
    %v5362 = vunpack.c.h.b16 %v2365
    %v5363 = vunpack.c.l.b16 %v2366
    %v5364 = vunpack.c.h.b16 %v2366
    %v5365 = vunpack.c.l.b16 %v2367
    %v5366 = vunpack.c.h.b16 %v2367
    %v5367 = vunpack.c.l.b16 %v2368
    %v5368 = vunpack.c.h.b16 %v2368
    %v5369 = vunpack.c.l.b16 %v2369
    %v5370 = vunpack.c.h.b16 %v2369
    %v5371 = vunpack.c.l.b16 %v2370
    %v5372 = vunpack.c.h.b16 %v2370
    %v5373 = vunpack.c.l.b16 %v2371
    %v5374 = vunpack.c.h.b16 %v2371
    %v5375 = vunpack.c.l.b16 %v2372
    %v5376 = vunpack.c.h.b16 %v2372
    %v5377 = vunpack.c.l.b16 %v2373
    %v5378 = vunpack.c.h.b16 %v2373
    %v5379 = vunpack.c.l.b16 %v2374
    %v5380 = vunpack.c.h.b16 %v2374
    %v5381 = vunpack.c.l.b16 %v2375
    %v5382 = vunpack.c.h.b16 %v2375
    %v5383 = vunpack.c.l.b16 %v2376
    %v5384 = vunpack.c.h.b16 %v2376
    %v5385 = vunpack.c.l.b16 %v2377
    %v5386 = vunpack.c.h.b16 %v2377
    %v5387 = vunpack.c.l.b16 %v2378
    %v5388 = vunpack.c.h.b16 %v2378
    %v5389 = vunpack.c.l.b16 %v2379
    %v5390 = vunpack.c.h.b16 %v2379
    %v5391 = vunpack.c.l.b16 %v2380
    %v5392 = vunpack.c.h.b16 %v2380
    %v5393 = vunpack.c.l.b16 %v2381
    %v5394 = vunpack.c.h.b16 %v2381
    %v5395 = vunpack.c.l.b16 %v2382
    %v5396 = vunpack.c.h.b16 %v2382
    %v5397 = vunpack.c.l.b16 %v2383
    %v5398 = vunpack.c.h.b16 %v2383
    %v5399 = vunpack.c.l.b16 %v2384
    %v5400 = vunpack.c.h.b16 %v2384
    %v5401 = vunpack.c.l.b16 %v2385
    %v5402 = vunpack.c.h.b16 %v2385
    %v5403 = vunpack.c.l.b16 %v2386
    %v5404 = vunpack.c.h.b16 %v2386
    %v5405 = vunpack.c.l.b16 %v2387
    %v5406 = vunpack.c.h.b16 %v2387
    %v5407 = vunpack.c.l.b16 %v2388
    %v5408 = vunpack.c.h.b16 %v2388
    %v5409 = vunpack.c.l.b16 %v2389
    %v5410 = vunpack.c.h.b16 %v2389
    %v5411 = vunpack.c.l.b16 %v2390
    %v5412 = vunpack.c.h.b16 %v2390
    %v5413 = vunpack.c.l.b16 %v2391
    %v5414 = vunpack.c.h.b16 %v2391
    %v5415 = vunpack.c.l.b16 %v2392
    %v5416 = vunpack.c.h.b16 %v2392
    %v5417 = vunpack.c.l.b16 %v2393
    %v5418 = vunpack.c.h.b16 %v2393
    %v5419 = vunpack.c.l.b16 %v2394
    %v5420 = vunpack.c.h.b16 %v2394
    %v5421 = vunpack.c.l.b16 %v2395
    %v5422 = vunpack.c.h.b16 %v2395
    %v5423 = vunpack.c.l.b16 %v2396
    %v5424 = vunpack.c.h.b16 %v2396
    %v5425 = vunpack.c.l.b16 %v2397
    %v5426 = vunpack.c.h.b16 %v2397
    %v5427 = vunpack.c.l.b16 %v2398
    %v5428 = vunpack.c.h.b16 %v2398
    %v5429 = vunpack.c.l.b16 %v2399
    %v5430 = vunpack.c.h.b16 %v2399
    %v5431 = vunpack.c.l.b16 %v2400
    %v5432 = vunpack.c.h.b16 %v2400
    %v5433 = vunpack.c.l.b16 %v2401
    %v5434 = vunpack.c.h.b16 %v2401
    %v5435 = vunpack.c.l.b16 %v2402
    %v5436 = vunpack.c.h.b16 %v2402
    %v5437 = vunpack.c.l.b16 %v2403
    %v5438 = vunpack.c.h.b16 %v2403
    %v5439 = vunpack.c.l.b16 %v2404
    %v5440 = vunpack.c.h.b16 %v2404
    %v5441 = vunpack.c.l.b16 %v2405
    %v5442 = vunpack.c.h.b16 %v2405
    %v5443 = vunpack.c.l.b16 %v2406
    %v5444 = vunpack.c.h.b16 %v2406
    %v5445 = vunpack.c.l.b16 %v2407
    %v5446 = vunpack.c.h.b16 %v2407
    %v5447 = vunpack.c.l.b16 %v2408
    %v5448 = vunpack.c.h.b16 %v2408
    %v5449 = vunpack.c.l.b16 %v2409
    %v5450 = vunpack.c.h.b16 %v2409
    %v5451 = vunpack.c.l.b16 %v2410
    %v5452 = vunpack.c.h.b16 %v2410
    %v5453 = vunpack.c.l.b16 %v2411
    %v5454 = vunpack.c.h.b16 %v2411
    %v5455 = vunpack.c.l.b16 %v2412
    %v5456 = vunpack.c.h.b16 %v2412
    %v5457 = vunpack.c.l.b16 %v2413
    %v5458 = vunpack.c.h.b16 %v2413
    %v5459 = vunpack.c.l.b16 %v2414
    %v5460 = vunpack.c.h.b16 %v2414
    %v5461 = vunpack.c.l.b16 %v2415
    %v5462 = vunpack.c.h.b16 %v2415
    %v5463 = vunpack.c.l.b16 %v2416
    %v5464 = vunpack.c.h.b16 %v2416
    %v5465 = vunpack.c.l.b16 %v2417
    %v5466 = vunpack.c.h.b16 %v2417
    %v5467 = vunpack.c.l.b16 %v2418
    %v5468 = vunpack.c.h.b16 %v2418
    %v5469 = vunpack.c.l.b16 %v2419
    %v5470 = vunpack.c.h.b16 %v2419
    %v5471 = vunpack.c.l.b16 %v2420
    %v5472 = vunpack.c.h.b16 %v2420
    %v5473 = vunpack.c.l.b16 %v2421
    %v5474 = vunpack.c.h.b16 %v2421
    %v5475 = vunpack.c.l.b16 %v2422
    %v5476 = vunpack.c.h.b16 %v2422
    %v5477 = vunpack.c.l.b16 %v2423
    %v5478 = vunpack.c.h.b16 %v2423
    %v5479 = vunpack.c.l.b16 %v2424
    %v5480 = vunpack.c.h.b16 %v2424
    %v5481 = vunpack.c.l.b16 %v2425
    %v5482 = vunpack.c.h.b16 %v2425
    %v5483 = vunpack.c.l.b16 %v2426
    %v5484 = vunpack.c.h.b16 %v2426
    %v5485 = vunpack.c.l.b16 %v2427
    %v5486 = vunpack.c.h.b16 %v2427
    %v5487 = vunpack.c.l.b16 %v2428
    %v5488 = vunpack.c.h.b16 %v2428
    %v5489 = vunpack.c.l.b16 %v2429
    %v5490 = vunpack.c.h.b16 %v2429
    %v5491 = vunpack.c.l.b16 %v2430
    %v5492 = vunpack.c.h.b16 %v2430
    %v5493 = vunpack.c.l.b16 %v2431
    %v5494 = vunpack.c.h.b16 %v2431
    %v5495 = vunpack.c.l.b16 %v2432
    %v5496 = vunpack.c.h.b16 %v2432
    %v5497 = vunpack.c.l.b16 %v2433
    %v5498 = vunpack.c.h.b16 %v2433
    %v5499 = vunpack.c.l.b16 %v2434
    %v5500 = vunpack.c.h.b16 %v2434
    %v5501 = vunpack.c.l.b16 %v2435
    %v5502 = vunpack.c.h.b16 %v2435
    %v5503 = vunpack.c.l.b16 %v2436
    %v5504 = vunpack.c.h.b16 %v2436
    %v5505 = vunpack.c.l.b16 %v2437
    %v5506 = vunpack.c.h.b16 %v2437
    %v5507 = vunpack.c.l.b16 %v2438
    %v5508 = vunpack.c.h.b16 %v2438
    %v5509 = vunpack.c.l.b16 %v2439
    %v5510 = vunpack.c.h.b16 %v2439
    %v5511 = vunpack.c.l.b16 %v2440
    %v5512 = vunpack.c.h.b16 %v2440
    %v5513 = vunpack.c.l.b16 %v2441
    %v5514 = vunpack.c.h.b16 %v2441
    %v5515 = vunpack.c.l.b16 %v2442
    %v5516 = vunpack.c.h.b16 %v2442
    %v5517 = vunpack.c.l.b16 %v2443
    %v5518 = vunpack.c.h.b16 %v2443
    %v5519 = vunpack.c.l.b16 %v2444
    %v5520 = vunpack.c.h.b16 %v2444
    %v5521 = vunpack.c.l.b16 %v2445
    %v5522 = vunpack.c.h.b16 %v2445
    %v5523 = vunpack.c.l.b16 %v2446
    %v5524 = vunpack.c.h.b16 %v2446
    %v5525 = vunpack.c.l.b16 %v2447
    %v5526 = vunpack.c.h.b16 %v2447
    %v5527 = vunpack.c.l.b16 %v2448
    %v5528 = vunpack.c.h.b16 %v2448
    %v5529 = vunpack.c.l.b16 %v2449
    %v5530 = vunpack.c.h.b16 %v2449
    %v5531 = vunpack.c.l.b16 %v2450
    %v5532 = vunpack.c.h.b16 %v2450
    %v5533 = vunpack.c.l.b16 %v2451
    %v5534 = vunpack.c.h.b16 %v2451
    %v5535 = vunpack.c.l.b16 %v2452
    %v5536 = vunpack.c.h.b16 %v2452
    %v5537 = vunpack.c.l.b16 %v2453
    %v5538 = vunpack.c.h.b16 %v2453
    %v5539 = vunpack.c.l.b16 %v2454
    %v5540 = vunpack.c.h.b16 %v2454
    %v5541 = vunpack.c.l.b16 %v2455
    %v5542 = vunpack.c.h.b16 %v2455
    %v5543 = vunpack.c.l.b16 %v2456
    %v5544 = vunpack.c.h.b16 %v2456
    %v5545 = vunpack.c.l.b16 %v2457
    %v5546 = vunpack.c.h.b16 %v2457
    %v5547 = vunpack.c.l.b16 %v2458
    %v5548 = vunpack.c.h.b16 %v2458
    %v5549 = vunpack.c.l.b16 %v2459
    %v5550 = vunpack.c.h.b16 %v2459
    %v5551 = vunpack.c.l.b16 %v2460
    %v5552 = vunpack.c.h.b16 %v2460
    %v5553 = vunpack.c.l.b16 %v2461
    %v5554 = vunpack.c.h.b16 %v2461
    %v5555 = vunpack.c.l.b16 %v2462
    %v5556 = vunpack.c.h.b16 %v2462
    %v5557 = vunpack.c.l.b16 %v2463
    %v5558 = vunpack.c.h.b16 %v2463
    %v5559 = vunpack.c.l.b16 %v2464
    %v5560 = vunpack.c.h.b16 %v2464
    %v5561 = vunpack.c.l.b16 %v2465
    %v5562 = vunpack.c.h.b16 %v2465
    %v5563 = vunpack.c.l.b16 %v2466
    %v5564 = vunpack.c.h.b16 %v2466
    %v5565 = vunpack.c.l.b16 %v2467
    %v5566 = vunpack.c.h.b16 %v2467
    %v5567 = vunpack.c.l.b16 %v2468
    %v5568 = vunpack.c.h.b16 %v2468
    %v5569 = vunpack.c.l.b16 %v2469
    %v5570 = vunpack.c.h.b16 %v2469
    %v5571 = vunpack.c.l.b16 %v2470
    %v5572 = vunpack.c.h.b16 %v2470
    %v5573 = vunpack.c.l.b16 %v2471
    %v5574 = vunpack.c.h.b16 %v2471
    %v5575 = vunpack.c.l.b16 %v2472
    %v5576 = vunpack.c.h.b16 %v2472
    %v5577 = vunpack.c.l.b16 %v2473
    %v5578 = vunpack.c.h.b16 %v2473
    %v5579 = vpack.c.b16 %v4943, %v4939
    %v5580 = vpack.c.b16 %v4944, %v4940
    %v5581 = vpack.c.b16 %v4945, %v4941
    %v5582 = vpack.c.b16 %v4946, %v4942
    %v5583 = vpack.c.b16 %v4951, %v4947
    %v5584 = vpack.c.b16 %v4952, %v4948
    %v5585 = vpack.c.b16 %v4953, %v4949
    %v5586 = vpack.c.b16 %v4954, %v4950
    %v5587 = vpack.c.b16 %v4959, %v4955
    %v5588 = vpack.c.b16 %v4960, %v4956
    %v5589 = vpack.c.b16 %v4961, %v4957
    %v5590 = vpack.c.b16 %v4962, %v4958
    %v5591 = vpack.c.b16 %v4967, %v4963
    %v5592 = vpack.c.b16 %v4968, %v4964
    %v5593 = vpack.c.b16 %v4969, %v4965
    %v5594 = vpack.c.b16 %v4970, %v4966
    %v5595 = vpack.c.b16 %v4975, %v4971
    %v5596 = vpack.c.b16 %v4976, %v4972
    %v5597 = vpack.c.b16 %v4977, %v4973
    %v5598 = vpack.c.b16 %v4978, %v4974
    %v5599 = vpack.c.b16 %v4983, %v4979
    %v5600 = vpack.c.b16 %v4984, %v4980
    %v5601 = vpack.c.b16 %v4985, %v4981
    %v5602 = vpack.c.b16 %v4986, %v4982
    %v5603 = vpack.c.b16 %v4991, %v4987
    %v5604 = vpack.c.b16 %v4992, %v4988
    %v5605 = vpack.c.b16 %v4993, %v4989
    %v5606 = vpack.c.b16 %v4994, %v4990
    %v5607 = vpack.c.b16 %v4999, %v4995
    %v5608 = vpack.c.b16 %v5000, %v4996
    %v5609 = vpack.c.b16 %v5001, %v4997
    %v5610 = vpack.c.b16 %v5002, %v4998
    %v5611 = vpack.c.b16 %v5007, %v5003
    %v5612 = vpack.c.b16 %v5008, %v5004
    %v5613 = vpack.c.b16 %v5009, %v5005
    %v5614 = vpack.c.b16 %v5010, %v5006
    %v5615 = vpack.c.b16 %v5015, %v5011
    %v5616 = vpack.c.b16 %v5016, %v5012
    %v5617 = vpack.c.b16 %v5017, %v5013
    %v5618 = vpack.c.b16 %v5018, %v5014
    %v5619 = vpack.c.b16 %v5023, %v5019
    %v5620 = vpack.c.b16 %v5024, %v5020
    %v5621 = vpack.c.b16 %v5025, %v5021
    %v5622 = vpack.c.b16 %v5026, %v5022
    %v5623 = vpack.c.b16 %v5031, %v5027
    %v5624 = vpack.c.b16 %v5032, %v5028
    %v5625 = vpack.c.b16 %v5033, %v5029
    %v5626 = vpack.c.b16 %v5034, %v5030
    %v5627 = vpack.c.b16 %v5039, %v5035
    %v5628 = vpack.c.b16 %v5040, %v5036
    %v5629 = vpack.c.b16 %v5041, %v5037
    %v5630 = vpack.c.b16 %v5042, %v5038
    %v5631 = vpack.c.b16 %v5047, %v5043
    %v5632 = vpack.c.b16 %v5048, %v5044
    %v5633 = vpack.c.b16 %v5049, %v5045
    %v5634 = vpack.c.b16 %v5050, %v5046
    %v5635 = vpack.c.b16 %v5055, %v5051
    %v5636 = vpack.c.b16 %v5056, %v5052
    %v5637 = vpack.c.b16 %v5057, %v5053
    %v5638 = vpack.c.b16 %v5058, %v5054
    %v5639 = vpack.c.b16 %v5063, %v5059
    %v5640 = vpack.c.b16 %v5064, %v5060
    %v5641 = vpack.c.b16 %v5065, %v5061
    %v5642 = vpack.c.b16 %v5066, %v5062
    %v5643 = vpack.c.b16 %v5071, %v5067
    %v5644 = vpack.c.b16 %v5072, %v5068
    %v5645 = vpack.c.b16 %v5073, %v5069
    %v5646 = vpack.c.b16 %v5074, %v5070
    %v5647 = vpack.c.b16 %v5079, %v5075
    %v5648 = vpack.c.b16 %v5080, %v5076
    %v5649 = vpack.c.b16 %v5081, %v5077
    %v5650 = vpack.c.b16 %v5082, %v5078
    %v5651 = vpack.c.b16 %v5087, %v5083
    %v5652 = vpack.c.b16 %v5088, %v5084
    %v5653 = vpack.c.b16 %v5089, %v5085
    %v5654 = vpack.c.b16 %v5090, %v5086
    %v5655 = vpack.c.b16 %v5095, %v5091
    %v5656 = vpack.c.b16 %v5096, %v5092
    %v5657 = vpack.c.b16 %v5097, %v5093
    %v5658 = vpack.c.b16 %v5098, %v5094
    %v5659 = vpack.c.b16 %v5103, %v5099
    %v5660 = vpack.c.b16 %v5104, %v5100
    %v5661 = vpack.c.b16 %v5105, %v5101
    %v5662 = vpack.c.b16 %v5106, %v5102
    %v5663 = vpack.c.b16 %v5111, %v5107
    %v5664 = vpack.c.b16 %v5112, %v5108
    %v5665 = vpack.c.b16 %v5113, %v5109
    %v5666 = vpack.c.b16 %v5114, %v5110
    %v5667 = vpack.c.b16 %v5119, %v5115
    %v5668 = vpack.c.b16 %v5120, %v5116
    %v5669 = vpack.c.b16 %v5121, %v5117
    %v5670 = vpack.c.b16 %v5122, %v5118
    %v5671 = vpack.c.b16 %v5127, %v5123
    %v5672 = vpack.c.b16 %v5128, %v5124
    %v5673 = vpack.c.b16 %v5129, %v5125
    %v5674 = vpack.c.b16 %v5130, %v5126
    %v5675 = vpack.c.b16 %v5135, %v5131
    %v5676 = vpack.c.b16 %v5136, %v5132
    %v5677 = vpack.c.b16 %v5137, %v5133
    %v5678 = vpack.c.b16 %v5138, %v5134
    %v5679 = vpack.c.b16 %v5143, %v5139
    %v5680 = vpack.c.b16 %v5144, %v5140
    %v5681 = vpack.c.b16 %v5145, %v5141
    %v5682 = vpack.c.b16 %v5146, %v5142
    %v5683 = vpack.c.b16 %v5151, %v5147
    %v5684 = vpack.c.b16 %v5152, %v5148
    %v5685 = vpack.c.b16 %v5153, %v5149
    %v5686 = vpack.c.b16 %v5154, %v5150
    %v5687 = vpack.c.b16 %v5159, %v5155
    %v5688 = vpack.c.b16 %v5160, %v5156
    %v5689 = vpack.c.b16 %v5161, %v5157
    %v5690 = vpack.c.b16 %v5162, %v5158
    %v5691 = vpack.c.b16 %v5167, %v5163
    %v5692 = vpack.c.b16 %v5168, %v5164
    %v5693 = vpack.c.b16 %v5169, %v5165
    %v5694 = vpack.c.b16 %v5170, %v5166
    %v5695 = vpack.c.b16 %v5175, %v5171
    %v5696 = vpack.c.b16 %v5176, %v5172
    %v5697 = vpack.c.b16 %v5177, %v5173
    %v5698 = vpack.c.b16 %v5178, %v5174
    %v5699 = vpack.c.b16 %v5183, %v5179
    %v5700 = vpack.c.b16 %v5184, %v5180
    %v5701 = vpack.c.b16 %v5185, %v5181
    %v5702 = vpack.c.b16 %v5186, %v5182
    %v5703 = vpack.c.b16 %v5191, %v5187
    %v5704 = vpack.c.b16 %v5192, %v5188
    %v5705 = vpack.c.b16 %v5193, %v5189
    %v5706 = vpack.c.b16 %v5194, %v5190
    %v5707 = vpack.c.b16 %v5199, %v5195
    %v5708 = vpack.c.b16 %v5200, %v5196
    %v5709 = vpack.c.b16 %v5201, %v5197
    %v5710 = vpack.c.b16 %v5202, %v5198
    %v5711 = vpack.c.b16 %v5207, %v5203
    %v5712 = vpack.c.b16 %v5208, %v5204
    %v5713 = vpack.c.b16 %v5209, %v5205
    %v5714 = vpack.c.b16 %v5210, %v5206
    %v5715 = vpack.c.b16 %v5215, %v5211
    %v5716 = vpack.c.b16 %v5216, %v5212
    %v5717 = vpack.c.b16 %v5217, %v5213
    %v5718 = vpack.c.b16 %v5218, %v5214
    %v5719 = vpack.c.b16 %v5223, %v5219
    %v5720 = vpack.c.b16 %v5224, %v5220
    %v5721 = vpack.c.b16 %v5225, %v5221
    %v5722 = vpack.c.b16 %v5226, %v5222
    %v5723 = vpack.c.b16 %v5231, %v5227
    %v5724 = vpack.c.b16 %v5232, %v5228
    %v5725 = vpack.c.b16 %v5233, %v5229
    %v5726 = vpack.c.b16 %v5234, %v5230
    %v5727 = vpack.c.b16 %v5239, %v5235
    %v5728 = vpack.c.b16 %v5240, %v5236
    %v5729 = vpack.c.b16 %v5241, %v5237
    %v5730 = vpack.c.b16 %v5242, %v5238
    %v5731 = vpack.c.b16 %v5247, %v5243
    %v5732 = vpack.c.b16 %v5248, %v5244
    %v5733 = vpack.c.b16 %v5249, %v5245
    %v5734 = vpack.c.b16 %v5250, %v5246
    %v5735 = vpack.c.b16 %v5255, %v5251
    %v5736 = vpack.c.b16 %v5256, %v5252
    %v5737 = vpack.c.b16 %v5257, %v5253
    %v5738 = vpack.c.b16 %v5258, %v5254
    %v5739 = vpack.c.b16 %v5263, %v5259
    %v5740 = vpack.c.b16 %v5264, %v5260
    %v5741 = vpack.c.b16 %v5265, %v5261
    %v5742 = vpack.c.b16 %v5266, %v5262
    %v5743 = vpack.c.b16 %v5271, %v5267
    %v5744 = vpack.c.b16 %v5272, %v5268
    %v5745 = vpack.c.b16 %v5273, %v5269
    %v5746 = vpack.c.b16 %v5274, %v5270
    %v5747 = vpack.c.b16 %v5279, %v5275
    %v5748 = vpack.c.b16 %v5280, %v5276
    %v5749 = vpack.c.b16 %v5281, %v5277
    %v5750 = vpack.c.b16 %v5282, %v5278
    %v5751 = vpack.c.b16 %v5287, %v5283
    %v5752 = vpack.c.b16 %v5288, %v5284
    %v5753 = vpack.c.b16 %v5289, %v5285
    %v5754 = vpack.c.b16 %v5290, %v5286
    %v5755 = vpack.c.b16 %v5295, %v5291
    %v5756 = vpack.c.b16 %v5296, %v5292
    %v5757 = vpack.c.b16 %v5297, %v5293
    %v5758 = vpack.c.b16 %v5298, %v5294
    %v5759 = vpack.c.b16 %v5303, %v5299
    %v5760 = vpack.c.b16 %v5304, %v5300
    %v5761 = vpack.c.b16 %v5305, %v5301
    %v5762 = vpack.c.b16 %v5306, %v5302
    %v5763 = vpack.c.b16 %v5311, %v5307
    %v5764 = vpack.c.b16 %v5312, %v5308
    %v5765 = vpack.c.b16 %v5313, %v5309
    %v5766 = vpack.c.b16 %v5314, %v5310
    %v5767 = vpack.c.b16 %v5319, %v5315
    %v5768 = vpack.c.b16 %v5320, %v5316
    %v5769 = vpack.c.b16 %v5321, %v5317
    %v5770 = vpack.c.b16 %v5322, %v5318
    %v5771 = vpack.c.b16 %v5327, %v5323
    %v5772 = vpack.c.b16 %v5328, %v5324
    %v5773 = vpack.c.b16 %v5329, %v5325
    %v5774 = vpack.c.b16 %v5330, %v5326
    %v5775 = vpack.c.b16 %v5335, %v5331
    %v5776 = vpack.c.b16 %v5336, %v5332
    %v5777 = vpack.c.b16 %v5337, %v5333
    %v5778 = vpack.c.b16 %v5338, %v5334
    %v5779 = vpack.c.b16 %v5343, %v5339
    %v5780 = vpack.c.b16 %v5344, %v5340
    %v5781 = vpack.c.b16 %v5345, %v5341
    %v5782 = vpack.c.b16 %v5346, %v5342
    %v5783 = vpack.c.b16 %v5351, %v5347
    %v5784 = vpack.c.b16 %v5352, %v5348
    %v5785 = vpack.c.b16 %v5353, %v5349
    %v5786 = vpack.c.b16 %v5354, %v5350
    %v5787 = vpack.c.b16 %v5359, %v5355
    %v5788 = vpack.c.b16 %v5360, %v5356
    %v5789 = vpack.c.b16 %v5361, %v5357
    %v5790 = vpack.c.b16 %v5362, %v5358
    %v5791 = vpack.c.b16 %v5367, %v5363
    %v5792 = vpack.c.b16 %v5368, %v5364
    %v5793 = vpack.c.b16 %v5369, %v5365
    %v5794 = vpack.c.b16 %v5370, %v5366
    %v5795 = vpack.c.b16 %v5375, %v5371
    %v5796 = vpack.c.b16 %v5376, %v5372
    %v5797 = vpack.c.b16 %v5377, %v5373
    %v5798 = vpack.c.b16 %v5378, %v5374
    %v5799 = vpack.c.b16 %v5383, %v5379
    %v5800 = vpack.c.b16 %v5384, %v5380
    %v5801 = vpack.c.b16 %v5385, %v5381
    %v5802 = vpack.c.b16 %v5386, %v5382
    %v5803 = vpack.c.b16 %v5391, %v5387
    %v5804 = vpack.c.b16 %v5392, %v5388
    %v5805 = vpack.c.b16 %v5393, %v5389
    %v5806 = vpack.c.b16 %v5394, %v5390
    %v5807 = vpack.c.b16 %v5399, %v5395
    %v5808 = vpack.c.b16 %v5400, %v5396
    %v5809 = vpack.c.b16 %v5401, %v5397
    %v5810 = vpack.c.b16 %v5402, %v5398
    %v5811 = vpack.c.b16 %v5407, %v5403
    %v5812 = vpack.c.b16 %v5408, %v5404
    %v5813 = vpack.c.b16 %v5409, %v5405
    %v5814 = vpack.c.b16 %v5410, %v5406
    %v5815 = vpack.c.b16 %v5415, %v5411
    %v5816 = vpack.c.b16 %v5416, %v5412
    %v5817 = vpack.c.b16 %v5417, %v5413
    %v5818 = vpack.c.b16 %v5418, %v5414
    %v5819 = vpack.c.b16 %v5423, %v5419
    %v5820 = vpack.c.b16 %v5424, %v5420
    %v5821 = vpack.c.b16 %v5425, %v5421
    %v5822 = vpack.c.b16 %v5426, %v5422
    %v5823 = vpack.c.b16 %v5431, %v5427
    %v5824 = vpack.c.b16 %v5432, %v5428
    %v5825 = vpack.c.b16 %v5433, %v5429
    %v5826 = vpack.c.b16 %v5434, %v5430
    %v5827 = vpack.c.b16 %v5439, %v5435
    %v5828 = vpack.c.b16 %v5440, %v5436
    %v5829 = vpack.c.b16 %v5441, %v5437
    %v5830 = vpack.c.b16 %v5442, %v5438
    %v5831 = vpack.c.b16 %v5447, %v5443
    %v5832 = vpack.c.b16 %v5448, %v5444
    %v5833 = vpack.c.b16 %v5449, %v5445
    %v5834 = vpack.c.b16 %v5450, %v5446
    %v5835 = vpack.c.b16 %v5455, %v5451
    %v5836 = vpack.c.b16 %v5456, %v5452
    %v5837 = vpack.c.b16 %v5457, %v5453
    %v5838 = vpack.c.b16 %v5458, %v5454
    %v5839 = vpack.c.b16 %v5463, %v5459
    %v5840 = vpack.c.b16 %v5464, %v5460
    %v5841 = vpack.c.b16 %v5465, %v5461
    %v5842 = vpack.c.b16 %v5466, %v5462
    %v5843 = vpack.c.b16 %v5471, %v5467
    %v5844 = vpack.c.b16 %v5472, %v5468
    %v5845 = vpack.c.b16 %v5473, %v5469
    %v5846 = vpack.c.b16 %v5474, %v5470
    %v5847 = vpack.c.b16 %v5479, %v5475
    %v5848 = vpack.c.b16 %v5480, %v5476
    %v5849 = vpack.c.b16 %v5481, %v5477
    %v5850 = vpack.c.b16 %v5482, %v5478
    %v5851 = vpack.c.b16 %v5487, %v5483
    %v5852 = vpack.c.b16 %v5488, %v5484
    %v5853 = vpack.c.b16 %v5489, %v5485
    %v5854 = vpack.c.b16 %v5490, %v5486
    %v5855 = vpack.c.b16 %v5495, %v5491
    %v5856 = vpack.c.b16 %v5496, %v5492
    %v5857 = vpack.c.b16 %v5497, %v5493
    %v5858 = vpack.c.b16 %v5498, %v5494
    %v5859 = vpack.c.b16 %v5503, %v5499
    %v5860 = vpack.c.b16 %v5504, %v5500
    %v5861 = vpack.c.b16 %v5505, %v5501
    %v5862 = vpack.c.b16 %v5506, %v5502
    %v5863 = vpack.c.b16 %v5511, %v5507
    %v5864 = vpack.c.b16 %v5512, %v5508
    %v5865 = vpack.c.b16 %v5513, %v5509
    %v5866 = vpack.c.b16 %v5514, %v5510
    %v5867 = vpack.c.b16 %v5519, %v5515
    %v5868 = vpack.c.b16 %v5520, %v5516
    %v5869 = vpack.c.b16 %v5521, %v5517
    %v5870 = vpack.c.b16 %v5522, %v5518
    %v5871 = vpack.c.b16 %v5527, %v5523
    %v5872 = vpack.c.b16 %v5528, %v5524
    %v5873 = vpack.c.b16 %v5529, %v5525
    %v5874 = vpack.c.b16 %v5530, %v5526
    %v5875 = vpack.c.b16 %v5535, %v5531
    %v5876 = vpack.c.b16 %v5536, %v5532
    %v5877 = vpack.c.b16 %v5537, %v5533
    %v5878 = vpack.c.b16 %v5538, %v5534
    %v5879 = vpack.c.b16 %v5543, %v5539
    %v5880 = vpack.c.b16 %v5544, %v5540
    %v5881 = vpack.c.b16 %v5545, %v5541
    %v5882 = vpack.c.b16 %v5546, %v5542
    %v5883 = vpack.c.b16 %v5551, %v5547
    %v5884 = vpack.c.b16 %v5552, %v5548
    %v5885 = vpack.c.b16 %v5553, %v5549
    %v5886 = vpack.c.b16 %v5554, %v5550
    %v5887 = vpack.c.b16 %v5559, %v5555
    %v5888 = vpack.c.b16 %v5560, %v5556
    %v5889 = vpack.c.b16 %v5561, %v5557
    %v5890 = vpack.c.b16 %v5562, %v5558
    %v5891 = vpack.c.b16 %v5567, %v5563
    %v5892 = vpack.c.b16 %v5568, %v5564
    %v5893 = vpack.c.b16 %v5569, %v5565
    %v5894 = vpack.c.b16 %v5570, %v5566
    %v5895 = vpack.c.b16 %v5575, %v5571
    %v5896 = vpack.c.b16 %v5576, %v5572
    %v5897 = vpack.c.b16 %v5577, %v5573
    %v5898 = vpack.c.b16 %v5578, %v5574
    %6219 = vmatprep.subr.bf16.mxu0 %v5580
    %6220 = vmatpush1.bf16.msra.mxu0 %v5579
    %6221 = vmatprep.subr.bf16.mxu0 %v5584
    %6222 = vmatpush1.bf16.msra.mxu0 %v5583
    %6223 = vmatprep.subr.bf16.mxu0 %v5588
    %6224 = vmatpush1.bf16.msra.mxu0 %v5587
    %6225 = vmatprep.subr.bf16.mxu0 %v5592
    %6226 = vmatpush1.bf16.msra.mxu0 %v5591
    %6227 = vmatprep.subr.bf16.mxu0 %v5596
    %6228 = vmatpush1.bf16.msra.mxu0 %v5595
    %6229 = vmatprep.subr.bf16.mxu0 %v5600
    %6230 = vmatpush1.bf16.msra.mxu0 %v5599
    %6231 = vmatprep.subr.bf16.mxu0 %v5604
    %6232 = vmatpush1.bf16.msra.mxu0 %v5603
    %6233 = vmatprep.subr.bf16.mxu0 %v5608
    %6234 = vmatpush1.bf16.msra.mxu0 %v5607
    %6235 = vmatprep.subr.bf16.mxu0 %v5612
    %6236 = vmatpush1.bf16.msra.mxu0 %v5611
    %6237 = vmatprep.subr.bf16.mxu0 %v5616
    %6238 = vmatpush1.bf16.msra.mxu0 %v5615
    %6239 = vmatprep.subr.bf16.mxu0 %v5620
    %6240 = vmatpush1.bf16.msra.mxu0 %v5619
    %6241 = vmatprep.subr.bf16.mxu0 %v5624
    %6242 = vmatpush1.bf16.msra.mxu0 %v5623
    %6243 = vmatprep.subr.bf16.mxu0 %v5628
    %6244 = vmatpush1.bf16.msra.mxu0 %v5627
    %6245 = vmatprep.subr.bf16.mxu0 %v5632
    %6246 = vmatpush1.bf16.msra.mxu0 %v5631
    %6247 = vmatprep.subr.bf16.mxu0 %v5636
    %6248 = vmatpush1.bf16.msra.mxu0 %v5635
    %6249 = vmatprep.subr.bf16.mxu0 %v5640
    %6250 = vmatpush1.bf16.msra.mxu0 %v5639
    %6251 = vmatprep.mubr.bf16.mxu0 %v4600
    %6252 = vmatmul.mubr.bf16.gmra.mrb[0].mxu0 %v4599
    %v6253 = vpop.f32.mrb[0].mxu0
    %v6254 = vadd.f32 %v2479, %v6253
    %v6255 = vpop.f32.mrb[0].mxu0
    %v6256 = vadd.f32 %v2483, %v6255
    %v6257 = vpop.f32.mrb[0].mxu0
    %v6258 = vpop.f32.mrb[0].mxu0
    %6259 = vdwg.mxu0
    %6260 = vmatprep.subr.bf16.mxu0 %v5644
    %6261 = vmatpush1.bf16.msra.mxu0 %v5643
    %6262 = vmatprep.subr.bf16.mxu0 %v5648
    %6263 = vmatpush1.bf16.msra.mxu0 %v5647
    %6264 = vmatprep.subr.bf16.mxu0 %v5652
    %6265 = vmatpush1.bf16.msra.mxu0 %v5651
    %6266 = vmatprep.subr.bf16.mxu0 %v5656
    %6267 = vmatpush1.bf16.msra.mxu0 %v5655
    %6268 = vmatprep.subr.bf16.mxu0 %v5660
    %6269 = vmatpush1.bf16.msra.mxu0 %v5659
    %6270 = vmatprep.subr.bf16.mxu0 %v5664
    %6271 = vmatpush1.bf16.msra.mxu0 %v5663
    %6272 = vmatprep.subr.bf16.mxu0 %v5668
    %6273 = vmatpush1.bf16.msra.mxu0 %v5667
    %6274 = vmatprep.subr.bf16.mxu0 %v5672
    %6275 = vmatpush1.bf16.msra.mxu0 %v5671
    %6276 = vmatprep.subr.bf16.mxu0 %v5676
    %6277 = vmatpush1.bf16.msra.mxu0 %v5675
    %6278 = vmatprep.subr.bf16.mxu0 %v5680
    %6279 = vmatpush1.bf16.msra.mxu0 %v5679
    %6280 = vmatprep.subr.bf16.mxu0 %v5684
    %6281 = vmatpush1.bf16.msra.mxu0 %v5683
    %6282 = vmatprep.subr.bf16.mxu0 %v5688
    %6283 = vmatpush1.bf16.msra.mxu0 %v5687
    %6284 = vmatprep.subr.bf16.mxu0 %v5692
    %6285 = vmatpush1.bf16.msra.mxu0 %v5691
    %6286 = vmatprep.subr.bf16.mxu0 %v5696
    %6287 = vmatpush1.bf16.msra.mxu0 %v5695
    %6288 = vmatprep.subr.bf16.mxu0 %v5700
    %6289 = vmatpush1.bf16.msra.mxu0 %v5699
    %6290 = vmatprep.subr.bf16.mxu0 %v5704
    %6291 = vmatpush1.bf16.msra.mxu0 %v5703
    %6292 = vmatprep.mubr.bf16.mxu0 %v4602
    %6293 = vmatmul.mubr.bf16.gmra.mrb[0].mxu0 %v4601
    %v6294 = vpop.f32.mrb[0].mxu0
    %v6295 = vadd.f32 %v6254, %v6294
    %v6296 = vpop.f32.mrb[0].mxu0
    %v6297 = vadd.f32 %v6256, %v6296
    %v6298 = vpop.f32.mrb[0].mxu0
    %v6299 = vpop.f32.mrb[0].mxu0
    %6300 = vdwg.mxu0
    %6301 = vmatprep.subr.bf16.mxu0 %v5708
    %6302 = vmatpush1.bf16.msra.mxu0 %v5707
    %6303 = vmatprep.subr.bf16.mxu0 %v5712
    %6304 = vmatpush1.bf16.msra.mxu0 %v5711
    %6305 = vmatprep.subr.bf16.mxu0 %v5716
    %6306 = vmatpush1.bf16.msra.mxu0 %v5715
    %6307 = vmatprep.subr.bf16.mxu0 %v5720
    %6308 = vmatpush1.bf16.msra.mxu0 %v5719
    %6309 = vmatprep.subr.bf16.mxu0 %v5724
    %6310 = vmatpush1.bf16.msra.mxu0 %v5723
    %6311 = vmatprep.subr.bf16.mxu0 %v5728
    %6312 = vmatpush1.bf16.msra.mxu0 %v5727
    %6313 = vmatprep.subr.bf16.mxu0 %v5732
    %6314 = vmatpush1.bf16.msra.mxu0 %v5731
    %6315 = vmatprep.subr.bf16.mxu0 %v5736
    %6316 = vmatpush1.bf16.msra.mxu0 %v5735
    %6317 = vmatprep.subr.bf16.mxu0 %v5740
    %6318 = vmatpush1.bf16.msra.mxu0 %v5739
    %6319 = vmatprep.subr.bf16.mxu0 %v5744
    %6320 = vmatpush1.bf16.msra.mxu0 %v5743
    %6321 = vmatprep.subr.bf16.mxu0 %v5748
    %6322 = vmatpush1.bf16.msra.mxu0 %v5747
    %6323 = vmatprep.subr.bf16.mxu0 %v5752
    %6324 = vmatpush1.bf16.msra.mxu0 %v5751
    %6325 = vmatprep.subr.bf16.mxu0 %v5756
    %6326 = vmatpush1.bf16.msra.mxu0 %v5755
    %6327 = vmatprep.subr.bf16.mxu0 %v5760
    %6328 = vmatpush1.bf16.msra.mxu0 %v5759
    %6329 = vmatprep.subr.bf16.mxu0 %v5764
    %6330 = vmatpush1.bf16.msra.mxu0 %v5763
    %6331 = vmatprep.subr.bf16.mxu0 %v5768
    %6332 = vmatpush1.bf16.msra.mxu0 %v5767
    %6333 = vmatprep.mubr.bf16.mxu0 %v4604
    %6334 = vmatmul.mubr.bf16.gmra.mrb[0].mxu0 %v4603
    %v6335 = vpop.f32.mrb[0].mxu0
    %v6336 = vadd.f32 %v6295, %v6335
    %v6337 = vpop.f32.mrb[0].mxu0
    %v6338 = vadd.f32 %v6297, %v6337
    %v6339 = vpop.f32.mrb[0].mxu0
    %v6340 = vpop.f32.mrb[0].mxu0
    %6341 = vdwg.mxu0
    %6342 = vmatprep.subr.bf16.mxu0 %v5772
    %6343 = vmatpush1.bf16.msra.mxu0 %v5771
    %6344 = vmatprep.subr.bf16.mxu0 %v5776
    %6345 = vmatpush1.bf16.msra.mxu0 %v5775
    %6346 = vmatprep.subr.bf16.mxu0 %v5780
    %6347 = vmatpush1.bf16.msra.mxu0 %v5779
    %6348 = vmatprep.subr.bf16.mxu0 %v5784
    %6349 = vmatpush1.bf16.msra.mxu0 %v5783
    %6350 = vmatprep.subr.bf16.mxu0 %v5788
    %6351 = vmatpush1.bf16.msra.mxu0 %v5787
    %6352 = vmatprep.subr.bf16.mxu0 %v5792
    %6353 = vmatpush1.bf16.msra.mxu0 %v5791
    %6354 = vmatprep.subr.bf16.mxu0 %v5796
    %6355 = vmatpush1.bf16.msra.mxu0 %v5795
    %6356 = vmatprep.subr.bf16.mxu0 %v5800
    %6357 = vmatpush1.bf16.msra.mxu0 %v5799
    %6358 = vmatprep.subr.bf16.mxu0 %v5804
    %6359 = vmatpush1.bf16.msra.mxu0 %v5803
    %6360 = vmatprep.subr.bf16.mxu0 %v5808
    %6361 = vmatpush1.bf16.msra.mxu0 %v5807
    %6362 = vmatprep.subr.bf16.mxu0 %v5812
    %6363 = vmatpush1.bf16.msra.mxu0 %v5811
    %6364 = vmatprep.subr.bf16.mxu0 %v5816
    %6365 = vmatpush1.bf16.msra.mxu0 %v5815
    %6366 = vmatprep.subr.bf16.mxu0 %v5820
    %6367 = vmatpush1.bf16.msra.mxu0 %v5819
    %6368 = vmatprep.subr.bf16.mxu0 %v5824
    %6369 = vmatpush1.bf16.msra.mxu0 %v5823
    %6370 = vmatprep.subr.bf16.mxu0 %v5828
    %6371 = vmatpush1.bf16.msra.mxu0 %v5827
    %6372 = vmatprep.subr.bf16.mxu0 %v5832
    %6373 = vmatpush1.bf16.msra.mxu0 %v5831
    %6374 = vmatprep.mubr.bf16.mxu0 %v4606
    %6375 = vmatmul.mubr.bf16.gmra.mrb[0].mxu0 %v4605
    %v6376 = vpop.f32.mrb[0].mxu0
    %v6377 = vadd.f32 %v6336, %v6376
    %v6378 = vpop.f32.mrb[0].mxu0
    %v6379 = vadd.f32 %v6338, %v6378
    %v6380 = vpop.f32.mrb[0].mxu0
    %v6381 = vpop.f32.mrb[0].mxu0
    %6382 = vdwg.mxu0
    %6383 = vmatprep.subr.bf16.mxu0 %v5836
    %6384 = vmatpush1.bf16.msra.mxu0 %v5835
    %6385 = vmatprep.subr.bf16.mxu0 %v5840
    %6386 = vmatpush1.bf16.msra.mxu0 %v5839
    %6387 = vmatprep.subr.bf16.mxu0 %v5844
    %6388 = vmatpush1.bf16.msra.mxu0 %v5843
    %6389 = vmatprep.subr.bf16.mxu0 %v5848
    %6390 = vmatpush1.bf16.msra.mxu0 %v5847
    %6391 = vmatprep.subr.bf16.mxu0 %v5852
    %6392 = vmatpush1.bf16.msra.mxu0 %v5851
    %6393 = vmatprep.subr.bf16.mxu0 %v5856
    %6394 = vmatpush1.bf16.msra.mxu0 %v5855
    %6395 = vmatprep.subr.bf16.mxu0 %v5860
    %6396 = vmatpush1.bf16.msra.mxu0 %v5859
    %6397 = vmatprep.subr.bf16.mxu0 %v5864
    %6398 = vmatpush1.bf16.msra.mxu0 %v5863
    %6399 = vmatprep.subr.bf16.mxu0 %v5868
    %6400 = vmatpush1.bf16.msra.mxu0 %v5867
    %6401 = vmatprep.subr.bf16.mxu0 %v5872
    %6402 = vmatpush1.bf16.msra.mxu0 %v5871
    %6403 = vmatprep.subr.bf16.mxu0 %v5876
    %6404 = vmatpush1.bf16.msra.mxu0 %v5875
    %6405 = vmatprep.subr.bf16.mxu0 %v5880
    %6406 = vmatpush1.bf16.msra.mxu0 %v5879
    %6407 = vmatprep.subr.bf16.mxu0 %v5884
    %6408 = vmatpush1.bf16.msra.mxu0 %v5883
    %6409 = vmatprep.subr.bf16.mxu0 %v5888
    %6410 = vmatpush1.bf16.msra.mxu0 %v5887
    %6411 = vmatprep.subr.bf16.mxu0 %v5892
    %6412 = vmatpush1.bf16.msra.mxu0 %v5891
    %6413 = vmatprep.subr.bf16.mxu0 %v5896
    %6414 = vmatpush1.bf16.msra.mxu0 %v5895
    %6415 = vmatprep.mubr.bf16.mxu0 %v4608
    %6416 = vmatmul.mubr.bf16.gmra.mrb[0].mxu0 %v4607
    %v6417 = vpop.f32.mrb[0].mxu0
    %v6418 = vadd.f32 %v6377, %v6417
    %v6419 = vpop.f32.mrb[0].mxu0
    %v6420 = vadd.f32 %v6379, %v6419
    %v6421 = vpop.f32.mrb[0].mxu0
    %v6422 = vpop.f32.mrb[0].mxu0
    %6423 = vdwg.mxu0
    %6424 = vmatprep.subr.bf16.mxu0 %v5582
    %6425 = vmatpush1.bf16.msra.mxu0 %v5581
    %6426 = vmatprep.subr.bf16.mxu0 %v5586
    %6427 = vmatpush1.bf16.msra.mxu0 %v5585
    %6428 = vmatprep.subr.bf16.mxu0 %v5590
    %6429 = vmatpush1.bf16.msra.mxu0 %v5589
    %6430 = vmatprep.subr.bf16.mxu0 %v5594
    %6431 = vmatpush1.bf16.msra.mxu0 %v5593
    %6432 = vmatprep.subr.bf16.mxu0 %v5598
    %6433 = vmatpush1.bf16.msra.mxu0 %v5597
    %6434 = vmatprep.subr.bf16.mxu0 %v5602
    %6435 = vmatpush1.bf16.msra.mxu0 %v5601
    %6436 = vmatprep.subr.bf16.mxu0 %v5606
    %6437 = vmatpush1.bf16.msra.mxu0 %v5605
    %6438 = vmatprep.subr.bf16.mxu0 %v5610
    %6439 = vmatpush1.bf16.msra.mxu0 %v5609
    %6440 = vmatprep.subr.bf16.mxu0 %v5614
    %6441 = vmatpush1.bf16.msra.mxu0 %v5613
    %6442 = vmatprep.subr.bf16.mxu0 %v5618
    %6443 = vmatpush1.bf16.msra.mxu0 %v5617
    %6444 = vmatprep.subr.bf16.mxu0 %v5622
    %6445 = vmatpush1.bf16.msra.mxu0 %v5621
    %6446 = vmatprep.subr.bf16.mxu0 %v5626
    %6447 = vmatpush1.bf16.msra.mxu0 %v5625
    %6448 = vmatprep.subr.bf16.mxu0 %v5630
    %6449 = vmatpush1.bf16.msra.mxu0 %v5629
    %6450 = vmatprep.subr.bf16.mxu0 %v5634
    %6451 = vmatpush1.bf16.msra.mxu0 %v5633
    %6452 = vmatprep.subr.bf16.mxu0 %v5638
    %6453 = vmatpush1.bf16.msra.mxu0 %v5637
    %6454 = vmatprep.subr.bf16.mxu0 %v5642
    %6455 = vmatpush1.bf16.msra.mxu0 %v5641
    %6456 = vmatprep.mubr.bf16.mxu0 %v4600
    %6457 = vmatmul.mubr.bf16.gmra.mrb[0].mxu0 %v4599
    %v6458 = vpop.f32.mrb[0].mxu0
    %v6459 = vadd.f32 %v2487, %v6458
    %v6460 = vpop.f32.mrb[0].mxu0
    %v6461 = vadd.f32 %v2491, %v6460
    %v6462 = vpop.f32.mrb[0].mxu0
    %v6463 = vpop.f32.mrb[0].mxu0
    %6464 = vdwg.mxu0
    %6465 = vmatprep.subr.bf16.mxu0 %v5646
    %6466 = vmatpush1.bf16.msra.mxu0 %v5645
    %6467 = vmatprep.subr.bf16.mxu0 %v5650
    %6468 = vmatpush1.bf16.msra.mxu0 %v5649
    %6469 = vmatprep.subr.bf16.mxu0 %v5654
    %6470 = vmatpush1.bf16.msra.mxu0 %v5653
    %6471 = vmatprep.subr.bf16.mxu0 %v5658
    %6472 = vmatpush1.bf16.msra.mxu0 %v5657
    %6473 = vmatprep.subr.bf16.mxu0 %v5662
    %6474 = vmatpush1.bf16.msra.mxu0 %v5661
    %6475 = vmatprep.subr.bf16.mxu0 %v5666
    %6476 = vmatpush1.bf16.msra.mxu0 %v5665
    %6477 = vmatprep.subr.bf16.mxu0 %v5670
    %6478 = vmatpush1.bf16.msra.mxu0 %v5669
    %6479 = vmatprep.subr.bf16.mxu0 %v5674
    %6480 = vmatpush1.bf16.msra.mxu0 %v5673
    %6481 = vmatprep.subr.bf16.mxu0 %v5678
    %6482 = vmatpush1.bf16.msra.mxu0 %v5677
    %6483 = vmatprep.subr.bf16.mxu0 %v5682
    %6484 = vmatpush1.bf16.msra.mxu0 %v5681
    %6485 = vmatprep.subr.bf16.mxu0 %v5686
    %6486 = vmatpush1.bf16.msra.mxu0 %v5685
    %6487 = vmatprep.subr.bf16.mxu0 %v5690
    %6488 = vmatpush1.bf16.msra.mxu0 %v5689
    %6489 = vmatprep.subr.bf16.mxu0 %v5694
    %6490 = vmatpush1.bf16.msra.mxu0 %v5693
    %6491 = vmatprep.subr.bf16.mxu0 %v5698
    %6492 = vmatpush1.bf16.msra.mxu0 %v5697
    %6493 = vmatprep.subr.bf16.mxu0 %v5702
    %6494 = vmatpush1.bf16.msra.mxu0 %v5701
    %6495 = vmatprep.subr.bf16.mxu0 %v5706
    %6496 = vmatpush1.bf16.msra.mxu0 %v5705
    %6497 = vmatprep.mubr.bf16.mxu0 %v4602
    %6498 = vmatmul.mubr.bf16.gmra.mrb[0].mxu0 %v4601
    %v6499 = vpop.f32.mrb[0].mxu0
    %v6500 = vadd.f32 %v6459, %v6499
    %v6501 = vpop.f32.mrb[0].mxu0
    %v6502 = vadd.f32 %v6461, %v6501
    %v6503 = vpop.f32.mrb[0].mxu0
    %v6504 = vpop.f32.mrb[0].mxu0
    %6505 = vdwg.mxu0
    %6506 = vmatprep.subr.bf16.mxu0 %v5710
    %6507 = vmatpush1.bf16.msra.mxu0 %v5709
    %6508 = vmatprep.subr.bf16.mxu0 %v5714
    %6509 = vmatpush1.bf16.msra.mxu0 %v5713
    %6510 = vmatprep.subr.bf16.mxu0 %v5718
    %6511 = vmatpush1.bf16.msra.mxu0 %v5717
    %6512 = vmatprep.subr.bf16.mxu0 %v5722
    %6513 = vmatpush1.bf16.msra.mxu0 %v5721
    %6514 = vmatprep.subr.bf16.mxu0 %v5726
    %6515 = vmatpush1.bf16.msra.mxu0 %v5725
    %6516 = vmatprep.subr.bf16.mxu0 %v5730
    %6517 = vmatpush1.bf16.msra.mxu0 %v5729
    %6518 = vmatprep.subr.bf16.mxu0 %v5734
    %6519 = vmatpush1.bf16.msra.mxu0 %v5733
    %6520 = vmatprep.subr.bf16.mxu0 %v5738
    %6521 = vmatpush1.bf16.msra.mxu0 %v5737
    %6522 = vmatprep.subr.bf16.mxu0 %v5742
    %6523 = vmatpush1.bf16.msra.mxu0 %v5741
    %6524 = vmatprep.subr.bf16.mxu0 %v5746
    %6525 = vmatpush1.bf16.msra.mxu0 %v5745
    %6526 = vmatprep.subr.bf16.mxu0 %v5750
    %6527 = vmatpush1.bf16.msra.mxu0 %v5749
    %6528 = vmatprep.subr.bf16.mxu0 %v5754
    %6529 = vmatpush1.bf16.msra.mxu0 %v5753
    %6530 = vmatprep.subr.bf16.mxu0 %v5758
    %6531 = vmatpush1.bf16.msra.mxu0 %v5757
    %6532 = vmatprep.subr.bf16.mxu0 %v5762
    %6533 = vmatpush1.bf16.msra.mxu0 %v5761
    %6534 = vmatprep.subr.bf16.mxu0 %v5766
    %6535 = vmatpush1.bf16.msra.mxu0 %v5765
    %6536 = vmatprep.subr.bf16.mxu0 %v5770
    %6537 = vmatpush1.bf16.msra.mxu0 %v5769
    %6538 = vmatprep.mubr.bf16.mxu0 %v4604
    %6539 = vmatmul.mubr.bf16.gmra.mrb[0].mxu0 %v4603
    %v6540 = vpop.f32.mrb[0].mxu0
    %v6541 = vadd.f32 %v6500, %v6540
    %v6542 = vpop.f32.mrb[0].mxu0
    %v6543 = vadd.f32 %v6502, %v6542
    %v6544 = vpop.f32.mrb[0].mxu0
    %v6545 = vpop.f32.mrb[0].mxu0
    %6546 = vdwg.mxu0
    %6547 = vmatprep.subr.bf16.mxu0 %v5774
    %6548 = vmatpush1.bf16.msra.mxu0 %v5773
    %6549 = vmatprep.subr.bf16.mxu0 %v5778
    %6550 = vmatpush1.bf16.msra.mxu0 %v5777
    %6551 = vmatprep.subr.bf16.mxu0 %v5782
    %6552 = vmatpush1.bf16.msra.mxu0 %v5781
    %6553 = vmatprep.subr.bf16.mxu0 %v5786
    %6554 = vmatpush1.bf16.msra.mxu0 %v5785
    %6555 = vmatprep.subr.bf16.mxu0 %v5790
    %6556 = vmatpush1.bf16.msra.mxu0 %v5789
    %6557 = vmatprep.subr.bf16.mxu0 %v5794
    %6558 = vmatpush1.bf16.msra.mxu0 %v5793
    %6559 = vmatprep.subr.bf16.mxu0 %v5798
    %6560 = vmatpush1.bf16.msra.mxu0 %v5797
    %6561 = vmatprep.subr.bf16.mxu0 %v5802
    %6562 = vmatpush1.bf16.msra.mxu0 %v5801
    %6563 = vmatprep.subr.bf16.mxu0 %v5806
    %6564 = vmatpush1.bf16.msra.mxu0 %v5805
    %6565 = vmatprep.subr.bf16.mxu0 %v5810
    %6566 = vmatpush1.bf16.msra.mxu0 %v5809
    %6567 = vmatprep.subr.bf16.mxu0 %v5814
    %6568 = vmatpush1.bf16.msra.mxu0 %v5813
    %6569 = vmatprep.subr.bf16.mxu0 %v5818
    %6570 = vmatpush1.bf16.msra.mxu0 %v5817
    %6571 = vmatprep.subr.bf16.mxu0 %v5822
    %6572 = vmatpush1.bf16.msra.mxu0 %v5821
    %6573 = vmatprep.subr.bf16.mxu0 %v5826
    %6574 = vmatpush1.bf16.msra.mxu0 %v5825
    %6575 = vmatprep.subr.bf16.mxu0 %v5830
    %6576 = vmatpush1.bf16.msra.mxu0 %v5829
    %6577 = vmatprep.subr.bf16.mxu0 %v5834
    %6578 = vmatpush1.bf16.msra.mxu0 %v5833
    %6579 = vmatprep.mubr.bf16.mxu0 %v4606
    %6580 = vmatmul.mubr.bf16.gmra.mrb[0].mxu0 %v4605
    %v6581 = vpop.f32.mrb[0].mxu0
    %v6582 = vadd.f32 %v6541, %v6581
    %v6583 = vpop.f32.mrb[0].mxu0
    %v6584 = vadd.f32 %v6543, %v6583
    %v6585 = vpop.f32.mrb[0].mxu0
    %v6586 = vpop.f32.mrb[0].mxu0
    %6587 = vdwg.mxu0
    %6588 = vmatprep.subr.bf16.mxu0 %v5838
    %6589 = vmatpush1.bf16.msra.mxu0 %v5837
    %6590 = vmatprep.subr.bf16.mxu0 %v5842
    %6591 = vmatpush1.bf16.msra.mxu0 %v5841
    %6592 = vmatprep.subr.bf16.mxu0 %v5846
    %6593 = vmatpush1.bf16.msra.mxu0 %v5845
    %6594 = vmatprep.subr.bf16.mxu0 %v5850
    %6595 = vmatpush1.bf16.msra.mxu0 %v5849
    %6596 = vmatprep.subr.bf16.mxu0 %v5854
    %6597 = vmatpush1.bf16.msra.mxu0 %v5853
    %6598 = vmatprep.subr.bf16.mxu0 %v5858
    %6599 = vmatpush1.bf16.msra.mxu0 %v5857
    %6600 = vmatprep.subr.bf16.mxu0 %v5862
    %6601 = vmatpush1.bf16.msra.mxu0 %v5861
    %6602 = vmatprep.subr.bf16.mxu0 %v5866
    %6603 = vmatpush1.bf16.msra.mxu0 %v5865
    %6604 = vmatprep.subr.bf16.mxu0 %v5870
    %6605 = vmatpush1.bf16.msra.mxu0 %v5869
    %6606 = vmatprep.subr.bf16.mxu0 %v5874
    %6607 = vmatpush1.bf16.msra.mxu0 %v5873
    %6608 = vmatprep.subr.bf16.mxu0 %v5878
    %6609 = vmatpush1.bf16.msra.mxu0 %v5877
    %6610 = vmatprep.subr.bf16.mxu0 %v5882
    %6611 = vmatpush1.bf16.msra.mxu0 %v5881
    %6612 = vmatprep.subr.bf16.mxu0 %v5886
    %6613 = vmatpush1.bf16.msra.mxu0 %v5885
    %6614 = vmatprep.subr.bf16.mxu0 %v5890
    %6615 = vmatpush1.bf16.msra.mxu0 %v5889
    %6616 = vmatprep.subr.bf16.mxu0 %v5894
    %6617 = vmatpush1.bf16.msra.mxu0 %v5893
    %6618 = vmatprep.subr.bf16.mxu0 %v5898
    %6619 = vmatpush1.bf16.msra.mxu0 %v5897
    %6620 = vmatprep.mubr.bf16.mxu0 %v4608
    %6621 = vmatmul.mubr.bf16.gmra.mrb[0].mxu0 %v4607
    %v6622 = vpop.f32.mrb[0].mxu0
    %v6623 = vadd.f32 %v6582, %v6622
    %v6624 = vpop.f32.mrb[0].mxu0
    %v6625 = vadd.f32 %v6584, %v6624
    %v6626 = vpop.f32.mrb[0].mxu0
    %v6627 = vpop.f32.mrb[0].mxu0
    %6628 = vdwg.mxu0
    %v6629 = vmax.f32 %v6418, 0.0
    %v6630 = vmax.f32 %v6420, 0.0
    %v6631 = vmax.f32 %v6623, 0.0
    %v6632 = vmax.f32 %v6625, 0.0
    %v6633 = vld [vmem:[#allocation7] sm:$0xff]
    %v6634 = vld [vmem:[#allocation7 + $0x8] sm:$0xff]
    %v6635 = vld [vmem:[#allocation7 + $0x10] sm:$0xff]
    %v6636 = vld [vmem:[#allocation7 + $0x18] sm:$0xff]
    %v6637 = vld [vmem:[#allocation7 + $0x20] sm:$0xff]
    %v6638 = vld [vmem:[#allocation7 + $0x28] sm:$0xff]
    %v6639 = vld [vmem:[#allocation7 + $0x30] sm:$0xff]
    %v6640 = vld [vmem:[#allocation7 + $0x38] sm:$0xff]
    %v6641 = vld [vmem:[#allocation7 + $0x40] sm:$0xff]
    %v6642 = vld [vmem:[#allocation7 + $0x48] sm:$0xff]
    %v6643 = vld [vmem:[#allocation7 + $0x50] sm:$0xff]
    %v6644 = vld [vmem:[#allocation7 + $0x58] sm:$0xff]
    %v6645 = vld [vmem:[#allocation7 + $0x60] sm:$0xff]
    %v6646 = vld [vmem:[#allocation7 + $0x68] sm:$0xff]
    %v6647 = vld [vmem:[#allocation7 + $0x70] sm:$0xff]
    %v6648 = vld [vmem:[#allocation7 + $0x78] sm:$0xff]
    %v6649 = vld [vmem:[#allocation7 + $0x80] sm:$0xff]
    %v6650 = vld [vmem:[#allocation7 + $0x88] sm:$0xff]
    %v6651 = vld [vmem:[#allocation7 + $0x90] sm:$0xff]
    %v6652 = vld [vmem:[#allocation7 + $0x98] sm:$0xff]
    %v6653 = vld [vmem:[#allocation7 + $0xa0] sm:$0xff]
    %v6654 = vld [vmem:[#allocation7 + $0xa8] sm:$0xff]
    %v6655 = vld [vmem:[#allocation7 + $0xb0] sm:$0xff]
    %v6656 = vld [vmem:[#allocation7 + $0xb8] sm:$0xff]
    %v6657 = vld [vmem:[#allocation7 + $0xc0] sm:$0xff]
    %v6658 = vld [vmem:[#allocation7 + $0xc8] sm:$0xff]
    %v6659 = vld [vmem:[#allocation7 + $0xd0] sm:$0xff]
    %v6660 = vld [vmem:[#allocation7 + $0xd8] sm:$0xff]
    %v6661 = vld [vmem:[#allocation7 + $0xe0] sm:$0xff]
    %v6662 = vld [vmem:[#allocation7 + $0xe8] sm:$0xff]
    %v6663 = vld [vmem:[#allocation7 + $0xf0] sm:$0xff]
    %v6664 = vld [vmem:[#allocation7 + $0xf8] sm:$0xff]
    %v6665 = vld [vmem:[#allocation7 + $0x100] sm:$0xff]
    %v6666 = vld [vmem:[#allocation7 + $0x108] sm:$0xff]
    %v6667 = vld [vmem:[#allocation7 + $0x110] sm:$0xff]
    %v6668 = vld [vmem:[#allocation7 + $0x118] sm:$0xff]
    %v6669 = vld [vmem:[#allocation7 + $0x120] sm:$0xff]
    %v6670 = vld [vmem:[#allocation7 + $0x128] sm:$0xff]
    %v6671 = vld [vmem:[#allocation7 + $0x130] sm:$0xff]
    %v6672 = vld [vmem:[#allocation7 + $0x138] sm:$0xff]
    %v6673 = vld [vmem:[#allocation7 + $0x140] sm:$0xff]
    %v6674 = vld [vmem:[#allocation7 + $0x148] sm:$0xff]
    %v6675 = vld [vmem:[#allocation7 + $0x150] sm:$0xff]
    %v6676 = vld [vmem:[#allocation7 + $0x158] sm:$0xff]
    %v6677 = vld [vmem:[#allocation7 + $0x160] sm:$0xff]
    %v6678 = vld [vmem:[#allocation7 + $0x168] sm:$0xff]
    %v6679 = vld [vmem:[#allocation7 + $0x170] sm:$0xff]
    %v6680 = vld [vmem:[#allocation7 + $0x178] sm:$0xff]
    %v6681 = vld [vmem:[#allocation7 + $0x180] sm:$0xff]
    %v6682 = vld [vmem:[#allocation7 + $0x188] sm:$0xff]
    %v6683 = vld [vmem:[#allocation7 + $0x190] sm:$0xff]
    %v6684 = vld [vmem:[#allocation7 + $0x198] sm:$0xff]
    %v6685 = vld [vmem:[#allocation7 + $0x1a0] sm:$0xff]
    %v6686 = vld [vmem:[#allocation7 + $0x1a8] sm:$0xff]
    %v6687 = vld [vmem:[#allocation7 + $0x1b0] sm:$0xff]
    %v6688 = vld [vmem:[#allocation7 + $0x1b8] sm:$0xff]
    %v6689 = vld [vmem:[#allocation7 + $0x1c0] sm:$0xff]
    %v6690 = vld [vmem:[#allocation7 + $0x1c8] sm:$0xff]
    %v6691 = vld [vmem:[#allocation7 + $0x1d0] sm:$0xff]
    %v6692 = vld [vmem:[#allocation7 + $0x1d8] sm:$0xff]
    %v6693 = vld [vmem:[#allocation7 + $0x1e0] sm:$0xff]
    %v6694 = vld [vmem:[#allocation7 + $0x1e8] sm:$0xff]
    %v6695 = vld [vmem:[#allocation7 + $0x1f0] sm:$0xff]
    %v6696 = vld [vmem:[#allocation7 + $0x1f8] sm:$0xff]
    %v6697 = vld [vmem:[#allocation8] sm:$0x1]
    %v6699 = vlaneseq
    %v6700 = vshrl.u32 %v6699, 7
    %v6701 = vsub.s32 0, %v6700
    %v6702 = vrot.slane %v6697, %v6701
    %6704 = vmatprep.subr.mxu0 0.0
    %6705 = vmatpush1.msra.mxu0 %v6633
    %6706 = vmatprep.subr.mxu0 0.0
    %6707 = vmatpush1.msra.mxu0 %v6634
    %6708 = vmatprep.subr.mxu0 0.0
    %6709 = vmatpush1.msra.mxu0 %v6635
    %6710 = vmatprep.subr.mxu0 0.0
    %6711 = vmatpush1.msra.mxu0 %v6636
    %6712 = vmatprep.subr.mxu0 0.0
    %6713 = vmatpush1.msra.mxu0 %v6637
    %6714 = vmatprep.subr.mxu0 0.0
    %6715 = vmatpush1.msra.mxu0 %v6638
    %6716 = vmatprep.subr.mxu0 0.0
    %6717 = vmatpush1.msra.mxu0 %v6639
    %6718 = vmatprep.subr.mxu0 0.0
    %6719 = vmatpush1.msra.mxu0 %v6640
    %6720 = vmatprep.subr.mxu0 0.0
    %6721 = vmatpush1.msra.mxu0 %v6641
    %6722 = vmatprep.subr.mxu0 0.0
    %6723 = vmatpush1.msra.mxu0 %v6642
    %6724 = vmatprep.subr.mxu0 0.0
    %6725 = vmatpush1.msra.mxu0 %v6643
    %6726 = vmatprep.subr.mxu0 0.0
    %6727 = vmatpush1.msra.mxu0 %v6644
    %6728 = vmatprep.subr.mxu0 0.0
    %6729 = vmatpush1.msra.mxu0 %v6645
    %6730 = vmatprep.subr.mxu0 0.0
    %6731 = vmatpush1.msra.mxu0 %v6646
    %6732 = vmatprep.subr.mxu0 0.0
    %6733 = vmatpush1.msra.mxu0 %v6647
    %6734 = vmatprep.subr.mxu0 0.0
    %6735 = vmatpush1.msra.mxu0 %v6648
    %6736 = vmatprep.subr.mxu0 0.0
    %6737 = vmatpush1.msra.mxu0 %v6649
    %6738 = vmatprep.subr.mxu0 0.0
    %6739 = vmatpush1.msra.mxu0 %v6650
    %6740 = vmatprep.subr.mxu0 0.0
    %6741 = vmatpush1.msra.mxu0 %v6651
    %6742 = vmatprep.subr.mxu0 0.0
    %6743 = vmatpush1.msra.mxu0 %v6652
    %6744 = vmatprep.subr.mxu0 0.0
    %6745 = vmatpush1.msra.mxu0 %v6653
    %6746 = vmatprep.subr.mxu0 0.0
    %6747 = vmatpush1.msra.mxu0 %v6654
    %6748 = vmatprep.subr.mxu0 0.0
    %6749 = vmatpush1.msra.mxu0 %v6655
    %6750 = vmatprep.subr.mxu0 0.0
    %6751 = vmatpush1.msra.mxu0 %v6656
    %6752 = vmatprep.subr.mxu0 0.0
    %6753 = vmatpush1.msra.mxu0 %v6657
    %6754 = vmatprep.subr.mxu0 0.0
    %6755 = vmatpush1.msra.mxu0 %v6658
    %6756 = vmatprep.subr.mxu0 0.0
    %6757 = vmatpush1.msra.mxu0 %v6659
    %6758 = vmatprep.subr.mxu0 0.0
    %6759 = vmatpush1.msra.mxu0 %v6660
    %6760 = vmatprep.subr.mxu0 0.0
    %6761 = vmatpush1.msra.mxu0 %v6661
    %6762 = vmatprep.subr.mxu0 0.0
    %6763 = vmatpush1.msra.mxu0 %v6662
    %6764 = vmatprep.subr.mxu0 0.0
    %6765 = vmatpush1.msra.mxu0 %v6663
    %6766 = vmatprep.subr.mxu0 0.0
    %6767 = vmatpush1.msra.mxu0 %v6664
    %6768 = vmatprep.mubr.f32.mxu0 %v6630
    %6769 = vmatmul.mubr.f32.gmra.mrb[0].mxu0 %v6629
    %v6770 = vpop.f32.mrb[0].mxu0
    %v6771 = vadd.f32 %v6702, %v6770
    %v6772 = vpop.f32.mrb[0].mxu0
    %6773 = vdwg.mxu0
    %6774 = vmatprep.subr.mxu0 0.0
    %6775 = vmatpush1.msra.mxu0 %v6665
    %6776 = vmatprep.subr.mxu0 0.0
    %6777 = vmatpush1.msra.mxu0 %v6666
    %6778 = vmatprep.subr.mxu0 0.0
    %6779 = vmatpush1.msra.mxu0 %v6667
    %6780 = vmatprep.subr.mxu0 0.0
    %6781 = vmatpush1.msra.mxu0 %v6668
    %6782 = vmatprep.subr.mxu0 0.0
    %6783 = vmatpush1.msra.mxu0 %v6669
    %6784 = vmatprep.subr.mxu0 0.0
    %6785 = vmatpush1.msra.mxu0 %v6670
    %6786 = vmatprep.subr.mxu0 0.0
    %6787 = vmatpush1.msra.mxu0 %v6671
    %6788 = vmatprep.subr.mxu0 0.0
    %6789 = vmatpush1.msra.mxu0 %v6672
    %6790 = vmatprep.subr.mxu0 0.0
    %6791 = vmatpush1.msra.mxu0 %v6673
    %6792 = vmatprep.subr.mxu0 0.0
    %6793 = vmatpush1.msra.mxu0 %v6674
    %6794 = vmatprep.subr.mxu0 0.0
    %6795 = vmatpush1.msra.mxu0 %v6675
    %6796 = vmatprep.subr.mxu0 0.0
    %6797 = vmatpush1.msra.mxu0 %v6676
    %6798 = vmatprep.subr.mxu0 0.0
    %6799 = vmatpush1.msra.mxu0 %v6677
    %6800 = vmatprep.subr.mxu0 0.0
    %6801 = vmatpush1.msra.mxu0 %v6678
    %6802 = vmatprep.subr.mxu0 0.0
    %6803 = vmatpush1.msra.mxu0 %v6679
    %6804 = vmatprep.subr.mxu0 0.0
    %6805 = vmatpush1.msra.mxu0 %v6680
    %6806 = vmatprep.subr.mxu0 0.0
    %6807 = vmatpush1.msra.mxu0 %v6681
    %6808 = vmatprep.subr.mxu0 0.0
    %6809 = vmatpush1.msra.mxu0 %v6682
    %6810 = vmatprep.subr.mxu0 0.0
    %6811 = vmatpush1.msra.mxu0 %v6683
    %6812 = vmatprep.subr.mxu0 0.0
    %6813 = vmatpush1.msra.mxu0 %v6684
    %6814 = vmatprep.subr.mxu0 0.0
    %6815 = vmatpush1.msra.mxu0 %v6685
    %6816 = vmatprep.subr.mxu0 0.0
    %6817 = vmatpush1.msra.mxu0 %v6686
    %6818 = vmatprep.subr.mxu0 0.0
    %6819 = vmatpush1.msra.mxu0 %v6687
    %6820 = vmatprep.subr.mxu0 0.0
    %6821 = vmatpush1.msra.mxu0 %v6688
    %6822 = vmatprep.subr.mxu0 0.0
    %6823 = vmatpush1.msra.mxu0 %v6689
    %6824 = vmatprep.subr.mxu0 0.0
    %6825 = vmatpush1.msra.mxu0 %v6690
    %6826 = vmatprep.subr.mxu0 0.0
    %6827 = vmatpush1.msra.mxu0 %v6691
    %6828 = vmatprep.subr.mxu0 0.0
    %6829 = vmatpush1.msra.mxu0 %v6692
    %6830 = vmatprep.subr.mxu0 0.0
    %6831 = vmatpush1.msra.mxu0 %v6693
    %6832 = vmatprep.subr.mxu0 0.0
    %6833 = vmatpush1.msra.mxu0 %v6694
    %6834 = vmatprep.subr.mxu0 0.0
    %6835 = vmatpush1.msra.mxu0 %v6695
    %6836 = vmatprep.subr.mxu0 0.0
    %6837 = vmatpush1.msra.mxu0 %v6696
    %6838 = vmatprep.mubr.f32.mxu0 %v6632
    %6839 = vmatmul.mubr.f32.gmra.mrb[0].mxu0 %v6631
    %v6840 = vpop.f32.mrb[0].mxu0
    %v6841 = vadd.f32 %v6771, %v6840
    %v6842 = vpop.f32.mrb[0].mxu0
    %6843 = vdwg.mxu0
    %v6844 = vxor.u32 %v6841, 2147483648
    %v6845 = vmul.f32 %v6844, 1.442695
    %v6846 = vpow.pop %v6845
    %v6847 = vadd.f32 %v6846, 1.0
    %v6848 = vrcp.pop %v6847
    %v6849 = vmul.f32 1.0, %v6848
    %6850 = vst [vmem:[#allocation10] sm:$0x3] %v6849
    // Predicated region
    $region38: #{tpu_custom_call.1} parent=1 // pred_check
      _
    $region39: #{tpu_custom_call.1} parent=1 // pred_check_branch
      %6852 = sbr.rel (0) target = $region41
    $region40: #{tpu_custom_call.1} parent=1 // pred_region
      %s6854 = ssub.s32 32, 32
      %6855 = vsyncadd [#allocation4], %s6854
      %s6857 = sshll.u32 [#allocation10], 4
      %s6858 = int_to_ptr.vmem [resolvable:$true] %s6857
      %6860 = dma.vmem_to_hbm [thread:$0]  %s6858, 32, %s5, [#allocation4]
    $region41: #{tpu_custom_call.1} parent=1 // pred_fallthru
      _
    // Predicated region
    $region42: #{tpu_custom_call.1} parent=1 // pred_check
      _
    $region43: #{tpu_custom_call.1} parent=1 // pred_check_branch
      %6862 = sbr.rel (0) target = $region45
    $region44: #{tpu_custom_call.1} parent=1 // pred_region
      %6863 = dma.done [#allocation4], 32
    $region45: #{tpu_custom_call.1} parent=1 // pred_fallthru
      _
    %6864 = vsyncpa [#allocation3], 1
    %6865 = vsyncpa [#allocation6], 1
    %6866 = vsyncpa [#allocation9], 1
    %6867 = vsyncpa [#allocation4], 1

</llo_original>
